<compile_context>
chip_gen: v7x
topology: tpu7x:2x2x1
jax: 0.10.0
libtpu: 0.0.40
codegen_flags: <defaults>
</compile_context>

<pallas_src>
import jax
import jax.numpy as jnp
from jax.experimental import pallas as pl
from jax.experimental.pallas import tpu as pltpu

_OUT_PAD = 128  # MXU-friendly column count for the (logical width-1) output layer


def _round_up(x: int, m: int) -> int:
    return ((x + m - 1) // m) * m


def _choose_batch_tile(batch: int) -> int:
    """Pick a batch tile: big enough to amortise per-step overhead, but always
    >= 2 grid tiles when possible so both v7x TensorCores are fed."""
    if batch >= 2048:
        return 512
    half = -(-batch // 2)                       # cdiv(batch, 2)
    return max(128, min(512, _round_up(half, 128)))


def _make_scscore_kernel(num_relu_layers: int, score_scale: float, compute_dtype):
    """Fused MLP kernel: `num_relu_layers` Linear+ReLU layers, then Linear+sigmoid."""

    def kernel(x_ref, *refs):
        # refs = (w0, b0, w1, b1, ..., w_out, b_out, out_ref)
        out_ref = refs[-1]
        params = refs[:-1]

        # Cast to bf16 inside the kernel (hidden behind the pipeline DMA).
        h = x_ref[...].astype(compute_dtype)          # [tile, F_p]

        # Input layer + hidden layers (all ReLU). f32 accumulate, bf16 activations.
        for k in range(num_relu_layers):
            w = params[2 * k][...]
            b = params[2 * k + 1][...]
            z = jnp.dot(h, w, preferred_element_type=jnp.float32) + b
            h = jnp.maximum(z, 0.0).astype(compute_dtype)

        # Output layer: MXU pass on a 128-wide padded weight, then slice the
        # single real logit column BEFORE the sigmoid and store packed [tile, 1].
        w_out = params[-2][...]
        b_out = params[-1][...]
        logits = jnp.dot(h, w_out, preferred_element_type=jnp.float32) + b_out
        logit0 = logits[:, :1]                        # [tile, 1]
        out_ref[...] = 1.0 + (score_scale - 1.0) * jax.nn.sigmoid(logit0)

    return kernel


def scscore_forward(x, params, *, score_scale: int = 5, batch_tile: int | None = None,
                    compute_dtype=jnp.bfloat16):
    """Fused ScScore forward pass.

    x       : [B, n_features] float array (fingerprints), any float dtype.
    params  : list of (W, b) in PyTorch convention, W: [out, in], b: [out],
              order = [input_layer, *hidden_layers, output_layer].
    returns : [B, 1] float32 scores in (1, score_scale).
    """
    B, n_features = x.shape
    num_layers = len(params)
    num_relu_layers = num_layers - 1  # input layer + hidden layers

    # --- tiling: >= 2 grid tiles when possible (v7x megacore), 512-row default
    if batch_tile is None:
        batch_tile = _choose_batch_tile(B)
    n_tiles = -(-B // batch_tile)
    B_pad = n_tiles * batch_tile

    # --- feature / batch padding of x (no dtype round-trip: cast is in-kernel)
    F_p = _round_up(n_features, 128)
    x_in = x
    if B_pad != B or F_p != n_features:
        x_in = jnp.pad(x, ((0, B_pad - B), (0, F_p - n_features)))

    # --- weights -> [in_p, out_p] bf16, biases -> [1, out_p] f32, all widths
    #     padded to multiples of 128 (exact through zero-bias + ReLU).
    flat_params = []
    padded_out_widths = []
    in_dim, in_dim_p = n_features, F_p
    for li, (W, b) in enumerate(params):
        out_dim = int(W.shape[0])
        out_dim_p = _OUT_PAD if li == num_layers - 1 else _round_up(out_dim, 128)
        Wt = jnp.asarray(W, jnp.float32).T                                  # [in, out]
        Wt = jnp.pad(Wt, ((0, in_dim_p - in_dim), (0, out_dim_p - out_dim)))
        bb = jnp.pad(jnp.asarray(b, jnp.float32), (0, out_dim_p - out_dim))[None, :]
        flat_params.append(Wt.astype(compute_dtype))   # bf16 weights for the MXU
        flat_params.append(bb)                          # f32 biases
        padded_out_widths.append(out_dim_p)
        in_dim, in_dim_p = out_dim, out_dim_p

    kernel = _make_scscore_kernel(num_relu_layers, float(score_scale), compute_dtype)

    grid = (n_tiles,)
    in_specs = [pl.BlockSpec((batch_tile, F_p), lambda i: (i, 0))]
    for p in flat_params:
        # Small parameters: full-array block, constant index -> DMA'd once,
        # VMEM-resident for the whole grid.
        in_specs.append(pl.BlockSpec(p.shape, lambda i: (0, 0)))
    out_spec = pl.BlockSpec((batch_tile, 1), lambda i: (i, 0))

    # --- VMEM budget: ~2x working set + headroom, capped well under 64 MiB ----
    x_itemsize = jnp.dtype(x_in.dtype).itemsize
    comp_itemsize = jnp.dtype(compute_dtype).itemsize
    param_bytes = sum(int(p.size) * p.dtype.itemsize for p in flat_params)
    max_act_w = max([F_p] + padded_out_widths)
    act_bytes = batch_tile * max_act_w * (4 + comp_itemsize)   # f32 z + bf16 h temps
    need = (2 * batch_tile * F_p * x_itemsize        # x tiles (double-buffered)
            + 2 * param_bytes                        # params (pipeliner buffers)
            + 2 * batch_tile * 128 * 4               # out tiles (layout-padded lanes)
            + act_bytes)
    vmem_limit = int(min(max(2 * need, 16 << 20), 48 << 20))

    # --- honest cost estimate for XLA scheduling --------------------------------
    flops = 0
    prev_w = F_p
    for w_p in padded_out_widths:
        flops += 2 * B_pad * prev_w * w_p
        prev_w = w_p
    bytes_accessed = int(B_pad * F_p * x_itemsize + param_bytes + B_pad * 4)
    cost = pl.CostEstimate(flops=int(flops), transcendentals=int(B_pad),
                           bytes_accessed=bytes_accessed)

    fn = pl.pallas_call(
        kernel,
        out_shape=jax.ShapeDtypeStruct((B_pad, 1), jnp.float32),
        grid_spec=pltpu.PrefetchScalarGridSpec(
            num_scalar_prefetch=0,
            grid=grid,
            in_specs=in_specs,
            out_specs=out_spec,
        ),
        compiler_params=pltpu.CompilerParams(
            dimension_semantics=("parallel",),
            vmem_limit_bytes=vmem_limit,
        ),
        cost_estimate=cost,
    )
    out_full = fn(x_in, *flat_params)
    # Strip batch padding; output is already packed to width 1.
    return out_full[:B, :]


def init_scscore_params(key, n_features, layer_sizes):
    """nn.Linear default init: U(-1/sqrt(fan_in), 1/sqrt(fan_in))."""
    params = []
    sizes_in = [n_features] + list(layer_sizes)
    sizes_out = list(layer_sizes) + [1]
    for fan_in, fan_out in zip(sizes_in, sizes_out):
        key, kw, kb = jax.random.split(key, 3)
        bound = 1.0 / jnp.sqrt(float(fan_in))
        W = jax.random.uniform(kw, (fan_out, fan_in), jnp.float32, -bound, bound)
        b = jax.random.uniform(kb, (fan_out,), jnp.float32, -bound, bound)
        params.append((W, b))
    return params


def scscore_reference(x, params, score_scale=5):
    """Pure-JAX f32 reference of the PyTorch forward (dropout == 0)."""
    h = jnp.asarray(x, jnp.float32)
    for (W, b) in params[:-1]:
        h = jax.nn.relu(h @ W.T + b)
    W, b = params[-1]
    out = jax.nn.sigmoid(h @ W.T + b)
    return 1.0 + (score_scale - 1.0) * out


if __name__ == "__main__":
    # Small shapes consistent with the module (fingerprint MLP).
    n_features = 1024            # deepchem default fingerprint size
    layer_sizes = [300, 300, 300]  # paper uses 5x300; 3 keeps the demo small
    score_scale = 5
    batch = 200                  # ragged: exercises batch padding; tile picker
                                 # gives 2 x 128-row tiles (feeds both v7x TCs)

    key = jax.random.PRNGKey(0)
    key, kx = jax.random.split(key)
    # Circular fingerprints are binary-ish counts; exact in bf16.
    x = jax.random.bernoulli(kx, p=0.1, shape=(batch, n_features)).astype(jnp.float32)

    params = init_scscore_params(key, n_features, layer_sizes)

    out = scscore_forward(x, params, score_scale=score_scale)
    out = jax.block_until_ready(out)

    ref = scscore_reference(x, params, score_scale=score_scale)
    assert out.shape == (batch, 1), out.shape
    assert bool(jnp.all(jnp.isfinite(out)))
    # bf16 weights/activations (f32 accumulation) vs pure-f32 reference.
    assert float(jnp.max(jnp.abs(out - ref))) < 5e-2, (out[:4], ref[:4])

    print("KERNEL_OK")
</pallas_src>

<mosaic_0001>
module attributes {stable_mosaic.version = 11 : i64} {
  func.func @kernel(%arg0: i32, %arg1: memref<128x1024xf32, #tpu.memory_space<vmem>>, %arg2: memref<1024x384xbf16, #tpu.memory_space<vmem>>, %arg3: memref<1x384xf32, #tpu.memory_space<vmem>>, %arg4: memref<384x384xbf16, #tpu.memory_space<vmem>>, %arg5: memref<1x384xf32, #tpu.memory_space<vmem>>, %arg6: memref<384x384xbf16, #tpu.memory_space<vmem>>, %arg7: memref<1x384xf32, #tpu.memory_space<vmem>>, %arg8: memref<384x128xbf16, #tpu.memory_space<vmem>>, %arg9: memref<1x128xf32, #tpu.memory_space<vmem>>, %arg10: memref<128x1xf32, #tpu.memory_space<vmem>>) attributes {dimension_semantics = [#tpu.dimension_semantics<parallel>], iteration_bounds = array<i64: 2>, scalar_prefetch = 0 : i64, scratch_operands = 0 : i64, tpu.core_type = #tpu.core_type<tc>, window_params = [{transform_indices = @transform_0, window_bounds = array<i64: 128, 1024>}, {pipeline_mode = #tpu.pipeline_mode<synchronous>, transform_indices = @transform_1, window_bounds = array<i64: 1024, 384>}, {pipeline_mode = #tpu.pipeline_mode<synchronous>, transform_indices = @transform_2, window_bounds = array<i64: 1, 384>}, {pipeline_mode = #tpu.pipeline_mode<synchronous>, transform_indices = @transform_3, window_bounds = array<i64: 384, 384>}, {pipeline_mode = #tpu.pipeline_mode<synchronous>, transform_indices = @transform_4, window_bounds = array<i64: 1, 384>}, {pipeline_mode = #tpu.pipeline_mode<synchronous>, transform_indices = @transform_5, window_bounds = array<i64: 384, 384>}, {pipeline_mode = #tpu.pipeline_mode<synchronous>, transform_indices = @transform_6, window_bounds = array<i64: 1, 384>}, {pipeline_mode = #tpu.pipeline_mode<synchronous>, transform_indices = @transform_7, window_bounds = array<i64: 384, 128>}, {pipeline_mode = #tpu.pipeline_mode<synchronous>, transform_indices = @transform_8, window_bounds = array<i64: 1, 128>}, {transform_indices = @transform_9, window_bounds = array<i64: 128, 1>}]} {
    %c0 = arith.constant 0 : index
    %c0_0 = arith.constant 0 : index
    %0 = vector.load %arg1[%c0, %c0_0] : memref<128x1024xf32, #tpu.memory_space<vmem>>, vector<128x1024xf32>
    %1 = arith.truncf %0 : vector<128x1024xf32> to vector<128x1024xbf16>
    %c0_1 = arith.constant 0 : index
    %c0_2 = arith.constant 0 : index
    %2 = vector.load %arg2[%c0_1, %c0_2] : memref<1024x384xbf16, #tpu.memory_space<vmem>>, vector<1024x384xbf16>
    %c0_3 = arith.constant 0 : index
    %c0_4 = arith.constant 0 : index
    %3 = vector.load %arg3[%c0_3, %c0_4] : memref<1x384xf32, #tpu.memory_space<vmem>>, vector<1x384xf32>
    %cst = arith.constant dense<0.000000e+00> : vector<128x384xf32>
    %4 = tpu.matmul %1, %2, %cst {dimension_numbers = #tpu.dot_dimension_numbers<[1], [0], [0], [1], [0, 0, 1, 1], [], []>} : vector<128x1024xbf16>, vector<1024x384xbf16>, vector<128x384xf32> -> vector<128x384xf32>
    %5 = vector.broadcast %3 : vector<1x384xf32> to vector<128x384xf32>
    %6 = arith.addf %4, %5 : vector<128x384xf32>
    %cst_5 = arith.constant 0.000000e+00 : f32
    %7 = vector.broadcast %cst_5 : f32 to vector<128x384xf32>
    %8 = arith.maximumf %6, %7 : vector<128x384xf32>
    %9 = arith.truncf %8 : vector<128x384xf32> to vector<128x384xbf16>
    %c0_6 = arith.constant 0 : index
    %c0_7 = arith.constant 0 : index
    %10 = vector.load %arg4[%c0_6, %c0_7] : memref<384x384xbf16, #tpu.memory_space<vmem>>, vector<384x384xbf16>
    %c0_8 = arith.constant 0 : index
    %c0_9 = arith.constant 0 : index
    %11 = vector.load %arg5[%c0_8, %c0_9] : memref<1x384xf32, #tpu.memory_space<vmem>>, vector<1x384xf32>
    %cst_10 = arith.constant dense<0.000000e+00> : vector<128x384xf32>
    %12 = tpu.matmul %9, %10, %cst_10 {dimension_numbers = #tpu.dot_dimension_numbers<[1], [0], [0], [1], [0, 0, 1, 1], [], []>} : vector<128x384xbf16>, vector<384x384xbf16>, vector<128x384xf32> -> vector<128x384xf32>
    %13 = vector.broadcast %11 : vector<1x384xf32> to vector<128x384xf32>
    %14 = arith.addf %12, %13 : vector<128x384xf32>
    %cst_11 = arith.constant 0.000000e+00 : f32
    %15 = vector.broadcast %cst_11 : f32 to vector<128x384xf32>
    %16 = arith.maximumf %14, %15 : vector<128x384xf32>
    %17 = arith.truncf %16 : vector<128x384xf32> to vector<128x384xbf16>
    %c0_12 = arith.constant 0 : index
    %c0_13 = arith.constant 0 : index
    %18 = vector.load %arg6[%c0_12, %c0_13] : memref<384x384xbf16, #tpu.memory_space<vmem>>, vector<384x384xbf16>
    %c0_14 = arith.constant 0 : index
    %c0_15 = arith.constant 0 : index
    %19 = vector.load %arg7[%c0_14, %c0_15] : memref<1x384xf32, #tpu.memory_space<vmem>>, vector<1x384xf32>
    %cst_16 = arith.constant dense<0.000000e+00> : vector<128x384xf32>
    %20 = tpu.matmul %17, %18, %cst_16 {dimension_numbers = #tpu.dot_dimension_numbers<[1], [0], [0], [1], [0, 0, 1, 1], [], []>} : vector<128x384xbf16>, vector<384x384xbf16>, vector<128x384xf32> -> vector<128x384xf32>
    %21 = vector.broadcast %19 : vector<1x384xf32> to vector<128x384xf32>
    %22 = arith.addf %20, %21 : vector<128x384xf32>
    %cst_17 = arith.constant 0.000000e+00 : f32
    %23 = vector.broadcast %cst_17 : f32 to vector<128x384xf32>
    %24 = arith.maximumf %22, %23 : vector<128x384xf32>
    %25 = arith.truncf %24 : vector<128x384xf32> to vector<128x384xbf16>
    %c0_18 = arith.constant 0 : index
    %c0_19 = arith.constant 0 : index
    %26 = vector.load %arg8[%c0_18, %c0_19] : memref<384x128xbf16, #tpu.memory_space<vmem>>, vector<384x128xbf16>
    %c0_20 = arith.constant 0 : index
    %c0_21 = arith.constant 0 : index
    %27 = vector.load %arg9[%c0_20, %c0_21] : memref<1x128xf32, #tpu.memory_space<vmem>>, vector<1x128xf32>
    %cst_22 = arith.constant dense<0.000000e+00> : vector<128x128xf32>
    %28 = tpu.matmul %25, %26, %cst_22 {dimension_numbers = #tpu.dot_dimension_numbers<[1], [0], [0], [1], [0, 0, 1, 1], [], []>} : vector<128x384xbf16>, vector<384x128xbf16>, vector<128x128xf32> -> vector<128x128xf32>
    %29 = vector.broadcast %27 : vector<1x128xf32> to vector<128x128xf32>
    %30 = arith.addf %28, %29 : vector<128x128xf32>
    %31 = vector.extract_strided_slice %30 {offsets = [0, 0], sizes = [128, 1], strides = [1, 1]} : vector<128x128xf32> to vector<128x1xf32>
    %32 = arith.negf %31 : vector<128x1xf32>
    %33 = math.exp %32 : vector<128x1xf32>
    %cst_23 = arith.constant 1.000000e+00 : f32
    %34 = vector.broadcast %cst_23 : f32 to vector<128x1xf32>
    %35 = arith.addf %34, %33 : vector<128x1xf32>
    %36 = arith.divf %34, %35 : vector<128x1xf32>
    %cst_24 = arith.constant 4.000000e+00 : f32
    %37 = vector.broadcast %cst_24 : f32 to vector<128x1xf32>
    %38 = arith.mulf %37, %36 : vector<128x1xf32>
    %cst_25 = arith.constant 1.000000e+00 : f32
    %39 = vector.broadcast %cst_25 : f32 to vector<128x1xf32>
    %40 = arith.addf %39, %38 : vector<128x1xf32>
    %c0_26 = arith.constant 0 : index
    %c0_27 = arith.constant 0 : index
    %41 = vector.load %arg10[%c0_26, %c0_27] : memref<128x1xf32, #tpu.memory_space<vmem>>, vector<128x1xf32>
    tpu.vector_store %arg10[%c0_26, %c0_27], %40 {strides = array<i32>} : memref<128x1xf32, #tpu.memory_space<vmem>>, vector<128x1xf32>,
    return
  }
  func.func @transform_0(%arg0: i32) -> (i32, i32) {
    %c0_i32 = arith.constant 0 : i32
    %c0_i32_0 = arith.constant 0 : i32
    return %arg0, %c0_i32 : i32, i32
  }
  func.func @transform_1(%arg0: i32) -> (i32, i32) {
    %c0_i32 = arith.constant 0 : i32
    %c0_i32_0 = arith.constant 0 : i32
    %c0_i32_1 = arith.constant 0 : i32
    return %c0_i32, %c0_i32_0 : i32, i32
  }
  func.func @transform_2(%arg0: i32) -> (i32, i32) {
    %c0_i32 = arith.constant 0 : i32
    %c0_i32_0 = arith.constant 0 : i32
    %c0_i32_1 = arith.constant 0 : i32
    return %c0_i32, %c0_i32_0 : i32, i32
  }
  func.func @transform_3(%arg0: i32) -> (i32, i32) {
    %c0_i32 = arith.constant 0 : i32
    %c0_i32_0 = arith.constant 0 : i32
    %c0_i32_1 = arith.constant 0 : i32
    return %c0_i32, %c0_i32_0 : i32, i32
  }
  func.func @transform_4(%arg0: i32) -> (i32, i32) {
    %c0_i32 = arith.constant 0 : i32
    %c0_i32_0 = arith.constant 0 : i32
    %c0_i32_1 = arith.constant 0 : i32
    return %c0_i32, %c0_i32_0 : i32, i32
  }
  func.func @transform_5(%arg0: i32) -> (i32, i32) {
    %c0_i32 = arith.constant 0 : i32
    %c0_i32_0 = arith.constant 0 : i32
    %c0_i32_1 = arith.constant 0 : i32
    return %c0_i32, %c0_i32_0 : i32, i32
  }
  func.func @transform_6(%arg0: i32) -> (i32, i32) {
    %c0_i32 = arith.constant 0 : i32
    %c0_i32_0 = arith.constant 0 : i32
    %c0_i32_1 = arith.constant 0 : i32
    return %c0_i32, %c0_i32_0 : i32, i32
  }
  func.func @transform_7(%arg0: i32) -> (i32, i32) {
    %c0_i32 = arith.constant 0 : i32
    %c0_i32_0 = arith.constant 0 : i32
    %c0_i32_1 = arith.constant 0 : i32
    return %c0_i32, %c0_i32_0 : i32, i32
  }
  func.func @transform_8(%arg0: i32) -> (i32, i32) {
    %c0_i32 = arith.constant 0 : i32
    %c0_i32_0 = arith.constant 0 : i32
    %c0_i32_1 = arith.constant 0 : i32
    return %c0_i32, %c0_i32_0 : i32, i32
  }
  func.func @transform_9(%arg0: i32) -> (i32, i32) {
    %c0_i32 = arith.constant 0 : i32
    %c0_i32_0 = arith.constant 0 : i32
    return %arg0, %c0_i32 : i32, i32
  }
}

</mosaic_0001>

<llo_original>
// kernel: tpu_custom_call.1
$region0: #{tpu_custom_call.1}
  #allocation0 [shape = 'u32[]', space=smem, size = 0x4, offset = 0x4, fixed_abs, tag = 'smem constant byte address 0x4 - core index']
  #allocation1 [shape = 'u32[144,128]{1,0:T(1,128)}', space=vmem, size = 0x12000, scoped, tag = 'internal scratch']
  %s0 = inlined_call_operand.hbm [shape: f32[256,1024], index: 0, kind: input, shape index: {}]
  %s1 = inlined_call_operand.hbm [shape: bf16[1024,384], index: 1, kind: input, shape index: {}]
  %s2 = inlined_call_operand.vmem [shape: f32[1,384], index: 2, kind: input, shape index: {}]
  %s3 = inlined_call_operand.hbm [shape: bf16[384,384], index: 3, kind: input, shape index: {}]
  %s4 = inlined_call_operand.vmem [shape: f32[1,384], index: 4, kind: input, shape index: {}]
  %s5 = inlined_call_operand.hbm [shape: bf16[384,384], index: 5, kind: input, shape index: {}]
  %s6 = inlined_call_operand.vmem [shape: f32[1,384], index: 6, kind: input, shape index: {}]
  %s7 = inlined_call_operand.hbm [shape: bf16[384,128], index: 7, kind: input, shape index: {}]
  %s8 = inlined_call_operand.vmem [shape: f32[1,128], index: 8, kind: input, shape index: {}]
  %s9 = inlined_call_operand.vmem [shape: f32[256,1], index: 9, kind: output, shape index: {}]
  %s10 = sld [smem:[#allocation0]]
  $region89: #{tpu_custom_call.1} parent=0
    _
  %s12 = ssub.s32 1, %s10
  %s13 = scalar_select 0, %s12, %s10
  $region1: #{tpu_custom_call.1} parent=0
    #allocation2 [shape = 'u8[1048576]{0}', space=vmem, size = 0x100000, scoped, tag = 'input window, operand 0']
    #allocation3 [shape = 's32[2]{0}', space=sflag, size = 0x8, scoped, tag = 'scoped memory for tpu_custom_call.1']
    #allocation4 [shape = 'u8[786432]{0}', space=vmem, size = 0xc0000, scoped, tag = 'input window, operand 1, single buffered']
    #allocation5 [shape = 's32[1]{0}', space=sflag, size = 0x4, scoped, tag = 'scoped memory for tpu_custom_call.1']
    #allocation6 [shape = 'u8[294912]{0}', space=vmem, size = 0x48000, scoped, tag = 'input window, operand 3, single buffered']
    #allocation7 [shape = 'u8[294912]{0}', space=vmem, size = 0x48000, scoped, tag = 'input window, operand 5, single buffered']
    #allocation8 [shape = 's32[1]{0}', space=sflag, size = 0x4, scoped, tag = 'scoped memory for tpu_custom_call.1']
    #allocation9 [shape = 'u8[98304]{0}', space=vmem, size = 0x18000, scoped, tag = 'input window, operand 7, single buffered']
    %14 = vsyncpa [#allocation3], 0
    %s15 = scalar_lea.sflag [#allocation3], 1
    %16 = vsyncpa %s15, 0
    %17 = vsyncpa [#allocation5], 0
    %18 = vsyncpa [#allocation8], 0
    loop: start=0, step=1, limit=4
    $region2: #{tpu_custom_call.1} parent=1 // loop_pre_header
      _
    $region3: #{tpu_custom_call.1} parent=1 // loop_header
      %s20 = sphi 0, %s24
      %p21 = scmp.ge.s32.totalorder %s20, 4
      %s30 = sphi 0, %s32
      %s33 = sphi 0, %s30
      %s34 = sphi 0, %s33
      %s50 = sphi 0, %s34
      %s54 = sphi 0, %s54
      %s56 = sphi 0, %s54
      %s57 = sphi 0, %s56
      %s71 = sphi 0, %s57
      %s75 = sphi 0, %s75
      %s77 = sphi 0, %s75
      %s78 = sphi 0, %s77
      %s92 = sphi 0, %s78
      %s96 = sphi 0, %s96
      %s98 = sphi 0, %s96
      %s99 = sphi 0, %s98
      %s113 = sphi 0, %s99
      %s117 = sphi 0, %s117
      %s119 = sphi 0, %s117
      %s120 = sphi 0, %s119
      %s134 = sphi 0, %s120
      %s138 = sphi 0, %s138
      %s140 = sphi 0, %s138
      %s141 = sphi 0, %s140
      %s155 = sphi 0, %s141
      %s159 = sphi 0, %s159
      %s161 = sphi 0, %s159
      %s162 = sphi 0, %s161
      %s176 = sphi 0, %s162
      %s180 = sphi 0, %s180
      %s182 = sphi 0, %s180
      %s183 = sphi 0, %s182
      %s197 = sphi 0, %s183
      %s201 = sphi 0, %s201
      %s203 = sphi 0, %s201
      %s204 = sphi 0, %s203
      %s218 = sphi 0, %s204
      %s224 = sphi 0, %s226
      %s227 = sphi 0, %s224
      %s228 = sphi 0, %s227
      %s244 = sphi 0, %s228
    $region4: #{tpu_custom_call.1} parent=1 // loop_header_branch
      %23 = sbr.rel (%p21) target = $region8
    $region5: #{tpu_custom_call.1} parent=1 // loop_body
      %s25 = ssub.s32 %s20, 1
      %s26 = ssub.s32 %s20, 2
      %s27 = sadd.s32 %s20, 1
      %s28 = ssub.s32 %s20, %s27
      %p29 = scmp.eq.s32.totalorder %s28, 0
      %s31 = sadd.s32 %s30, 1
      %s32 = scalar_select %p29, %s30, %s31
      %p35 = pneg %p29
      %p36 = scmp.eq.s32.totalorder %s20, 1
      %p37 = por %p35, %p36
      %p38 = scmp.ne.s32.totalorder %s30, %s33
      %p39 = scmp.eq.s32.totalorder %s20, 0
      %p40 = por %p38, %p39
      %p41 = scmp.ne.s32.totalorder %s30, %s33
      %p42 = scmp.eq.s32.totalorder %s25, 1
      %p43 = por %p41, %p42
      %p44 = scmp.ne.s32.totalorder %s33, %s34
      %p45 = scmp.eq.s32.totalorder %s25, 0
      %p46 = por %p44, %p45
      %p47 = scmp.ne.s32.totalorder %s33, %s34
      %p48 = scmp.eq.s32.totalorder %s26, 1
      %p49 = por %p47, %p48
      %p51 = scmp.ne.s32.totalorder %s34, %s50
      %p52 = scmp.eq.s32.totalorder %s26, 0
      %p53 = por %p51, %p52
      %s55 = sadd.s32 %s54, 1
      %p58 = scmp.eq.s32.totalorder %s20, 1
      %p59 = scmp.ne.s32.totalorder %s54, %s56
      %p60 = scmp.eq.s32.totalorder %s20, 0
      %p61 = por %p59, %p60
      %p62 = scmp.ne.s32.totalorder %s54, %s56
      %p63 = scmp.eq.s32.totalorder %s25, 1
      %p64 = por %p62, %p63
      %p65 = scmp.ne.s32.totalorder %s56, %s57
      %p66 = scmp.eq.s32.totalorder %s25, 0
      %p67 = por %p65, %p66
      %p68 = scmp.ne.s32.totalorder %s56, %s57
      %p69 = scmp.eq.s32.totalorder %s26, 1
      %p70 = por %p68, %p69
      %p72 = scmp.ne.s32.totalorder %s57, %s71
      %p73 = scmp.eq.s32.totalorder %s26, 0
      %p74 = por %p72, %p73
      %s76 = sadd.s32 %s75, 1
      %p79 = scmp.eq.s32.totalorder %s20, 1
      %p80 = scmp.ne.s32.totalorder %s75, %s77
      %p81 = scmp.eq.s32.totalorder %s20, 0
      %p82 = por %p80, %p81
      %p83 = scmp.ne.s32.totalorder %s75, %s77
      %p84 = scmp.eq.s32.totalorder %s25, 1
      %p85 = por %p83, %p84
      %p86 = scmp.ne.s32.totalorder %s77, %s78
      %p87 = scmp.eq.s32.totalorder %s25, 0
      %p88 = por %p86, %p87
      %p89 = scmp.ne.s32.totalorder %s77, %s78
      %p90 = scmp.eq.s32.totalorder %s26, 1
      %p91 = por %p89, %p90
      %p93 = scmp.ne.s32.totalorder %s78, %s92
      %p94 = scmp.eq.s32.totalorder %s26, 0
      %p95 = por %p93, %p94
      %s97 = sadd.s32 %s96, 1
      %p100 = scmp.eq.s32.totalorder %s20, 1
      %p101 = scmp.ne.s32.totalorder %s96, %s98
      %p102 = scmp.eq.s32.totalorder %s20, 0
      %p103 = por %p101, %p102
      %p104 = scmp.ne.s32.totalorder %s96, %s98
      %p105 = scmp.eq.s32.totalorder %s25, 1
      %p106 = por %p104, %p105
      %p107 = scmp.ne.s32.totalorder %s98, %s99
      %p108 = scmp.eq.s32.totalorder %s25, 0
      %p109 = por %p107, %p108
      %p110 = scmp.ne.s32.totalorder %s98, %s99
      %p111 = scmp.eq.s32.totalorder %s26, 1
      %p112 = por %p110, %p111
      %p114 = scmp.ne.s32.totalorder %s99, %s113
      %p115 = scmp.eq.s32.totalorder %s26, 0
      %p116 = por %p114, %p115
      %s118 = sadd.s32 %s117, 1
      %p121 = scmp.eq.s32.totalorder %s20, 1
      %p122 = scmp.ne.s32.totalorder %s117, %s119
      %p123 = scmp.eq.s32.totalorder %s20, 0
      %p124 = por %p122, %p123
      %p125 = scmp.ne.s32.totalorder %s117, %s119
      %p126 = scmp.eq.s32.totalorder %s25, 1
      %p127 = por %p125, %p126
      %p128 = scmp.ne.s32.totalorder %s119, %s120
      %p129 = scmp.eq.s32.totalorder %s25, 0
      %p130 = por %p128, %p129
      %p131 = scmp.ne.s32.totalorder %s119, %s120
      %p132 = scmp.eq.s32.totalorder %s26, 1
      %p133 = por %p131, %p132
      %p135 = scmp.ne.s32.totalorder %s120, %s134
      %p136 = scmp.eq.s32.totalorder %s26, 0
      %p137 = por %p135, %p136
      %s139 = sadd.s32 %s138, 1
      %p142 = scmp.eq.s32.totalorder %s20, 1
      %p143 = scmp.ne.s32.totalorder %s138, %s140
      %p144 = scmp.eq.s32.totalorder %s20, 0
      %p145 = por %p143, %p144
      %p146 = scmp.ne.s32.totalorder %s138, %s140
      %p147 = scmp.eq.s32.totalorder %s25, 1
      %p148 = por %p146, %p147
      %p149 = scmp.ne.s32.totalorder %s140, %s141
      %p150 = scmp.eq.s32.totalorder %s25, 0
      %p151 = por %p149, %p150
      %p152 = scmp.ne.s32.totalorder %s140, %s141
      %p153 = scmp.eq.s32.totalorder %s26, 1
      %p154 = por %p152, %p153
      %p156 = scmp.ne.s32.totalorder %s141, %s155
      %p157 = scmp.eq.s32.totalorder %s26, 0
      %p158 = por %p156, %p157
      %s160 = sadd.s32 %s159, 1
      %p163 = scmp.eq.s32.totalorder %s20, 1
      %p164 = scmp.ne.s32.totalorder %s159, %s161
      %p165 = scmp.eq.s32.totalorder %s20, 0
      %p166 = por %p164, %p165
      %p167 = scmp.ne.s32.totalorder %s159, %s161
      %p168 = scmp.eq.s32.totalorder %s25, 1
      %p169 = por %p167, %p168
      %p170 = scmp.ne.s32.totalorder %s161, %s162
      %p171 = scmp.eq.s32.totalorder %s25, 0
      %p172 = por %p170, %p171
      %p173 = scmp.ne.s32.totalorder %s161, %s162
      %p174 = scmp.eq.s32.totalorder %s26, 1
      %p175 = por %p173, %p174
      %p177 = scmp.ne.s32.totalorder %s162, %s176
      %p178 = scmp.eq.s32.totalorder %s26, 0
      %p179 = por %p177, %p178
      %s181 = sadd.s32 %s180, 1
      %p184 = scmp.eq.s32.totalorder %s20, 1
      %p185 = scmp.ne.s32.totalorder %s180, %s182
      %p186 = scmp.eq.s32.totalorder %s20, 0
      %p187 = por %p185, %p186
      %p188 = scmp.ne.s32.totalorder %s180, %s182
      %p189 = scmp.eq.s32.totalorder %s25, 1
      %p190 = por %p188, %p189
      %p191 = scmp.ne.s32.totalorder %s182, %s183
      %p192 = scmp.eq.s32.totalorder %s25, 0
      %p193 = por %p191, %p192
      %p194 = scmp.ne.s32.totalorder %s182, %s183
      %p195 = scmp.eq.s32.totalorder %s26, 1
      %p196 = por %p194, %p195
      %p198 = scmp.ne.s32.totalorder %s183, %s197
      %p199 = scmp.eq.s32.totalorder %s26, 0
      %p200 = por %p198, %p199
      %s202 = sadd.s32 %s201, 1
      %p205 = scmp.eq.s32.totalorder %s20, 1
      %p206 = scmp.ne.s32.totalorder %s201, %s203
      %p207 = scmp.eq.s32.totalorder %s20, 0
      %p208 = por %p206, %p207
      %p209 = scmp.ne.s32.totalorder %s201, %s203
      %p210 = scmp.eq.s32.totalorder %s25, 1
      %p211 = por %p209, %p210
      %p212 = scmp.ne.s32.totalorder %s203, %s204
      %p213 = scmp.eq.s32.totalorder %s25, 0
      %p214 = por %p212, %p213
      %p215 = scmp.ne.s32.totalorder %s203, %s204
      %p216 = scmp.eq.s32.totalorder %s26, 1
      %p217 = por %p215, %p216
      %p219 = scmp.ne.s32.totalorder %s204, %s218
      %p220 = scmp.eq.s32.totalorder %s26, 0
      %p221 = por %p219, %p220
      %s222 = ssub.s32 %s20, %s27
      %p223 = scmp.eq.s32.totalorder %s222, 0
      %s225 = sadd.s32 %s224, 1
      %s226 = scalar_select %p223, %s224, %s225
      %p229 = pneg %p223
      %p230 = scmp.eq.s32.totalorder %s20, 1
      %p231 = por %p229, %p230
      %p232 = scmp.ne.s32.totalorder %s224, %s227
      %p233 = scmp.eq.s32.totalorder %s20, 0
      %p234 = por %p232, %p233
      %p235 = scmp.ne.s32.totalorder %s224, %s227
      %p236 = scmp.eq.s32.totalorder %s25, 1
      %p237 = por %p235, %p236
      %p238 = scmp.ne.s32.totalorder %s227, %s228
      %p239 = scmp.eq.s32.totalorder %s25, 0
      %p240 = por %p238, %p239
      %p241 = scmp.ne.s32.totalorder %s227, %s228
      %p242 = scmp.eq.s32.totalorder %s26, 1
      %p243 = por %p241, %p242
      %p245 = scmp.ne.s32.totalorder %s228, %s244
      %p246 = scmp.eq.s32.totalorder %s26, 0
      %p247 = por %p245, %p246
      %p248 = scmp.le.s32.totalorder 1, %s20
      %p249 = scmp.lt.s32.totalorder %s20, 3
      %p250 = pnand %p248, %p249
      %p251 = pneg %p250
      // Predicated region
      $region9: #{tpu_custom_call.1} parent=5 // pred_check
        _
      $region10: #{tpu_custom_call.1} parent=5 // pred_check_branch
        %253 = sbr.rel (%p250) target = $region12
      $region11: #{tpu_custom_call.1} parent=5 // pred_region
        %s254 = ssub.s32 %s20, 1
        // Predicated region
        $region13: #{tpu_custom_call.1} parent=11 // pred_check
          %p255 = pneg %p67
        $region14: #{tpu_custom_call.1} parent=11 // pred_check_branch
          %257 = sbr.rel (%p255) target = $region16
        $region15: #{tpu_custom_call.1} parent=11 // pred_region
          %s259 = ssub.s32 24576, 24576
          %260 = vsyncadd [#allocation5], %s259
          %s261 = sshll.u32 [#allocation4], 4
          %s262 = int_to_ptr.vmem [resolvable:$true] %s261
          %267 = dma.hbm_to_vmem [thread:$0]  %s1, 24576, %s262, [#allocation5], 192, 192, 12
        $region16: #{tpu_custom_call.1} parent=11 // pred_fallthru
          _
        // Predicated region
        $region17: #{tpu_custom_call.1} parent=11 // pred_check
          %p268 = pneg %p88
        $region18: #{tpu_custom_call.1} parent=11 // pred_check_branch
          %270 = sbr.rel (%p268) target = $region20
        $region19: #{tpu_custom_call.1} parent=11 // pred_region
          _
        $region20: #{tpu_custom_call.1} parent=11 // pred_fallthru
          _
        // Predicated region
        $region21: #{tpu_custom_call.1} parent=11 // pred_check
          %p271 = pneg %p109
        $region22: #{tpu_custom_call.1} parent=11 // pred_check_branch
          %273 = sbr.rel (%p271) target = $region24
        $region23: #{tpu_custom_call.1} parent=11 // pred_region
          %s275 = ssub.s32 9216, 9216
          %276 = vsyncadd [#allocation5], %s275
          %s277 = sshll.u32 [#allocation6], 4
          %s278 = int_to_ptr.vmem [resolvable:$true] %s277
          %283 = dma.hbm_to_vmem [thread:$0]  %s3, 9216, %s278, [#allocation5], 192, 192, 12
        $region24: #{tpu_custom_call.1} parent=11 // pred_fallthru
          _
        // Predicated region
        $region25: #{tpu_custom_call.1} parent=11 // pred_check
          %p284 = pneg %p130
        $region26: #{tpu_custom_call.1} parent=11 // pred_check_branch
          %286 = sbr.rel (%p284) target = $region28
        $region27: #{tpu_custom_call.1} parent=11 // pred_region
          _
        $region28: #{tpu_custom_call.1} parent=11 // pred_fallthru
          _
        // Predicated region
        $region29: #{tpu_custom_call.1} parent=11 // pred_check
          %p287 = pneg %p151
        $region30: #{tpu_custom_call.1} parent=11 // pred_check_branch
          %289 = sbr.rel (%p287) target = $region32
        $region31: #{tpu_custom_call.1} parent=11 // pred_region
          %s291 = ssub.s32 9216, 9216
          %292 = vsyncadd [#allocation8], %s291
          %s293 = sshll.u32 [#allocation7], 4
          %s294 = int_to_ptr.vmem [resolvable:$true] %s293
          %299 = dma.hbm_to_vmem [thread:$0]  %s5, 9216, %s294, [#allocation8], 192, 192, 12
        $region32: #{tpu_custom_call.1} parent=11 // pred_fallthru
          _
        // Predicated region
        $region33: #{tpu_custom_call.1} parent=11 // pred_check
          %p300 = pneg %p172
        $region34: #{tpu_custom_call.1} parent=11 // pred_check_branch
          %302 = sbr.rel (%p300) target = $region36
        $region35: #{tpu_custom_call.1} parent=11 // pred_region
          _
        $region36: #{tpu_custom_call.1} parent=11 // pred_fallthru
          _
        // Predicated region
        $region37: #{tpu_custom_call.1} parent=11 // pred_check
          %p303 = pneg %p193
        $region38: #{tpu_custom_call.1} parent=11 // pred_check_branch
          %305 = sbr.rel (%p303) target = $region40
        $region39: #{tpu_custom_call.1} parent=11 // pred_region
          %s307 = ssub.s32 3072, 3072
          %308 = vsyncadd [#allocation8], %s307
          %s309 = sshll.u32 [#allocation9], 4
          %s310 = int_to_ptr.vmem [resolvable:$true] %s309
          %315 = dma.hbm_to_vmem [thread:$0]  %s7, 3072, %s310, [#allocation8], 64, 64, 4
        $region40: #{tpu_custom_call.1} parent=11 // pred_fallthru
          _
        // Predicated region
        $region41: #{tpu_custom_call.1} parent=11 // pred_check
          %p316 = pneg %p214
        $region42: #{tpu_custom_call.1} parent=11 // pred_check_branch
          %318 = sbr.rel (%p316) target = $region44
        $region43: #{tpu_custom_call.1} parent=11 // pred_region
          _
        $region44: #{tpu_custom_call.1} parent=11 // pred_fallthru
          _
      $region12: #{tpu_custom_call.1} parent=5 // pred_fallthru
        _
      %p319 = scmp.lt.s32.totalorder %s20, 2
      // Predicated region
      $region45: #{tpu_custom_call.1} parent=5 // pred_check
        %p320 = pneg %p319
      $region46: #{tpu_custom_call.1} parent=5 // pred_check_branch
        %322 = sbr.rel (%p320) target = $region48
      $region47: #{tpu_custom_call.1} parent=5 // pred_region
        // Predicated region
        $region49: #{tpu_custom_call.1} parent=47 // pred_check
          %p323 = pneg %p40
        $region50: #{tpu_custom_call.1} parent=47 // pred_check_branch
          %325 = sbr.rel (%p323) target = $region52
        $region51: #{tpu_custom_call.1} parent=47 // pred_region
          %s326 = sand.u32 %s30, 1
          %s327 = scalar_lea.sflag [#allocation3], %s326
          %s328 = sand.u32 %s30, 1
          %s329 = smul.addr %s328, 1024
          %s330 = scalar_lea.vmem [#allocation2], %s329
          %s331 = smul.u32 16, %s20
          %s333 = ssub.s32 16384, 16384
          %334 = vsyncadd %s327, %s333
          %s335 = smul.addr %s331, 8
          %s336 = smul.addr %s335, 128
          %s337 = scalar_lea.hbm %s0, %s336
          %s338 = sshll.u32 %s330, 4
          %s339 = int_to_ptr.vmem [resolvable:$true] %s338
          %344 = dma.hbm_to_vmem [thread:$0]  %s337, 16384, %s339, %s327, 1024, 1024, 64
        $region52: #{tpu_custom_call.1} parent=47 // pred_fallthru
          _
      $region48: #{tpu_custom_call.1} parent=5 // pred_fallthru
        _
      %p345 = scmp.le.s32.totalorder 1, %s20
      %p346 = scmp.lt.s32.totalorder %s20, 3
      %p347 = pnand %p345, %p346
      %p348 = pneg %p347
      // Predicated region
      $region53: #{tpu_custom_call.1} parent=5 // pred_check
        _
      $region54: #{tpu_custom_call.1} parent=5 // pred_check_branch
        %350 = sbr.rel (%p347) target = $region56
      $region55: #{tpu_custom_call.1} parent=5 // pred_region
        %s351 = ssub.s32 %s20, 1
        %s352 = sand.u32 %s33, 1
        %s353 = scalar_lea.sflag [#allocation3], %s352
        %s354 = sand.u32 %s33, 1
        %s355 = smul.addr %s354, 1024
        %s356 = scalar_lea.vmem [#allocation2], %s355
        // Predicated region
        $region57: #{tpu_custom_call.1} parent=55 // pred_check
          %p357 = pneg %p46
        $region58: #{tpu_custom_call.1} parent=55 // pred_check_branch
          %359 = sbr.rel (%p357) target = $region60
        $region59: #{tpu_custom_call.1} parent=55 // pred_region
          %360 = dma.done %s353, 16384
        $region60: #{tpu_custom_call.1} parent=55 // pred_fallthru
          _
        // Predicated region
        $region61: #{tpu_custom_call.1} parent=55 // pred_check
          %p361 = pneg %p67
        $region62: #{tpu_custom_call.1} parent=55 // pred_check_branch
          %363 = sbr.rel (%p361) target = $region64
        $region63: #{tpu_custom_call.1} parent=55 // pred_region
          %364 = dma.done [#allocation5], 24576
        $region64: #{tpu_custom_call.1} parent=55 // pred_fallthru
          _
        // Predicated region
        $region65: #{tpu_custom_call.1} parent=55 // pred_check
          %p365 = pneg %p109
        $region66: #{tpu_custom_call.1} parent=55 // pred_check_branch
          %367 = sbr.rel (%p365) target = $region68
        $region67: #{tpu_custom_call.1} parent=55 // pred_region
          %368 = dma.done [#allocation5], 9216
        $region68: #{tpu_custom_call.1} parent=55 // pred_fallthru
          _
        // Predicated region
        $region69: #{tpu_custom_call.1} parent=55 // pred_check
          %p369 = pneg %p151
        $region70: #{tpu_custom_call.1} parent=55 // pred_check_branch
          %371 = sbr.rel (%p369) target = $region72
        $region71: #{tpu_custom_call.1} parent=55 // pred_region
          %372 = dma.done [#allocation8], 9216
        $region72: #{tpu_custom_call.1} parent=55 // pred_fallthru
          _
        // Predicated region
        $region73: #{tpu_custom_call.1} parent=55 // pred_check
          %p373 = pneg %p193
        $region74: #{tpu_custom_call.1} parent=55 // pred_check_branch
          %375 = sbr.rel (%p373) target = $region76
        $region75: #{tpu_custom_call.1} parent=55 // pred_region
          %376 = dma.done [#allocation8], 3072
        $region76: #{tpu_custom_call.1} parent=55 // pred_fallthru
          _
        %s377 = sand.u32 %s33, 1
        %s378 = scalar_lea.sflag [#allocation3], %s377
        %s379 = sand.u32 %s33, 1
        %s380 = smul.addr %s379, 1024
        %s381 = scalar_lea.vmem [#allocation2], %s380
        %p382 = pneg %p46
        %p383 = pneg %p43
        %p384 = pneg %p67
        %p385 = pneg %p64
        %p386 = pneg %p88
        %p387 = pneg %p85
        %p388 = pneg %p109
        %p389 = pneg %p106
        %p390 = pneg %p130
        %p391 = pneg %p127
        %p392 = pneg %p151
        %p393 = pneg %p148
        %p394 = pneg %p172
        %p395 = pneg %p169
        %p396 = pneg %p193
        %p397 = pneg %p190
        %p398 = pneg %p214
        %p399 = pneg %p211
        %p400 = pneg %p240
        %p401 = pneg %p237
        %s402 = smul.u32 16, %s25
        %p403 = scmp.lt.s32.totalorder %s402, 31
        %s404 = scalar_select %p403, %s402, 31
        %s405 = smul.addr %s404, 8
        %s406 = scalar_lea.vmem %s9, %s405
        %s407 = smul.u32 16, %s25
        %s408 = smul.u32 16, %s25
        %p409 = scmp.lt.s32.totalorder %s408, 31
        %s410 = scalar_select %p409, %s408, 31
        %s411 = smul.addr %s410, 8
        %s412 = scalar_lea.vmem %s9, %s411
        %s413 = smul.u32 16, %s25
        %v415 = vld [vmem:[%s356] sm:$0xff]
        %v416 = vld [vmem:[%s356 + $0x8] sm:$0xff]
        %v417 = vld [vmem:[%s356 + $0x10] sm:$0xff]
        %v418 = vld [vmem:[%s356 + $0x18] sm:$0xff]
        %v419 = vld [vmem:[%s356 + $0x20] sm:$0xff]
        %v420 = vld [vmem:[%s356 + $0x28] sm:$0xff]
        %v421 = vld [vmem:[%s356 + $0x30] sm:$0xff]
        %v422 = vld [vmem:[%s356 + $0x38] sm:$0xff]
        %v423 = vld [vmem:[%s356 + $0x40] sm:$0xff]
        %v424 = vld [vmem:[%s356 + $0x48] sm:$0xff]
        %v425 = vld [vmem:[%s356 + $0x50] sm:$0xff]
        %v426 = vld [vmem:[%s356 + $0x58] sm:$0xff]
        %v427 = vld [vmem:[%s356 + $0x60] sm:$0xff]
        %v428 = vld [vmem:[%s356 + $0x68] sm:$0xff]
        %v429 = vld [vmem:[%s356 + $0x70] sm:$0xff]
        %v430 = vld [vmem:[%s356 + $0x78] sm:$0xff]
        %v431 = vld [vmem:[%s356 + $0x80] sm:$0xff]
        %v432 = vld [vmem:[%s356 + $0x88] sm:$0xff]
        %v433 = vld [vmem:[%s356 + $0x90] sm:$0xff]
        %v434 = vld [vmem:[%s356 + $0x98] sm:$0xff]
        %v435 = vld [vmem:[%s356 + $0xa0] sm:$0xff]
        %v436 = vld [vmem:[%s356 + $0xa8] sm:$0xff]
        %v437 = vld [vmem:[%s356 + $0xb0] sm:$0xff]
        %v438 = vld [vmem:[%s356 + $0xb8] sm:$0xff]
        %v439 = vld [vmem:[%s356 + $0xc0] sm:$0xff]
        %v440 = vld [vmem:[%s356 + $0xc8] sm:$0xff]
        %v441 = vld [vmem:[%s356 + $0xd0] sm:$0xff]
        %v442 = vld [vmem:[%s356 + $0xd8] sm:$0xff]
        %v443 = vld [vmem:[%s356 + $0xe0] sm:$0xff]
        %v444 = vld [vmem:[%s356 + $0xe8] sm:$0xff]
        %v445 = vld [vmem:[%s356 + $0xf0] sm:$0xff]
        %v446 = vld [vmem:[%s356 + $0xf8] sm:$0xff]
        %v447 = vld [vmem:[%s356 + $0x100] sm:$0xff]
        %v448 = vld [vmem:[%s356 + $0x108] sm:$0xff]
        %v449 = vld [vmem:[%s356 + $0x110] sm:$0xff]
        %v450 = vld [vmem:[%s356 + $0x118] sm:$0xff]
        %v451 = vld [vmem:[%s356 + $0x120] sm:$0xff]
        %v452 = vld [vmem:[%s356 + $0x128] sm:$0xff]
        %v453 = vld [vmem:[%s356 + $0x130] sm:$0xff]
        %v454 = vld [vmem:[%s356 + $0x138] sm:$0xff]
        %v455 = vld [vmem:[%s356 + $0x140] sm:$0xff]
        %v456 = vld [vmem:[%s356 + $0x148] sm:$0xff]
        %v457 = vld [vmem:[%s356 + $0x150] sm:$0xff]
        %v458 = vld [vmem:[%s356 + $0x158] sm:$0xff]
        %v459 = vld [vmem:[%s356 + $0x160] sm:$0xff]
        %v460 = vld [vmem:[%s356 + $0x168] sm:$0xff]
        %v461 = vld [vmem:[%s356 + $0x170] sm:$0xff]
        %v462 = vld [vmem:[%s356 + $0x178] sm:$0xff]
        %v463 = vld [vmem:[%s356 + $0x180] sm:$0xff]
        %v464 = vld [vmem:[%s356 + $0x188] sm:$0xff]
        %v465 = vld [vmem:[%s356 + $0x190] sm:$0xff]
        %v466 = vld [vmem:[%s356 + $0x198] sm:$0xff]
        %v467 = vld [vmem:[%s356 + $0x1a0] sm:$0xff]
        %v468 = vld [vmem:[%s356 + $0x1a8] sm:$0xff]
        %v469 = vld [vmem:[%s356 + $0x1b0] sm:$0xff]
        %v470 = vld [vmem:[%s356 + $0x1b8] sm:$0xff]
        %v471 = vld [vmem:[%s356 + $0x1c0] sm:$0xff]
        %v472 = vld [vmem:[%s356 + $0x1c8] sm:$0xff]
        %v473 = vld [vmem:[%s356 + $0x1d0] sm:$0xff]
        %v474 = vld [vmem:[%s356 + $0x1d8] sm:$0xff]
        %v475 = vld [vmem:[%s356 + $0x1e0] sm:$0xff]
        %v476 = vld [vmem:[%s356 + $0x1e8] sm:$0xff]
        %v477 = vld [vmem:[%s356 + $0x1f0] sm:$0xff]
        %v478 = vld [vmem:[%s356 + $0x1f8] sm:$0xff]
        %v479 = vld [vmem:[%s356 + $0x200] sm:$0xff]
        %v480 = vld [vmem:[%s356 + $0x208] sm:$0xff]
        %v481 = vld [vmem:[%s356 + $0x210] sm:$0xff]
        %v482 = vld [vmem:[%s356 + $0x218] sm:$0xff]
        %v483 = vld [vmem:[%s356 + $0x220] sm:$0xff]
        %v484 = vld [vmem:[%s356 + $0x228] sm:$0xff]
        %v485 = vld [vmem:[%s356 + $0x230] sm:$0xff]
        %v486 = vld [vmem:[%s356 + $0x238] sm:$0xff]
        %v487 = vld [vmem:[%s356 + $0x240] sm:$0xff]
        %v488 = vld [vmem:[%s356 + $0x248] sm:$0xff]
        %v489 = vld [vmem:[%s356 + $0x250] sm:$0xff]
        %v490 = vld [vmem:[%s356 + $0x258] sm:$0xff]
        %v491 = vld [vmem:[%s356 + $0x260] sm:$0xff]
        %v492 = vld [vmem:[%s356 + $0x268] sm:$0xff]
        %v493 = vld [vmem:[%s356 + $0x270] sm:$0xff]
        %v494 = vld [vmem:[%s356 + $0x278] sm:$0xff]
        %v495 = vld [vmem:[%s356 + $0x280] sm:$0xff]
        %v496 = vld [vmem:[%s356 + $0x288] sm:$0xff]
        %v497 = vld [vmem:[%s356 + $0x290] sm:$0xff]
        %v498 = vld [vmem:[%s356 + $0x298] sm:$0xff]
        %v499 = vld [vmem:[%s356 + $0x2a0] sm:$0xff]
        %v500 = vld [vmem:[%s356 + $0x2a8] sm:$0xff]
        %v501 = vld [vmem:[%s356 + $0x2b0] sm:$0xff]
        %v502 = vld [vmem:[%s356 + $0x2b8] sm:$0xff]
        %v503 = vld [vmem:[%s356 + $0x2c0] sm:$0xff]
        %v504 = vld [vmem:[%s356 + $0x2c8] sm:$0xff]
        %v505 = vld [vmem:[%s356 + $0x2d0] sm:$0xff]
        %v506 = vld [vmem:[%s356 + $0x2d8] sm:$0xff]
        %v507 = vld [vmem:[%s356 + $0x2e0] sm:$0xff]
        %v508 = vld [vmem:[%s356 + $0x2e8] sm:$0xff]
        %v509 = vld [vmem:[%s356 + $0x2f0] sm:$0xff]
        %v510 = vld [vmem:[%s356 + $0x2f8] sm:$0xff]
        %v511 = vld [vmem:[%s356 + $0x300] sm:$0xff]
        %v512 = vld [vmem:[%s356 + $0x308] sm:$0xff]
        %v513 = vld [vmem:[%s356 + $0x310] sm:$0xff]
        %v514 = vld [vmem:[%s356 + $0x318] sm:$0xff]
        %v515 = vld [vmem:[%s356 + $0x320] sm:$0xff]
        %v516 = vld [vmem:[%s356 + $0x328] sm:$0xff]
        %v517 = vld [vmem:[%s356 + $0x330] sm:$0xff]
        %v518 = vld [vmem:[%s356 + $0x338] sm:$0xff]
        %v519 = vld [vmem:[%s356 + $0x340] sm:$0xff]
        %v520 = vld [vmem:[%s356 + $0x348] sm:$0xff]
        %v521 = vld [vmem:[%s356 + $0x350] sm:$0xff]
        %v522 = vld [vmem:[%s356 + $0x358] sm:$0xff]
        %v523 = vld [vmem:[%s356 + $0x360] sm:$0xff]
        %v524 = vld [vmem:[%s356 + $0x368] sm:$0xff]
        %v525 = vld [vmem:[%s356 + $0x370] sm:$0xff]
        %v526 = vld [vmem:[%s356 + $0x378] sm:$0xff]
        %v527 = vld [vmem:[%s356 + $0x380] sm:$0xff]
        %v528 = vld [vmem:[%s356 + $0x388] sm:$0xff]
        %v529 = vld [vmem:[%s356 + $0x390] sm:$0xff]
        %v530 = vld [vmem:[%s356 + $0x398] sm:$0xff]
        %v531 = vld [vmem:[%s356 + $0x3a0] sm:$0xff]
        %v532 = vld [vmem:[%s356 + $0x3a8] sm:$0xff]
        %v533 = vld [vmem:[%s356 + $0x3b0] sm:$0xff]
        %v534 = vld [vmem:[%s356 + $0x3b8] sm:$0xff]
        %v535 = vld [vmem:[%s356 + $0x3c0] sm:$0xff]
        %v536 = vld [vmem:[%s356 + $0x3c8] sm:$0xff]
        %v537 = vld [vmem:[%s356 + $0x3d0] sm:$0xff]
        %v538 = vld [vmem:[%s356 + $0x3d8] sm:$0xff]
        %v539 = vld [vmem:[%s356 + $0x3e0] sm:$0xff]
        %v540 = vld [vmem:[%s356 + $0x3e8] sm:$0xff]
        %v541 = vld [vmem:[%s356 + $0x3f0] sm:$0xff]
        %v542 = vld [vmem:[%s356 + $0x3f8] sm:$0xff]
        %v543 = vpack.c.bf16 %v423, %v415
        %v544 = vpack.c.bf16 %v424, %v416
        %v545 = vpack.c.bf16 %v425, %v417
        %v546 = vpack.c.bf16 %v426, %v418
        %v547 = vpack.c.bf16 %v427, %v419
        %v548 = vpack.c.bf16 %v428, %v420
        %v549 = vpack.c.bf16 %v429, %v421
        %v550 = vpack.c.bf16 %v430, %v422
        %v551 = vpack.c.bf16 %v439, %v431
        %v552 = vpack.c.bf16 %v440, %v432
        %v553 = vpack.c.bf16 %v441, %v433
        %v554 = vpack.c.bf16 %v442, %v434
        %v555 = vpack.c.bf16 %v443, %v435
        %v556 = vpack.c.bf16 %v444, %v436
        %v557 = vpack.c.bf16 %v445, %v437
        %v558 = vpack.c.bf16 %v446, %v438
        %v559 = vpack.c.bf16 %v455, %v447
        %v560 = vpack.c.bf16 %v456, %v448
        %v561 = vpack.c.bf16 %v457, %v449
        %v562 = vpack.c.bf16 %v458, %v450
        %v563 = vpack.c.bf16 %v459, %v451
        %v564 = vpack.c.bf16 %v460, %v452
        %v565 = vpack.c.bf16 %v461, %v453
        %v566 = vpack.c.bf16 %v462, %v454
        %v567 = vpack.c.bf16 %v471, %v463
        %v568 = vpack.c.bf16 %v472, %v464
        %v569 = vpack.c.bf16 %v473, %v465
        %v570 = vpack.c.bf16 %v474, %v466
        %v571 = vpack.c.bf16 %v475, %v467
        %v572 = vpack.c.bf16 %v476, %v468
        %v573 = vpack.c.bf16 %v477, %v469
        %v574 = vpack.c.bf16 %v478, %v470
        %v575 = vpack.c.bf16 %v487, %v479
        %v576 = vpack.c.bf16 %v488, %v480
        %v577 = vpack.c.bf16 %v489, %v481
        %v578 = vpack.c.bf16 %v490, %v482
        %v579 = vpack.c.bf16 %v491, %v483
        %v580 = vpack.c.bf16 %v492, %v484
        %v581 = vpack.c.bf16 %v493, %v485
        %v582 = vpack.c.bf16 %v494, %v486
        %v583 = vpack.c.bf16 %v503, %v495
        %v584 = vpack.c.bf16 %v504, %v496
        %v585 = vpack.c.bf16 %v505, %v497
        %v586 = vpack.c.bf16 %v506, %v498
        %v587 = vpack.c.bf16 %v507, %v499
        %v588 = vpack.c.bf16 %v508, %v500
        %v589 = vpack.c.bf16 %v509, %v501
        %v590 = vpack.c.bf16 %v510, %v502
        %v591 = vpack.c.bf16 %v519, %v511
        %v592 = vpack.c.bf16 %v520, %v512
        %v593 = vpack.c.bf16 %v521, %v513
        %v594 = vpack.c.bf16 %v522, %v514
        %v595 = vpack.c.bf16 %v523, %v515
        %v596 = vpack.c.bf16 %v524, %v516
        %v597 = vpack.c.bf16 %v525, %v517
        %v598 = vpack.c.bf16 %v526, %v518
        %v599 = vpack.c.bf16 %v535, %v527
        %v600 = vpack.c.bf16 %v536, %v528
        %v601 = vpack.c.bf16 %v537, %v529
        %v602 = vpack.c.bf16 %v538, %v530
        %v603 = vpack.c.bf16 %v539, %v531
        %v604 = vpack.c.bf16 %v540, %v532
        %v605 = vpack.c.bf16 %v541, %v533
        %v606 = vpack.c.bf16 %v542, %v534
        %v607 = vld [vmem:[#allocation4] sm:$0xff]
        %v608 = vld [vmem:[#allocation4 + $0x8] sm:$0xf]
        %v609 = vld [vmem:[#allocation4 + $0xc] sm:$0xff]
        %v610 = vld [vmem:[#allocation4 + $0x14] sm:$0xf]
        %v611 = vld [vmem:[#allocation4 + $0x18] sm:$0xff]
        %v612 = vld [vmem:[#allocation4 + $0x20] sm:$0xf]
        %v613 = vld [vmem:[#allocation4 + $0x24] sm:$0xff]
        %v614 = vld [vmem:[#allocation4 + $0x2c] sm:$0xf]
        %v615 = vld [vmem:[#allocation4 + $0x30] sm:$0xff]
        %v616 = vld [vmem:[#allocation4 + $0x38] sm:$0xf]
        %v617 = vld [vmem:[#allocation4 + $0x3c] sm:$0xff]
        %v618 = vld [vmem:[#allocation4 + $0x44] sm:$0xf]
        %v619 = vld [vmem:[#allocation4 + $0x48] sm:$0xff]
        %v620 = vld [vmem:[#allocation4 + $0x50] sm:$0xf]
        %v621 = vld [vmem:[#allocation4 + $0x54] sm:$0xff]
        %v622 = vld [vmem:[#allocation4 + $0x5c] sm:$0xf]
        %v623 = vld [vmem:[#allocation4 + $0x60] sm:$0xff]
        %v624 = vld [vmem:[#allocation4 + $0x68] sm:$0xf]
        %v625 = vld [vmem:[#allocation4 + $0x6c] sm:$0xff]
        %v626 = vld [vmem:[#allocation4 + $0x74] sm:$0xf]
        %v627 = vld [vmem:[#allocation4 + $0x78] sm:$0xff]
        %v628 = vld [vmem:[#allocation4 + $0x80] sm:$0xf]
        %v629 = vld [vmem:[#allocation4 + $0x84] sm:$0xff]
        %v630 = vld [vmem:[#allocation4 + $0x8c] sm:$0xf]
        %v631 = vld [vmem:[#allocation4 + $0x90] sm:$0xff]
        %v632 = vld [vmem:[#allocation4 + $0x98] sm:$0xf]
        %v633 = vld [vmem:[#allocation4 + $0x9c] sm:$0xff]
        %v634 = vld [vmem:[#allocation4 + $0xa4] sm:$0xf]
        %v635 = vld [vmem:[#allocation4 + $0xa8] sm:$0xff]
        %v636 = vld [vmem:[#allocation4 + $0xb0] sm:$0xf]
        %v637 = vld [vmem:[#allocation4 + $0xb4] sm:$0xff]
        %v638 = vld [vmem:[#allocation4 + $0xbc] sm:$0xf]
        %v639 = vld [vmem:[#allocation4 + $0xc0] sm:$0xff]
        %v640 = vld [vmem:[#allocation4 + $0xc8] sm:$0xf]
        %v641 = vld [vmem:[#allocation4 + $0xcc] sm:$0xff]
        %v642 = vld [vmem:[#allocation4 + $0xd4] sm:$0xf]
        %v643 = vld [vmem:[#allocation4 + $0xd8] sm:$0xff]
        %v644 = vld [vmem:[#allocation4 + $0xe0] sm:$0xf]
        %v645 = vld [vmem:[#allocation4 + $0xe4] sm:$0xff]
        %v646 = vld [vmem:[#allocation4 + $0xec] sm:$0xf]
        %v647 = vld [vmem:[#allocation4 + $0xf0] sm:$0xff]
        %v648 = vld [vmem:[#allocation4 + $0xf8] sm:$0xf]
        %v649 = vld [vmem:[#allocation4 + $0xfc] sm:$0xff]
        %v650 = vld [vmem:[#allocation4 + $0x104] sm:$0xf]
        %v651 = vld [vmem:[#allocation4 + $0x108] sm:$0xff]
        %v652 = vld [vmem:[#allocation4 + $0x110] sm:$0xf]
        %v653 = vld [vmem:[#allocation4 + $0x114] sm:$0xff]
        %v654 = vld [vmem:[#allocation4 + $0x11c] sm:$0xf]
        %v655 = vld [vmem:[#allocation4 + $0x120] sm:$0xff]
        %v656 = vld [vmem:[#allocation4 + $0x128] sm:$0xf]
        %v657 = vld [vmem:[#allocation4 + $0x12c] sm:$0xff]
        %v658 = vld [vmem:[#allocation4 + $0x134] sm:$0xf]
        %v659 = vld [vmem:[#allocation4 + $0x138] sm:$0xff]
        %v660 = vld [vmem:[#allocation4 + $0x140] sm:$0xf]
        %v661 = vld [vmem:[#allocation4 + $0x144] sm:$0xff]
        %v662 = vld [vmem:[#allocation4 + $0x14c] sm:$0xf]
        %v663 = vld [vmem:[#allocation4 + $0x150] sm:$0xff]
        %v664 = vld [vmem:[#allocation4 + $0x158] sm:$0xf]
        %v665 = vld [vmem:[#allocation4 + $0x15c] sm:$0xff]
        %v666 = vld [vmem:[#allocation4 + $0x164] sm:$0xf]
        %v667 = vld [vmem:[#allocation4 + $0x168] sm:$0xff]
        %v668 = vld [vmem:[#allocation4 + $0x170] sm:$0xf]
        %v669 = vld [vmem:[#allocation4 + $0x174] sm:$0xff]
        %v670 = vld [vmem:[#allocation4 + $0x17c] sm:$0xf]
        %v671 = vld [vmem:[#allocation4 + $0x180] sm:$0xff]
        %v672 = vld [vmem:[#allocation4 + $0x188] sm:$0xf]
        %v673 = vld [vmem:[#allocation4 + $0x18c] sm:$0xff]
        %v674 = vld [vmem:[#allocation4 + $0x194] sm:$0xf]
        %v675 = vld [vmem:[#allocation4 + $0x198] sm:$0xff]
        %v676 = vld [vmem:[#allocation4 + $0x1a0] sm:$0xf]
        %v677 = vld [vmem:[#allocation4 + $0x1a4] sm:$0xff]
        %v678 = vld [vmem:[#allocation4 + $0x1ac] sm:$0xf]
        %v679 = vld [vmem:[#allocation4 + $0x1b0] sm:$0xff]
        %v680 = vld [vmem:[#allocation4 + $0x1b8] sm:$0xf]
        %v681 = vld [vmem:[#allocation4 + $0x1bc] sm:$0xff]
        %v682 = vld [vmem:[#allocation4 + $0x1c4] sm:$0xf]
        %v683 = vld [vmem:[#allocation4 + $0x1c8] sm:$0xff]
        %v684 = vld [vmem:[#allocation4 + $0x1d0] sm:$0xf]
        %v685 = vld [vmem:[#allocation4 + $0x1d4] sm:$0xff]
        %v686 = vld [vmem:[#allocation4 + $0x1dc] sm:$0xf]
        %v687 = vld [vmem:[#allocation4 + $0x1e0] sm:$0xff]
        %v688 = vld [vmem:[#allocation4 + $0x1e8] sm:$0xf]
        %v689 = vld [vmem:[#allocation4 + $0x1ec] sm:$0xff]
        %v690 = vld [vmem:[#allocation4 + $0x1f4] sm:$0xf]
        %v691 = vld [vmem:[#allocation4 + $0x1f8] sm:$0xff]
        %v692 = vld [vmem:[#allocation4 + $0x200] sm:$0xf]
        %v693 = vld [vmem:[#allocation4 + $0x204] sm:$0xff]
        %v694 = vld [vmem:[#allocation4 + $0x20c] sm:$0xf]
        %v695 = vld [vmem:[#allocation4 + $0x210] sm:$0xff]
        %v696 = vld [vmem:[#allocation4 + $0x218] sm:$0xf]
        %v697 = vld [vmem:[#allocation4 + $0x21c] sm:$0xff]
        %v698 = vld [vmem:[#allocation4 + $0x224] sm:$0xf]
        %v699 = vld [vmem:[#allocation4 + $0x228] sm:$0xff]
        %v700 = vld [vmem:[#allocation4 + $0x230] sm:$0xf]
        %v701 = vld [vmem:[#allocation4 + $0x234] sm:$0xff]
        %v702 = vld [vmem:[#allocation4 + $0x23c] sm:$0xf]
        %v703 = vld [vmem:[#allocation4 + $0x240] sm:$0xff]
        %v704 = vld [vmem:[#allocation4 + $0x248] sm:$0xf]
        %v705 = vld [vmem:[#allocation4 + $0x24c] sm:$0xff]
        %v706 = vld [vmem:[#allocation4 + $0x254] sm:$0xf]
        %v707 = vld [vmem:[#allocation4 + $0x258] sm:$0xff]
        %v708 = vld [vmem:[#allocation4 + $0x260] sm:$0xf]
        %v709 = vld [vmem:[#allocation4 + $0x264] sm:$0xff]
        %v710 = vld [vmem:[#allocation4 + $0x26c] sm:$0xf]
        %v711 = vld [vmem:[#allocation4 + $0x270] sm:$0xff]
        %v712 = vld [vmem:[#allocation4 + $0x278] sm:$0xf]
        %v713 = vld [vmem:[#allocation4 + $0x27c] sm:$0xff]
        %v714 = vld [vmem:[#allocation4 + $0x284] sm:$0xf]
        %v715 = vld [vmem:[#allocation4 + $0x288] sm:$0xff]
        %v716 = vld [vmem:[#allocation4 + $0x290] sm:$0xf]
        %v717 = vld [vmem:[#allocation4 + $0x294] sm:$0xff]
        %v718 = vld [vmem:[#allocation4 + $0x29c] sm:$0xf]
        %v719 = vld [vmem:[#allocation4 + $0x2a0] sm:$0xff]
        %v720 = vld [vmem:[#allocation4 + $0x2a8] sm:$0xf]
        %v721 = vld [vmem:[#allocation4 + $0x2ac] sm:$0xff]
        %v722 = vld [vmem:[#allocation4 + $0x2b4] sm:$0xf]
        %v723 = vld [vmem:[#allocation4 + $0x2b8] sm:$0xff]
        %v724 = vld [vmem:[#allocation4 + $0x2c0] sm:$0xf]
        %v725 = vld [vmem:[#allocation4 + $0x2c4] sm:$0xff]
        %v726 = vld [vmem:[#allocation4 + $0x2cc] sm:$0xf]
        %v727 = vld [vmem:[#allocation4 + $0x2d0] sm:$0xff]
        %v728 = vld [vmem:[#allocation4 + $0x2d8] sm:$0xf]
        %v729 = vld [vmem:[#allocation4 + $0x2dc] sm:$0xff]
        %v730 = vld [vmem:[#allocation4 + $0x2e4] sm:$0xf]
        %v731 = vld [vmem:[#allocation4 + $0x2e8] sm:$0xff]
        %v732 = vld [vmem:[#allocation4 + $0x2f0] sm:$0xf]
        %v733 = vld [vmem:[#allocation4 + $0x2f4] sm:$0xff]
        %v734 = vld [vmem:[#allocation4 + $0x2fc] sm:$0xf]
        %v735 = vld [vmem:[#allocation4 + $0x300] sm:$0xff]
        %v736 = vld [vmem:[#allocation4 + $0x308] sm:$0xf]
        %v737 = vld [vmem:[#allocation4 + $0x30c] sm:$0xff]
        %v738 = vld [vmem:[#allocation4 + $0x314] sm:$0xf]
        %v739 = vld [vmem:[#allocation4 + $0x318] sm:$0xff]
        %v740 = vld [vmem:[#allocation4 + $0x320] sm:$0xf]
        %v741 = vld [vmem:[#allocation4 + $0x324] sm:$0xff]
        %v742 = vld [vmem:[#allocation4 + $0x32c] sm:$0xf]
        %v743 = vld [vmem:[#allocation4 + $0x330] sm:$0xff]
        %v744 = vld [vmem:[#allocation4 + $0x338] sm:$0xf]
        %v745 = vld [vmem:[#allocation4 + $0x33c] sm:$0xff]
        %v746 = vld [vmem:[#allocation4 + $0x344] sm:$0xf]
        %v747 = vld [vmem:[#allocation4 + $0x348] sm:$0xff]
        %v748 = vld [vmem:[#allocation4 + $0x350] sm:$0xf]
        %v749 = vld [vmem:[#allocation4 + $0x354] sm:$0xff]
        %v750 = vld [vmem:[#allocation4 + $0x35c] sm:$0xf]
        %v751 = vld [vmem:[#allocation4 + $0x360] sm:$0xff]
        %v752 = vld [vmem:[#allocation4 + $0x368] sm:$0xf]
        %v753 = vld [vmem:[#allocation4 + $0x36c] sm:$0xff]
        %v754 = vld [vmem:[#allocation4 + $0x374] sm:$0xf]
        %v755 = vld [vmem:[#allocation4 + $0x378] sm:$0xff]
        %v756 = vld [vmem:[#allocation4 + $0x380] sm:$0xf]
        %v757 = vld [vmem:[#allocation4 + $0x384] sm:$0xff]
        %v758 = vld [vmem:[#allocation4 + $0x38c] sm:$0xf]
        %v759 = vld [vmem:[#allocation4 + $0x390] sm:$0xff]
        %v760 = vld [vmem:[#allocation4 + $0x398] sm:$0xf]
        %v761 = vld [vmem:[#allocation4 + $0x39c] sm:$0xff]
        %v762 = vld [vmem:[#allocation4 + $0x3a4] sm:$0xf]
        %v763 = vld [vmem:[#allocation4 + $0x3a8] sm:$0xff]
        %v764 = vld [vmem:[#allocation4 + $0x3b0] sm:$0xf]
        %v765 = vld [vmem:[#allocation4 + $0x3b4] sm:$0xff]
        %v766 = vld [vmem:[#allocation4 + $0x3bc] sm:$0xf]
        %v767 = vld [vmem:[#allocation4 + $0x3c0] sm:$0xff]
        %v768 = vld [vmem:[#allocation4 + $0x3c8] sm:$0xf]
        %v769 = vld [vmem:[#allocation4 + $0x3cc] sm:$0xff]
        %v770 = vld [vmem:[#allocation4 + $0x3d4] sm:$0xf]
        %v771 = vld [vmem:[#allocation4 + $0x3d8] sm:$0xff]
        %v772 = vld [vmem:[#allocation4 + $0x3e0] sm:$0xf]
        %v773 = vld [vmem:[#allocation4 + $0x3e4] sm:$0xff]
        %v774 = vld [vmem:[#allocation4 + $0x3ec] sm:$0xf]
        %v775 = vld [vmem:[#allocation4 + $0x3f0] sm:$0xff]
        %v776 = vld [vmem:[#allocation4 + $0x3f8] sm:$0xf]
        %v777 = vld [vmem:[#allocation4 + $0x3fc] sm:$0xff]
        %v778 = vld [vmem:[#allocation4 + $0x404] sm:$0xf]
        %v779 = vld [vmem:[#allocation4 + $0x408] sm:$0xff]
        %v780 = vld [vmem:[#allocation4 + $0x410] sm:$0xf]
        %v781 = vld [vmem:[#allocation4 + $0x414] sm:$0xff]
        %v782 = vld [vmem:[#allocation4 + $0x41c] sm:$0xf]
        %v783 = vld [vmem:[#allocation4 + $0x420] sm:$0xff]
        %v784 = vld [vmem:[#allocation4 + $0x428] sm:$0xf]
        %v785 = vld [vmem:[#allocation4 + $0x42c] sm:$0xff]
        %v786 = vld [vmem:[#allocation4 + $0x434] sm:$0xf]
        %v787 = vld [vmem:[#allocation4 + $0x438] sm:$0xff]
        %v788 = vld [vmem:[#allocation4 + $0x440] sm:$0xf]
        %v789 = vld [vmem:[#allocation4 + $0x444] sm:$0xff]
        %v790 = vld [vmem:[#allocation4 + $0x44c] sm:$0xf]
        %v791 = vld [vmem:[#allocation4 + $0x450] sm:$0xff]
        %v792 = vld [vmem:[#allocation4 + $0x458] sm:$0xf]
        %v793 = vld [vmem:[#allocation4 + $0x45c] sm:$0xff]
        %v794 = vld [vmem:[#allocation4 + $0x464] sm:$0xf]
        %v795 = vld [vmem:[#allocation4 + $0x468] sm:$0xff]
        %v796 = vld [vmem:[#allocation4 + $0x470] sm:$0xf]
        %v797 = vld [vmem:[#allocation4 + $0x474] sm:$0xff]
        %v798 = vld [vmem:[#allocation4 + $0x47c] sm:$0xf]
        %v799 = vld [vmem:[#allocation4 + $0x480] sm:$0xff]
        %v800 = vld [vmem:[#allocation4 + $0x488] sm:$0xf]
        %v801 = vld [vmem:[#allocation4 + $0x48c] sm:$0xff]
        %v802 = vld [vmem:[#allocation4 + $0x494] sm:$0xf]
        %v803 = vld [vmem:[#allocation4 + $0x498] sm:$0xff]
        %v804 = vld [vmem:[#allocation4 + $0x4a0] sm:$0xf]
        %v805 = vld [vmem:[#allocation4 + $0x4a4] sm:$0xff]
        %v806 = vld [vmem:[#allocation4 + $0x4ac] sm:$0xf]
        %v807 = vld [vmem:[#allocation4 + $0x4b0] sm:$0xff]
        %v808 = vld [vmem:[#allocation4 + $0x4b8] sm:$0xf]
        %v809 = vld [vmem:[#allocation4 + $0x4bc] sm:$0xff]
        %v810 = vld [vmem:[#allocation4 + $0x4c4] sm:$0xf]
        %v811 = vld [vmem:[#allocation4 + $0x4c8] sm:$0xff]
        %v812 = vld [vmem:[#allocation4 + $0x4d0] sm:$0xf]
        %v813 = vld [vmem:[#allocation4 + $0x4d4] sm:$0xff]
        %v814 = vld [vmem:[#allocation4 + $0x4dc] sm:$0xf]
        %v815 = vld [vmem:[#allocation4 + $0x4e0] sm:$0xff]
        %v816 = vld [vmem:[#allocation4 + $0x4e8] sm:$0xf]
        %v817 = vld [vmem:[#allocation4 + $0x4ec] sm:$0xff]
        %v818 = vld [vmem:[#allocation4 + $0x4f4] sm:$0xf]
        %v819 = vld [vmem:[#allocation4 + $0x4f8] sm:$0xff]
        %v820 = vld [vmem:[#allocation4 + $0x500] sm:$0xf]
        %v821 = vld [vmem:[#allocation4 + $0x504] sm:$0xff]
        %v822 = vld [vmem:[#allocation4 + $0x50c] sm:$0xf]
        %v823 = vld [vmem:[#allocation4 + $0x510] sm:$0xff]
        %v824 = vld [vmem:[#allocation4 + $0x518] sm:$0xf]
        %v825 = vld [vmem:[#allocation4 + $0x51c] sm:$0xff]
        %v826 = vld [vmem:[#allocation4 + $0x524] sm:$0xf]
        %v827 = vld [vmem:[#allocation4 + $0x528] sm:$0xff]
        %v828 = vld [vmem:[#allocation4 + $0x530] sm:$0xf]
        %v829 = vld [vmem:[#allocation4 + $0x534] sm:$0xff]
        %v830 = vld [vmem:[#allocation4 + $0x53c] sm:$0xf]
        %v831 = vld [vmem:[#allocation4 + $0x540] sm:$0xff]
        %v832 = vld [vmem:[#allocation4 + $0x548] sm:$0xf]
        %v833 = vld [vmem:[#allocation4 + $0x54c] sm:$0xff]
        %v834 = vld [vmem:[#allocation4 + $0x554] sm:$0xf]
        %v835 = vld [vmem:[#allocation4 + $0x558] sm:$0xff]
        %v836 = vld [vmem:[#allocation4 + $0x560] sm:$0xf]
        %v837 = vld [vmem:[#allocation4 + $0x564] sm:$0xff]
        %v838 = vld [vmem:[#allocation4 + $0x56c] sm:$0xf]
        %v839 = vld [vmem:[#allocation4 + $0x570] sm:$0xff]
        %v840 = vld [vmem:[#allocation4 + $0x578] sm:$0xf]
        %v841 = vld [vmem:[#allocation4 + $0x57c] sm:$0xff]
        %v842 = vld [vmem:[#allocation4 + $0x584] sm:$0xf]
        %v843 = vld [vmem:[#allocation4 + $0x588] sm:$0xff]
        %v844 = vld [vmem:[#allocation4 + $0x590] sm:$0xf]
        %v845 = vld [vmem:[#allocation4 + $0x594] sm:$0xff]
        %v846 = vld [vmem:[#allocation4 + $0x59c] sm:$0xf]
        %v847 = vld [vmem:[#allocation4 + $0x5a0] sm:$0xff]
        %v848 = vld [vmem:[#allocation4 + $0x5a8] sm:$0xf]
        %v849 = vld [vmem:[#allocation4 + $0x5ac] sm:$0xff]
        %v850 = vld [vmem:[#allocation4 + $0x5b4] sm:$0xf]
        %v851 = vld [vmem:[#allocation4 + $0x5b8] sm:$0xff]
        %v852 = vld [vmem:[#allocation4 + $0x5c0] sm:$0xf]
        %v853 = vld [vmem:[#allocation4 + $0x5c4] sm:$0xff]
        %v854 = vld [vmem:[#allocation4 + $0x5cc] sm:$0xf]
        %v855 = vld [vmem:[#allocation4 + $0x5d0] sm:$0xff]
        %v856 = vld [vmem:[#allocation4 + $0x5d8] sm:$0xf]
        %v857 = vld [vmem:[#allocation4 + $0x5dc] sm:$0xff]
        %v858 = vld [vmem:[#allocation4 + $0x5e4] sm:$0xf]
        %v859 = vld [vmem:[#allocation4 + $0x5e8] sm:$0xff]
        %v860 = vld [vmem:[#allocation4 + $0x5f0] sm:$0xf]
        %v861 = vld [vmem:[#allocation4 + $0x5f4] sm:$0xff]
        %v862 = vld [vmem:[#allocation4 + $0x5fc] sm:$0xf]
        %v863 = vld [vmem:[%s2] sm:$0x7]
        %v865 = vlaneseq
        %v866 = vshrl.u32 %v865, 7
        %v867 = vsub.s32 0, %v866
        %v868 = vrot.slane %v863, %v867
        %v869 = vlaneseq
        %v870 = vshrl.u32 %v869, 7
        %v871 = vsub.s32 1, %v870
        %v872 = vrot.slane %v863, %v871
        %v873 = vlaneseq
        %v874 = vshrl.u32 %v873, 7
        %v875 = vsub.s32 2, %v874
        %v876 = vrot.slane %v863, %v875
        %v1136 = vunpack.c.l.b16 %v607
        %v1137 = vunpack.c.h.b16 %v607
        %v1138 = vunpack.c.l.b16 %v608
        %v1139 = vunpack.c.l.b16 %v609
        %v1140 = vunpack.c.h.b16 %v609
        %v1141 = vunpack.c.l.b16 %v610
        %v1142 = vunpack.c.l.b16 %v611
        %v1143 = vunpack.c.h.b16 %v611
        %v1144 = vunpack.c.l.b16 %v612
        %v1145 = vunpack.c.l.b16 %v613
        %v1146 = vunpack.c.h.b16 %v613
        %v1147 = vunpack.c.l.b16 %v614
        %v1148 = vunpack.c.l.b16 %v615
        %v1149 = vunpack.c.h.b16 %v615
        %v1150 = vunpack.c.l.b16 %v616
        %v1151 = vunpack.c.l.b16 %v617
        %v1152 = vunpack.c.h.b16 %v617
        %v1153 = vunpack.c.l.b16 %v618
        %v1154 = vunpack.c.l.b16 %v619
        %v1155 = vunpack.c.h.b16 %v619
        %v1156 = vunpack.c.l.b16 %v620
        %v1157 = vunpack.c.l.b16 %v621
        %v1158 = vunpack.c.h.b16 %v621
        %v1159 = vunpack.c.l.b16 %v622
        %v1160 = vunpack.c.l.b16 %v623
        %v1161 = vunpack.c.h.b16 %v623
        %v1162 = vunpack.c.l.b16 %v624
        %v1163 = vunpack.c.l.b16 %v625
        %v1164 = vunpack.c.h.b16 %v625
        %v1165 = vunpack.c.l.b16 %v626
        %v1166 = vunpack.c.l.b16 %v627
        %v1167 = vunpack.c.h.b16 %v627
        %v1168 = vunpack.c.l.b16 %v628
        %v1169 = vunpack.c.l.b16 %v629
        %v1170 = vunpack.c.h.b16 %v629
        %v1171 = vunpack.c.l.b16 %v630
        %v1172 = vunpack.c.l.b16 %v631
        %v1173 = vunpack.c.h.b16 %v631
        %v1174 = vunpack.c.l.b16 %v632
        %v1175 = vunpack.c.l.b16 %v633
        %v1176 = vunpack.c.h.b16 %v633
        %v1177 = vunpack.c.l.b16 %v634
        %v1178 = vunpack.c.l.b16 %v635
        %v1179 = vunpack.c.h.b16 %v635
        %v1180 = vunpack.c.l.b16 %v636
        %v1181 = vunpack.c.l.b16 %v637
        %v1182 = vunpack.c.h.b16 %v637
        %v1183 = vunpack.c.l.b16 %v638
        %v1184 = vunpack.c.l.b16 %v639
        %v1185 = vunpack.c.h.b16 %v639
        %v1186 = vunpack.c.l.b16 %v640
        %v1187 = vunpack.c.l.b16 %v641
        %v1188 = vunpack.c.h.b16 %v641
        %v1189 = vunpack.c.l.b16 %v642
        %v1190 = vunpack.c.l.b16 %v643
        %v1191 = vunpack.c.h.b16 %v643
        %v1192 = vunpack.c.l.b16 %v644
        %v1193 = vunpack.c.l.b16 %v645
        %v1194 = vunpack.c.h.b16 %v645
        %v1195 = vunpack.c.l.b16 %v646
        %v1196 = vunpack.c.l.b16 %v647
        %v1197 = vunpack.c.h.b16 %v647
        %v1198 = vunpack.c.l.b16 %v648
        %v1199 = vunpack.c.l.b16 %v649
        %v1200 = vunpack.c.h.b16 %v649
        %v1201 = vunpack.c.l.b16 %v650
        %v1202 = vunpack.c.l.b16 %v651
        %v1203 = vunpack.c.h.b16 %v651
        %v1204 = vunpack.c.l.b16 %v652
        %v1205 = vunpack.c.l.b16 %v653
        %v1206 = vunpack.c.h.b16 %v653
        %v1207 = vunpack.c.l.b16 %v654
        %v1208 = vunpack.c.l.b16 %v655
        %v1209 = vunpack.c.h.b16 %v655
        %v1210 = vunpack.c.l.b16 %v656
        %v1211 = vunpack.c.l.b16 %v657
        %v1212 = vunpack.c.h.b16 %v657
        %v1213 = vunpack.c.l.b16 %v658
        %v1214 = vunpack.c.l.b16 %v659
        %v1215 = vunpack.c.h.b16 %v659
        %v1216 = vunpack.c.l.b16 %v660
        %v1217 = vunpack.c.l.b16 %v661
        %v1218 = vunpack.c.h.b16 %v661
        %v1219 = vunpack.c.l.b16 %v662
        %v1220 = vunpack.c.l.b16 %v663
        %v1221 = vunpack.c.h.b16 %v663
        %v1222 = vunpack.c.l.b16 %v664
        %v1223 = vunpack.c.l.b16 %v665
        %v1224 = vunpack.c.h.b16 %v665
        %v1225 = vunpack.c.l.b16 %v666
        %v1226 = vunpack.c.l.b16 %v667
        %v1227 = vunpack.c.h.b16 %v667
        %v1228 = vunpack.c.l.b16 %v668
        %v1229 = vunpack.c.l.b16 %v669
        %v1230 = vunpack.c.h.b16 %v669
        %v1231 = vunpack.c.l.b16 %v670
        %v1232 = vunpack.c.l.b16 %v671
        %v1233 = vunpack.c.h.b16 %v671
        %v1234 = vunpack.c.l.b16 %v672
        %v1235 = vunpack.c.l.b16 %v673
        %v1236 = vunpack.c.h.b16 %v673
        %v1237 = vunpack.c.l.b16 %v674
        %v1238 = vunpack.c.l.b16 %v675
        %v1239 = vunpack.c.h.b16 %v675
        %v1240 = vunpack.c.l.b16 %v676
        %v1241 = vunpack.c.l.b16 %v677
        %v1242 = vunpack.c.h.b16 %v677
        %v1243 = vunpack.c.l.b16 %v678
        %v1244 = vunpack.c.l.b16 %v679
        %v1245 = vunpack.c.h.b16 %v679
        %v1246 = vunpack.c.l.b16 %v680
        %v1247 = vunpack.c.l.b16 %v681
        %v1248 = vunpack.c.h.b16 %v681
        %v1249 = vunpack.c.l.b16 %v682
        %v1250 = vunpack.c.l.b16 %v683
        %v1251 = vunpack.c.h.b16 %v683
        %v1252 = vunpack.c.l.b16 %v684
        %v1253 = vunpack.c.l.b16 %v685
        %v1254 = vunpack.c.h.b16 %v685
        %v1255 = vunpack.c.l.b16 %v686
        %v1256 = vunpack.c.l.b16 %v687
        %v1257 = vunpack.c.h.b16 %v687
        %v1258 = vunpack.c.l.b16 %v688
        %v1259 = vunpack.c.l.b16 %v689
        %v1260 = vunpack.c.h.b16 %v689
        %v1261 = vunpack.c.l.b16 %v690
        %v1262 = vunpack.c.l.b16 %v691
        %v1263 = vunpack.c.h.b16 %v691
        %v1264 = vunpack.c.l.b16 %v692
        %v1265 = vunpack.c.l.b16 %v693
        %v1266 = vunpack.c.h.b16 %v693
        %v1267 = vunpack.c.l.b16 %v694
        %v1268 = vunpack.c.l.b16 %v695
        %v1269 = vunpack.c.h.b16 %v695
        %v1270 = vunpack.c.l.b16 %v696
        %v1271 = vunpack.c.l.b16 %v697
        %v1272 = vunpack.c.h.b16 %v697
        %v1273 = vunpack.c.l.b16 %v698
        %v1274 = vunpack.c.l.b16 %v699
        %v1275 = vunpack.c.h.b16 %v699
        %v1276 = vunpack.c.l.b16 %v700
        %v1277 = vunpack.c.l.b16 %v701
        %v1278 = vunpack.c.h.b16 %v701
        %v1279 = vunpack.c.l.b16 %v702
        %v1280 = vunpack.c.l.b16 %v703
        %v1281 = vunpack.c.h.b16 %v703
        %v1282 = vunpack.c.l.b16 %v704
        %v1283 = vunpack.c.l.b16 %v705
        %v1284 = vunpack.c.h.b16 %v705
        %v1285 = vunpack.c.l.b16 %v706
        %v1286 = vunpack.c.l.b16 %v707
        %v1287 = vunpack.c.h.b16 %v707
        %v1288 = vunpack.c.l.b16 %v708
        %v1289 = vunpack.c.l.b16 %v709
        %v1290 = vunpack.c.h.b16 %v709
        %v1291 = vunpack.c.l.b16 %v710
        %v1292 = vunpack.c.l.b16 %v711
        %v1293 = vunpack.c.h.b16 %v711
        %v1294 = vunpack.c.l.b16 %v712
        %v1295 = vunpack.c.l.b16 %v713
        %v1296 = vunpack.c.h.b16 %v713
        %v1297 = vunpack.c.l.b16 %v714
        %v1298 = vunpack.c.l.b16 %v715
        %v1299 = vunpack.c.h.b16 %v715
        %v1300 = vunpack.c.l.b16 %v716
        %v1301 = vunpack.c.l.b16 %v717
        %v1302 = vunpack.c.h.b16 %v717
        %v1303 = vunpack.c.l.b16 %v718
        %v1304 = vunpack.c.l.b16 %v719
        %v1305 = vunpack.c.h.b16 %v719
        %v1306 = vunpack.c.l.b16 %v720
        %v1307 = vunpack.c.l.b16 %v721
        %v1308 = vunpack.c.h.b16 %v721
        %v1309 = vunpack.c.l.b16 %v722
        %v1310 = vunpack.c.l.b16 %v723
        %v1311 = vunpack.c.h.b16 %v723
        %v1312 = vunpack.c.l.b16 %v724
        %v1313 = vunpack.c.l.b16 %v725
        %v1314 = vunpack.c.h.b16 %v725
        %v1315 = vunpack.c.l.b16 %v726
        %v1316 = vunpack.c.l.b16 %v727
        %v1317 = vunpack.c.h.b16 %v727
        %v1318 = vunpack.c.l.b16 %v728
        %v1319 = vunpack.c.l.b16 %v729
        %v1320 = vunpack.c.h.b16 %v729
        %v1321 = vunpack.c.l.b16 %v730
        %v1322 = vunpack.c.l.b16 %v731
        %v1323 = vunpack.c.h.b16 %v731
        %v1324 = vunpack.c.l.b16 %v732
        %v1325 = vunpack.c.l.b16 %v733
        %v1326 = vunpack.c.h.b16 %v733
        %v1327 = vunpack.c.l.b16 %v734
        %v1328 = vunpack.c.l.b16 %v735
        %v1329 = vunpack.c.h.b16 %v735
        %v1330 = vunpack.c.l.b16 %v736
        %v1331 = vunpack.c.l.b16 %v737
        %v1332 = vunpack.c.h.b16 %v737
        %v1333 = vunpack.c.l.b16 %v738
        %v1334 = vunpack.c.l.b16 %v739
        %v1335 = vunpack.c.h.b16 %v739
        %v1336 = vunpack.c.l.b16 %v740
        %v1337 = vunpack.c.l.b16 %v741
        %v1338 = vunpack.c.h.b16 %v741
        %v1339 = vunpack.c.l.b16 %v742
        %v1340 = vunpack.c.l.b16 %v743
        %v1341 = vunpack.c.h.b16 %v743
        %v1342 = vunpack.c.l.b16 %v744
        %v1343 = vunpack.c.l.b16 %v745
        %v1344 = vunpack.c.h.b16 %v745
        %v1345 = vunpack.c.l.b16 %v746
        %v1346 = vunpack.c.l.b16 %v747
        %v1347 = vunpack.c.h.b16 %v747
        %v1348 = vunpack.c.l.b16 %v748
        %v1349 = vunpack.c.l.b16 %v749
        %v1350 = vunpack.c.h.b16 %v749
        %v1351 = vunpack.c.l.b16 %v750
        %v1352 = vunpack.c.l.b16 %v751
        %v1353 = vunpack.c.h.b16 %v751
        %v1354 = vunpack.c.l.b16 %v752
        %v1355 = vunpack.c.l.b16 %v753
        %v1356 = vunpack.c.h.b16 %v753
        %v1357 = vunpack.c.l.b16 %v754
        %v1358 = vunpack.c.l.b16 %v755
        %v1359 = vunpack.c.h.b16 %v755
        %v1360 = vunpack.c.l.b16 %v756
        %v1361 = vunpack.c.l.b16 %v757
        %v1362 = vunpack.c.h.b16 %v757
        %v1363 = vunpack.c.l.b16 %v758
        %v1364 = vunpack.c.l.b16 %v759
        %v1365 = vunpack.c.h.b16 %v759
        %v1366 = vunpack.c.l.b16 %v760
        %v1367 = vunpack.c.l.b16 %v761
        %v1368 = vunpack.c.h.b16 %v761
        %v1369 = vunpack.c.l.b16 %v762
        %v1370 = vunpack.c.l.b16 %v763
        %v1371 = vunpack.c.h.b16 %v763
        %v1372 = vunpack.c.l.b16 %v764
        %v1373 = vunpack.c.l.b16 %v765
        %v1374 = vunpack.c.h.b16 %v765
        %v1375 = vunpack.c.l.b16 %v766
        %v1376 = vunpack.c.l.b16 %v767
        %v1377 = vunpack.c.h.b16 %v767
        %v1378 = vunpack.c.l.b16 %v768
        %v1379 = vunpack.c.l.b16 %v769
        %v1380 = vunpack.c.h.b16 %v769
        %v1381 = vunpack.c.l.b16 %v770
        %v1382 = vunpack.c.l.b16 %v771
        %v1383 = vunpack.c.h.b16 %v771
        %v1384 = vunpack.c.l.b16 %v772
        %v1385 = vunpack.c.l.b16 %v773
        %v1386 = vunpack.c.h.b16 %v773
        %v1387 = vunpack.c.l.b16 %v774
        %v1388 = vunpack.c.l.b16 %v775
        %v1389 = vunpack.c.h.b16 %v775
        %v1390 = vunpack.c.l.b16 %v776
        %v1391 = vunpack.c.l.b16 %v777
        %v1392 = vunpack.c.h.b16 %v777
        %v1393 = vunpack.c.l.b16 %v778
        %v1394 = vunpack.c.l.b16 %v779
        %v1395 = vunpack.c.h.b16 %v779
        %v1396 = vunpack.c.l.b16 %v780
        %v1397 = vunpack.c.l.b16 %v781
        %v1398 = vunpack.c.h.b16 %v781
        %v1399 = vunpack.c.l.b16 %v782
        %v1400 = vunpack.c.l.b16 %v783
        %v1401 = vunpack.c.h.b16 %v783
        %v1402 = vunpack.c.l.b16 %v784
        %v1403 = vunpack.c.l.b16 %v785
        %v1404 = vunpack.c.h.b16 %v785
        %v1405 = vunpack.c.l.b16 %v786
        %v1406 = vunpack.c.l.b16 %v787
        %v1407 = vunpack.c.h.b16 %v787
        %v1408 = vunpack.c.l.b16 %v788
        %v1409 = vunpack.c.l.b16 %v789
        %v1410 = vunpack.c.h.b16 %v789
        %v1411 = vunpack.c.l.b16 %v790
        %v1412 = vunpack.c.l.b16 %v791
        %v1413 = vunpack.c.h.b16 %v791
        %v1414 = vunpack.c.l.b16 %v792
        %v1415 = vunpack.c.l.b16 %v793
        %v1416 = vunpack.c.h.b16 %v793
        %v1417 = vunpack.c.l.b16 %v794
        %v1418 = vunpack.c.l.b16 %v795
        %v1419 = vunpack.c.h.b16 %v795
        %v1420 = vunpack.c.l.b16 %v796
        %v1421 = vunpack.c.l.b16 %v797
        %v1422 = vunpack.c.h.b16 %v797
        %v1423 = vunpack.c.l.b16 %v798
        %v1424 = vunpack.c.l.b16 %v799
        %v1425 = vunpack.c.h.b16 %v799
        %v1426 = vunpack.c.l.b16 %v800
        %v1427 = vunpack.c.l.b16 %v801
        %v1428 = vunpack.c.h.b16 %v801
        %v1429 = vunpack.c.l.b16 %v802
        %v1430 = vunpack.c.l.b16 %v803
        %v1431 = vunpack.c.h.b16 %v803
        %v1432 = vunpack.c.l.b16 %v804
        %v1433 = vunpack.c.l.b16 %v805
        %v1434 = vunpack.c.h.b16 %v805
        %v1435 = vunpack.c.l.b16 %v806
        %v1436 = vunpack.c.l.b16 %v807
        %v1437 = vunpack.c.h.b16 %v807
        %v1438 = vunpack.c.l.b16 %v808
        %v1439 = vunpack.c.l.b16 %v809
        %v1440 = vunpack.c.h.b16 %v809
        %v1441 = vunpack.c.l.b16 %v810
        %v1442 = vunpack.c.l.b16 %v811
        %v1443 = vunpack.c.h.b16 %v811
        %v1444 = vunpack.c.l.b16 %v812
        %v1445 = vunpack.c.l.b16 %v813
        %v1446 = vunpack.c.h.b16 %v813
        %v1447 = vunpack.c.l.b16 %v814
        %v1448 = vunpack.c.l.b16 %v815
        %v1449 = vunpack.c.h.b16 %v815
        %v1450 = vunpack.c.l.b16 %v816
        %v1451 = vunpack.c.l.b16 %v817
        %v1452 = vunpack.c.h.b16 %v817
        %v1453 = vunpack.c.l.b16 %v818
        %v1454 = vunpack.c.l.b16 %v819
        %v1455 = vunpack.c.h.b16 %v819
        %v1456 = vunpack.c.l.b16 %v820
        %v1457 = vunpack.c.l.b16 %v821
        %v1458 = vunpack.c.h.b16 %v821
        %v1459 = vunpack.c.l.b16 %v822
        %v1460 = vunpack.c.l.b16 %v823
        %v1461 = vunpack.c.h.b16 %v823
        %v1462 = vunpack.c.l.b16 %v824
        %v1463 = vunpack.c.l.b16 %v825
        %v1464 = vunpack.c.h.b16 %v825
        %v1465 = vunpack.c.l.b16 %v826
        %v1466 = vunpack.c.l.b16 %v827
        %v1467 = vunpack.c.h.b16 %v827
        %v1468 = vunpack.c.l.b16 %v828
        %v1469 = vunpack.c.l.b16 %v829
        %v1470 = vunpack.c.h.b16 %v829
        %v1471 = vunpack.c.l.b16 %v830
        %v1472 = vunpack.c.l.b16 %v831
        %v1473 = vunpack.c.h.b16 %v831
        %v1474 = vunpack.c.l.b16 %v832
        %v1475 = vunpack.c.l.b16 %v833
        %v1476 = vunpack.c.h.b16 %v833
        %v1477 = vunpack.c.l.b16 %v834
        %v1478 = vunpack.c.l.b16 %v835
        %v1479 = vunpack.c.h.b16 %v835
        %v1480 = vunpack.c.l.b16 %v836
        %v1481 = vunpack.c.l.b16 %v837
        %v1482 = vunpack.c.h.b16 %v837
        %v1483 = vunpack.c.l.b16 %v838
        %v1484 = vunpack.c.l.b16 %v839
        %v1485 = vunpack.c.h.b16 %v839
        %v1486 = vunpack.c.l.b16 %v840
        %v1487 = vunpack.c.l.b16 %v841
        %v1488 = vunpack.c.h.b16 %v841
        %v1489 = vunpack.c.l.b16 %v842
        %v1490 = vunpack.c.l.b16 %v843
        %v1491 = vunpack.c.h.b16 %v843
        %v1492 = vunpack.c.l.b16 %v844
        %v1493 = vunpack.c.l.b16 %v845
        %v1494 = vunpack.c.h.b16 %v845
        %v1495 = vunpack.c.l.b16 %v846
        %v1496 = vunpack.c.l.b16 %v847
        %v1497 = vunpack.c.h.b16 %v847
        %v1498 = vunpack.c.l.b16 %v848
        %v1499 = vunpack.c.l.b16 %v849
        %v1500 = vunpack.c.h.b16 %v849
        %v1501 = vunpack.c.l.b16 %v850
        %v1502 = vunpack.c.l.b16 %v851
        %v1503 = vunpack.c.h.b16 %v851
        %v1504 = vunpack.c.l.b16 %v852
        %v1505 = vunpack.c.l.b16 %v853
        %v1506 = vunpack.c.h.b16 %v853
        %v1507 = vunpack.c.l.b16 %v854
        %v1508 = vunpack.c.l.b16 %v855
        %v1509 = vunpack.c.h.b16 %v855
        %v1510 = vunpack.c.l.b16 %v856
        %v1511 = vunpack.c.l.b16 %v857
        %v1512 = vunpack.c.h.b16 %v857
        %v1513 = vunpack.c.l.b16 %v858
        %v1514 = vunpack.c.l.b16 %v859
        %v1515 = vunpack.c.h.b16 %v859
        %v1516 = vunpack.c.l.b16 %v860
        %v1517 = vunpack.c.l.b16 %v861
        %v1518 = vunpack.c.h.b16 %v861
        %v1519 = vunpack.c.l.b16 %v862
        %v1520 = vpack.c.b16 %v1139, %v1136
        %v1521 = vpack.c.b16 %v1140, %v1137
        %v1522 = vpack.c.b16 %v1141, %v1138
        %v1523 = vpack.c.b16 %v1145, %v1142
        %v1524 = vpack.c.b16 %v1146, %v1143
        %v1525 = vpack.c.b16 %v1147, %v1144
        %v1526 = vpack.c.b16 %v1151, %v1148
        %v1527 = vpack.c.b16 %v1152, %v1149
        %v1528 = vpack.c.b16 %v1153, %v1150
        %v1529 = vpack.c.b16 %v1157, %v1154
        %v1530 = vpack.c.b16 %v1158, %v1155
        %v1531 = vpack.c.b16 %v1159, %v1156
        %v1532 = vpack.c.b16 %v1163, %v1160
        %v1533 = vpack.c.b16 %v1164, %v1161
        %v1534 = vpack.c.b16 %v1165, %v1162
        %v1535 = vpack.c.b16 %v1169, %v1166
        %v1536 = vpack.c.b16 %v1170, %v1167
        %v1537 = vpack.c.b16 %v1171, %v1168
        %v1538 = vpack.c.b16 %v1175, %v1172
        %v1539 = vpack.c.b16 %v1176, %v1173
        %v1540 = vpack.c.b16 %v1177, %v1174
        %v1541 = vpack.c.b16 %v1181, %v1178
        %v1542 = vpack.c.b16 %v1182, %v1179
        %v1543 = vpack.c.b16 %v1183, %v1180
        %v1544 = vpack.c.b16 %v1187, %v1184
        %v1545 = vpack.c.b16 %v1188, %v1185
        %v1546 = vpack.c.b16 %v1189, %v1186
        %v1547 = vpack.c.b16 %v1193, %v1190
        %v1548 = vpack.c.b16 %v1194, %v1191
        %v1549 = vpack.c.b16 %v1195, %v1192
        %v1550 = vpack.c.b16 %v1199, %v1196
        %v1551 = vpack.c.b16 %v1200, %v1197
        %v1552 = vpack.c.b16 %v1201, %v1198
        %v1553 = vpack.c.b16 %v1205, %v1202
        %v1554 = vpack.c.b16 %v1206, %v1203
        %v1555 = vpack.c.b16 %v1207, %v1204
        %v1556 = vpack.c.b16 %v1211, %v1208
        %v1557 = vpack.c.b16 %v1212, %v1209
        %v1558 = vpack.c.b16 %v1213, %v1210
        %v1559 = vpack.c.b16 %v1217, %v1214
        %v1560 = vpack.c.b16 %v1218, %v1215
        %v1561 = vpack.c.b16 %v1219, %v1216
        %v1562 = vpack.c.b16 %v1223, %v1220
        %v1563 = vpack.c.b16 %v1224, %v1221
        %v1564 = vpack.c.b16 %v1225, %v1222
        %v1565 = vpack.c.b16 %v1229, %v1226
        %v1566 = vpack.c.b16 %v1230, %v1227
        %v1567 = vpack.c.b16 %v1231, %v1228
        %v1568 = vpack.c.b16 %v1235, %v1232
        %v1569 = vpack.c.b16 %v1236, %v1233
        %v1570 = vpack.c.b16 %v1237, %v1234
        %v1571 = vpack.c.b16 %v1241, %v1238
        %v1572 = vpack.c.b16 %v1242, %v1239
        %v1573 = vpack.c.b16 %v1243, %v1240
        %v1574 = vpack.c.b16 %v1247, %v1244
        %v1575 = vpack.c.b16 %v1248, %v1245
        %v1576 = vpack.c.b16 %v1249, %v1246
        %v1577 = vpack.c.b16 %v1253, %v1250
        %v1578 = vpack.c.b16 %v1254, %v1251
        %v1579 = vpack.c.b16 %v1255, %v1252
        %v1580 = vpack.c.b16 %v1259, %v1256
        %v1581 = vpack.c.b16 %v1260, %v1257
        %v1582 = vpack.c.b16 %v1261, %v1258
        %v1583 = vpack.c.b16 %v1265, %v1262
        %v1584 = vpack.c.b16 %v1266, %v1263
        %v1585 = vpack.c.b16 %v1267, %v1264
        %v1586 = vpack.c.b16 %v1271, %v1268
        %v1587 = vpack.c.b16 %v1272, %v1269
        %v1588 = vpack.c.b16 %v1273, %v1270
        %v1589 = vpack.c.b16 %v1277, %v1274
        %v1590 = vpack.c.b16 %v1278, %v1275
        %v1591 = vpack.c.b16 %v1279, %v1276
        %v1592 = vpack.c.b16 %v1283, %v1280
        %v1593 = vpack.c.b16 %v1284, %v1281
        %v1594 = vpack.c.b16 %v1285, %v1282
        %v1595 = vpack.c.b16 %v1289, %v1286
        %v1596 = vpack.c.b16 %v1290, %v1287
        %v1597 = vpack.c.b16 %v1291, %v1288
        %v1598 = vpack.c.b16 %v1295, %v1292
        %v1599 = vpack.c.b16 %v1296, %v1293
        %v1600 = vpack.c.b16 %v1297, %v1294
        %v1601 = vpack.c.b16 %v1301, %v1298
        %v1602 = vpack.c.b16 %v1302, %v1299
        %v1603 = vpack.c.b16 %v1303, %v1300
        %v1604 = vpack.c.b16 %v1307, %v1304
        %v1605 = vpack.c.b16 %v1308, %v1305
        %v1606 = vpack.c.b16 %v1309, %v1306
        %v1607 = vpack.c.b16 %v1313, %v1310
        %v1608 = vpack.c.b16 %v1314, %v1311
        %v1609 = vpack.c.b16 %v1315, %v1312
        %v1610 = vpack.c.b16 %v1319, %v1316
        %v1611 = vpack.c.b16 %v1320, %v1317
        %v1612 = vpack.c.b16 %v1321, %v1318
        %v1613 = vpack.c.b16 %v1325, %v1322
        %v1614 = vpack.c.b16 %v1326, %v1323
        %v1615 = vpack.c.b16 %v1327, %v1324
        %v1616 = vpack.c.b16 %v1331, %v1328
        %v1617 = vpack.c.b16 %v1332, %v1329
        %v1618 = vpack.c.b16 %v1333, %v1330
        %v1619 = vpack.c.b16 %v1337, %v1334
        %v1620 = vpack.c.b16 %v1338, %v1335
        %v1621 = vpack.c.b16 %v1339, %v1336
        %v1622 = vpack.c.b16 %v1343, %v1340
        %v1623 = vpack.c.b16 %v1344, %v1341
        %v1624 = vpack.c.b16 %v1345, %v1342
        %v1625 = vpack.c.b16 %v1349, %v1346
        %v1626 = vpack.c.b16 %v1350, %v1347
        %v1627 = vpack.c.b16 %v1351, %v1348
        %v1628 = vpack.c.b16 %v1355, %v1352
        %v1629 = vpack.c.b16 %v1356, %v1353
        %v1630 = vpack.c.b16 %v1357, %v1354
        %v1631 = vpack.c.b16 %v1361, %v1358
        %v1632 = vpack.c.b16 %v1362, %v1359
        %v1633 = vpack.c.b16 %v1363, %v1360
        %v1634 = vpack.c.b16 %v1367, %v1364
        %v1635 = vpack.c.b16 %v1368, %v1365
        %v1636 = vpack.c.b16 %v1369, %v1366
        %v1637 = vpack.c.b16 %v1373, %v1370
        %v1638 = vpack.c.b16 %v1374, %v1371
        %v1639 = vpack.c.b16 %v1375, %v1372
        %v1640 = vpack.c.b16 %v1379, %v1376
        %v1641 = vpack.c.b16 %v1380, %v1377
        %v1642 = vpack.c.b16 %v1381, %v1378
        %v1643 = vpack.c.b16 %v1385, %v1382
        %v1644 = vpack.c.b16 %v1386, %v1383
        %v1645 = vpack.c.b16 %v1387, %v1384
        %v1646 = vpack.c.b16 %v1391, %v1388
        %v1647 = vpack.c.b16 %v1392, %v1389
        %v1648 = vpack.c.b16 %v1393, %v1390
        %v1649 = vpack.c.b16 %v1397, %v1394
        %v1650 = vpack.c.b16 %v1398, %v1395
        %v1651 = vpack.c.b16 %v1399, %v1396
        %v1652 = vpack.c.b16 %v1403, %v1400
        %v1653 = vpack.c.b16 %v1404, %v1401
        %v1654 = vpack.c.b16 %v1405, %v1402
        %v1655 = vpack.c.b16 %v1409, %v1406
        %v1656 = vpack.c.b16 %v1410, %v1407
        %v1657 = vpack.c.b16 %v1411, %v1408
        %v1658 = vpack.c.b16 %v1415, %v1412
        %v1659 = vpack.c.b16 %v1416, %v1413
        %v1660 = vpack.c.b16 %v1417, %v1414
        %v1661 = vpack.c.b16 %v1421, %v1418
        %v1662 = vpack.c.b16 %v1422, %v1419
        %v1663 = vpack.c.b16 %v1423, %v1420
        %v1664 = vpack.c.b16 %v1427, %v1424
        %v1665 = vpack.c.b16 %v1428, %v1425
        %v1666 = vpack.c.b16 %v1429, %v1426
        %v1667 = vpack.c.b16 %v1433, %v1430
        %v1668 = vpack.c.b16 %v1434, %v1431
        %v1669 = vpack.c.b16 %v1435, %v1432
        %v1670 = vpack.c.b16 %v1439, %v1436
        %v1671 = vpack.c.b16 %v1440, %v1437
        %v1672 = vpack.c.b16 %v1441, %v1438
        %v1673 = vpack.c.b16 %v1445, %v1442
        %v1674 = vpack.c.b16 %v1446, %v1443
        %v1675 = vpack.c.b16 %v1447, %v1444
        %v1676 = vpack.c.b16 %v1451, %v1448
        %v1677 = vpack.c.b16 %v1452, %v1449
        %v1678 = vpack.c.b16 %v1453, %v1450
        %v1679 = vpack.c.b16 %v1457, %v1454
        %v1680 = vpack.c.b16 %v1458, %v1455
        %v1681 = vpack.c.b16 %v1459, %v1456
        %v1682 = vpack.c.b16 %v1463, %v1460
        %v1683 = vpack.c.b16 %v1464, %v1461
        %v1684 = vpack.c.b16 %v1465, %v1462
        %v1685 = vpack.c.b16 %v1469, %v1466
        %v1686 = vpack.c.b16 %v1470, %v1467
        %v1687 = vpack.c.b16 %v1471, %v1468
        %v1688 = vpack.c.b16 %v1475, %v1472
        %v1689 = vpack.c.b16 %v1476, %v1473
        %v1690 = vpack.c.b16 %v1477, %v1474
        %v1691 = vpack.c.b16 %v1481, %v1478
        %v1692 = vpack.c.b16 %v1482, %v1479
        %v1693 = vpack.c.b16 %v1483, %v1480
        %v1694 = vpack.c.b16 %v1487, %v1484
        %v1695 = vpack.c.b16 %v1488, %v1485
        %v1696 = vpack.c.b16 %v1489, %v1486
        %v1697 = vpack.c.b16 %v1493, %v1490
        %v1698 = vpack.c.b16 %v1494, %v1491
        %v1699 = vpack.c.b16 %v1495, %v1492
        %v1700 = vpack.c.b16 %v1499, %v1496
        %v1701 = vpack.c.b16 %v1500, %v1497
        %v1702 = vpack.c.b16 %v1501, %v1498
        %v1703 = vpack.c.b16 %v1505, %v1502
        %v1704 = vpack.c.b16 %v1506, %v1503
        %v1705 = vpack.c.b16 %v1507, %v1504
        %v1706 = vpack.c.b16 %v1511, %v1508
        %v1707 = vpack.c.b16 %v1512, %v1509
        %v1708 = vpack.c.b16 %v1513, %v1510
        %v1709 = vpack.c.b16 %v1517, %v1514
        %v1710 = vpack.c.b16 %v1518, %v1515
        %v1711 = vpack.c.b16 %v1519, %v1516
        %1904 = vmatprep.subr.bf16.mxu0 %v1521
        %1905 = vmatpush1.bf16.msra.mxu0 %v1520
        %1906 = vmatprep.subr.bf16.mxu0 %v1524
        %1907 = vmatpush1.bf16.msra.mxu0 %v1523
        %1908 = vmatprep.subr.bf16.mxu0 %v1527
        %1909 = vmatpush1.bf16.msra.mxu0 %v1526
        %1910 = vmatprep.subr.bf16.mxu0 %v1530
        %1911 = vmatpush1.bf16.msra.mxu0 %v1529
        %1912 = vmatprep.subr.bf16.mxu0 %v1533
        %1913 = vmatpush1.bf16.msra.mxu0 %v1532
        %1914 = vmatprep.subr.bf16.mxu0 %v1536
        %1915 = vmatpush1.bf16.msra.mxu0 %v1535
        %1916 = vmatprep.subr.bf16.mxu0 %v1539
        %1917 = vmatpush1.bf16.msra.mxu0 %v1538
        %1918 = vmatprep.subr.bf16.mxu0 %v1542
        %1919 = vmatpush1.bf16.msra.mxu0 %v1541
        %1920 = vmatprep.subr.bf16.mxu0 %v1545
        %1921 = vmatpush1.bf16.msra.mxu0 %v1544
        %1922 = vmatprep.subr.bf16.mxu0 %v1548
        %1923 = vmatpush1.bf16.msra.mxu0 %v1547
        %1924 = vmatprep.subr.bf16.mxu0 %v1551
        %1925 = vmatpush1.bf16.msra.mxu0 %v1550
        %1926 = vmatprep.subr.bf16.mxu0 %v1554
        %1927 = vmatpush1.bf16.msra.mxu0 %v1553
        %1928 = vmatprep.subr.bf16.mxu0 %v1557
        %1929 = vmatpush1.bf16.msra.mxu0 %v1556
        %1930 = vmatprep.subr.bf16.mxu0 %v1560
        %1931 = vmatpush1.bf16.msra.mxu0 %v1559
        %1932 = vmatprep.subr.bf16.mxu0 %v1563
        %1933 = vmatpush1.bf16.msra.mxu0 %v1562
        %1934 = vmatprep.subr.bf16.mxu0 %v1566
        %1935 = vmatpush1.bf16.msra.mxu0 %v1565
        %1936 = vmatprep.mubr.bf16.mxu0 %v544
        %1937 = vmatmul.mubr.bf16.gmra.mrb[0].mxu0 %v543
        %v1938 = vpop.f32.mrb[0].mxu0
        %v1939 = vadd.f32 %v868, %v1938
        %v1940 = vpop.f32.mrb[0].mxu0
        %v1941 = vadd.f32 %v872, %v1940
        %v1942 = vpop.f32.mrb[0].mxu0
        %v1943 = vadd.f32 %v868, %v1942
        %v1944 = vpop.f32.mrb[0].mxu0
        %v1945 = vadd.f32 %v872, %v1944
        %1946 = vmatprep.mubr.bf16.mxu0 %v552
        %1947 = vmatmul.mubr.bf16.gmra.mrb[0].mxu0 %v551
        %v1948 = vpop.f32.mrb[0].mxu0
        %v1949 = vadd.f32 %v868, %v1948
        %v1950 = vpop.f32.mrb[0].mxu0
        %v1951 = vadd.f32 %v872, %v1950
        %v1952 = vpop.f32.mrb[0].mxu0
        %v1953 = vadd.f32 %v868, %v1952
        %v1954 = vpop.f32.mrb[0].mxu0
        %v1955 = vadd.f32 %v872, %v1954
        %1956 = vmatprep.mubr.bf16.mxu0 %v560
        %1957 = vmatmul.mubr.bf16.gmra.mrb[0].mxu0 %v559
        %v1958 = vpop.f32.mrb[0].mxu0
        %v1959 = vadd.f32 %v868, %v1958
        %v1960 = vpop.f32.mrb[0].mxu0
        %v1961 = vadd.f32 %v872, %v1960
        %v1962 = vpop.f32.mrb[0].mxu0
        %v1963 = vadd.f32 %v868, %v1962
        %v1964 = vpop.f32.mrb[0].mxu0
        %v1965 = vadd.f32 %v872, %v1964
        %1966 = vmatprep.mubr.bf16.mxu0 %v568
        %1967 = vmatmul.mubr.bf16.gmra.mrb[0].mxu0 %v567
        %v1968 = vpop.f32.mrb[0].mxu0
        %v1969 = vadd.f32 %v868, %v1968
        %v1970 = vpop.f32.mrb[0].mxu0
        %v1971 = vadd.f32 %v872, %v1970
        %v1972 = vpop.f32.mrb[0].mxu0
        %v1973 = vadd.f32 %v868, %v1972
        %v1974 = vpop.f32.mrb[0].mxu0
        %v1975 = vadd.f32 %v872, %v1974
        %1976 = vmatprep.mubr.bf16.mxu0 %v576
        %1977 = vmatmul.mubr.bf16.gmra.mrb[0].mxu0 %v575
        %v1978 = vpop.f32.mrb[0].mxu0
        %v1979 = vadd.f32 %v868, %v1978
        %v1980 = vpop.f32.mrb[0].mxu0
        %v1981 = vadd.f32 %v872, %v1980
        %v1982 = vpop.f32.mrb[0].mxu0
        %v1983 = vadd.f32 %v868, %v1982
        %v1984 = vpop.f32.mrb[0].mxu0
        %v1985 = vadd.f32 %v872, %v1984
        %1986 = vmatprep.mubr.bf16.mxu0 %v584
        %1987 = vmatmul.mubr.bf16.gmra.mrb[0].mxu0 %v583
        %v1988 = vpop.f32.mrb[0].mxu0
        %v1989 = vadd.f32 %v868, %v1988
        %v1990 = vpop.f32.mrb[0].mxu0
        %v1991 = vadd.f32 %v872, %v1990
        %v1992 = vpop.f32.mrb[0].mxu0
        %v1993 = vadd.f32 %v868, %v1992
        %v1994 = vpop.f32.mrb[0].mxu0
        %v1995 = vadd.f32 %v872, %v1994
        %1996 = vmatprep.mubr.bf16.mxu0 %v592
        %1997 = vmatmul.mubr.bf16.gmra.mrb[0].mxu0 %v591
        %v1998 = vpop.f32.mrb[0].mxu0
        %v1999 = vadd.f32 %v868, %v1998
        %v2000 = vpop.f32.mrb[0].mxu0
        %v2001 = vadd.f32 %v872, %v2000
        %v2002 = vpop.f32.mrb[0].mxu0
        %v2003 = vadd.f32 %v868, %v2002
        %v2004 = vpop.f32.mrb[0].mxu0
        %v2005 = vadd.f32 %v872, %v2004
        %2006 = vmatprep.mubr.bf16.mxu0 %v600
        %2007 = vmatmul.mubr.bf16.gmra.mrb[0].mxu0 %v599
        %v2008 = vpop.f32.mrb[0].mxu0
        %v2009 = vadd.f32 %v868, %v2008
        %v2010 = vpop.f32.mrb[0].mxu0
        %v2011 = vadd.f32 %v872, %v2010
        %v2012 = vpop.f32.mrb[0].mxu0
        %v2013 = vadd.f32 %v868, %v2012
        %v2014 = vpop.f32.mrb[0].mxu0
        %v2015 = vadd.f32 %v872, %v2014
        %2016 = vdwg.mxu0
        %2017 = vmatprep.subr.bf16.mxu0 %v1569
        %2018 = vmatpush1.bf16.msra.mxu0 %v1568
        %2019 = vmatprep.subr.bf16.mxu0 %v1572
        %2020 = vmatpush1.bf16.msra.mxu0 %v1571
        %2021 = vmatprep.subr.bf16.mxu0 %v1575
        %2022 = vmatpush1.bf16.msra.mxu0 %v1574
        %2023 = vmatprep.subr.bf16.mxu0 %v1578
        %2024 = vmatpush1.bf16.msra.mxu0 %v1577
        %2025 = vmatprep.subr.bf16.mxu0 %v1581
        %2026 = vmatpush1.bf16.msra.mxu0 %v1580
        %2027 = vmatprep.subr.bf16.mxu0 %v1584
        %2028 = vmatpush1.bf16.msra.mxu0 %v1583
        %2029 = vmatprep.subr.bf16.mxu0 %v1587
        %2030 = vmatpush1.bf16.msra.mxu0 %v1586
        %2031 = vmatprep.subr.bf16.mxu0 %v1590
        %2032 = vmatpush1.bf16.msra.mxu0 %v1589
        %2033 = vmatprep.subr.bf16.mxu0 %v1593
        %2034 = vmatpush1.bf16.msra.mxu0 %v1592
        %2035 = vmatprep.subr.bf16.mxu0 %v1596
        %2036 = vmatpush1.bf16.msra.mxu0 %v1595
        %2037 = vmatprep.subr.bf16.mxu0 %v1599
        %2038 = vmatpush1.bf16.msra.mxu0 %v1598
        %2039 = vmatprep.subr.bf16.mxu0 %v1602
        %2040 = vmatpush1.bf16.msra.mxu0 %v1601
        %2041 = vmatprep.subr.bf16.mxu0 %v1605
        %2042 = vmatpush1.bf16.msra.mxu0 %v1604
        %2043 = vmatprep.subr.bf16.mxu0 %v1608
        %2044 = vmatpush1.bf16.msra.mxu0 %v1607
        %2045 = vmatprep.subr.bf16.mxu0 %v1611
        %2046 = vmatpush1.bf16.msra.mxu0 %v1610
        %2047 = vmatprep.subr.bf16.mxu0 %v1614
        %2048 = vmatpush1.bf16.msra.mxu0 %v1613
        %2049 = vmatprep.mubr.bf16.mxu0 %v546
        %2050 = vmatmul.mubr.bf16.gmra.mrb[0].mxu0 %v545
        %v2051 = vpop.f32.mrb[0].mxu0
        %v2052 = vadd.f32 %v1939, %v2051
        %v2053 = vpop.f32.mrb[0].mxu0
        %v2054 = vadd.f32 %v1941, %v2053
        %v2055 = vpop.f32.mrb[0].mxu0
        %v2056 = vadd.f32 %v1943, %v2055
        %v2057 = vpop.f32.mrb[0].mxu0
        %v2058 = vadd.f32 %v1945, %v2057
        %2059 = vmatprep.mubr.bf16.mxu0 %v554
        %2060 = vmatmul.mubr.bf16.gmra.mrb[0].mxu0 %v553
        %v2061 = vpop.f32.mrb[0].mxu0
        %v2062 = vadd.f32 %v1949, %v2061
        %v2063 = vpop.f32.mrb[0].mxu0
        %v2064 = vadd.f32 %v1951, %v2063
        %v2065 = vpop.f32.mrb[0].mxu0
        %v2066 = vadd.f32 %v1953, %v2065
        %v2067 = vpop.f32.mrb[0].mxu0
        %v2068 = vadd.f32 %v1955, %v2067
        %2069 = vmatprep.mubr.bf16.mxu0 %v562
        %2070 = vmatmul.mubr.bf16.gmra.mrb[0].mxu0 %v561
        %v2071 = vpop.f32.mrb[0].mxu0
        %v2072 = vadd.f32 %v1959, %v2071
        %v2073 = vpop.f32.mrb[0].mxu0
        %v2074 = vadd.f32 %v1961, %v2073
        %v2075 = vpop.f32.mrb[0].mxu0
        %v2076 = vadd.f32 %v1963, %v2075
        %v2077 = vpop.f32.mrb[0].mxu0
        %v2078 = vadd.f32 %v1965, %v2077
        %2079 = vmatprep.mubr.bf16.mxu0 %v570
        %2080 = vmatmul.mubr.bf16.gmra.mrb[0].mxu0 %v569
        %v2081 = vpop.f32.mrb[0].mxu0
        %v2082 = vadd.f32 %v1969, %v2081
        %v2083 = vpop.f32.mrb[0].mxu0
        %v2084 = vadd.f32 %v1971, %v2083
        %v2085 = vpop.f32.mrb[0].mxu0
        %v2086 = vadd.f32 %v1973, %v2085
        %v2087 = vpop.f32.mrb[0].mxu0
        %v2088 = vadd.f32 %v1975, %v2087
        %2089 = vmatprep.mubr.bf16.mxu0 %v578
        %2090 = vmatmul.mubr.bf16.gmra.mrb[0].mxu0 %v577
        %v2091 = vpop.f32.mrb[0].mxu0
        %v2092 = vadd.f32 %v1979, %v2091
        %v2093 = vpop.f32.mrb[0].mxu0
        %v2094 = vadd.f32 %v1981, %v2093
        %v2095 = vpop.f32.mrb[0].mxu0
        %v2096 = vadd.f32 %v1983, %v2095
        %v2097 = vpop.f32.mrb[0].mxu0
        %v2098 = vadd.f32 %v1985, %v2097
        %2099 = vmatprep.mubr.bf16.mxu0 %v586
        %2100 = vmatmul.mubr.bf16.gmra.mrb[0].mxu0 %v585
        %v2101 = vpop.f32.mrb[0].mxu0
        %v2102 = vadd.f32 %v1989, %v2101
        %v2103 = vpop.f32.mrb[0].mxu0
        %v2104 = vadd.f32 %v1991, %v2103
        %v2105 = vpop.f32.mrb[0].mxu0
        %v2106 = vadd.f32 %v1993, %v2105
        %v2107 = vpop.f32.mrb[0].mxu0
        %v2108 = vadd.f32 %v1995, %v2107
        %2109 = vmatprep.mubr.bf16.mxu0 %v594
        %2110 = vmatmul.mubr.bf16.gmra.mrb[0].mxu0 %v593
        %v2111 = vpop.f32.mrb[0].mxu0
        %v2112 = vadd.f32 %v1999, %v2111
        %v2113 = vpop.f32.mrb[0].mxu0
        %v2114 = vadd.f32 %v2001, %v2113
        %v2115 = vpop.f32.mrb[0].mxu0
        %v2116 = vadd.f32 %v2003, %v2115
        %v2117 = vpop.f32.mrb[0].mxu0
        %v2118 = vadd.f32 %v2005, %v2117
        %2119 = vmatprep.mubr.bf16.mxu0 %v602
        %2120 = vmatmul.mubr.bf16.gmra.mrb[0].mxu0 %v601
        %v2121 = vpop.f32.mrb[0].mxu0
        %v2122 = vadd.f32 %v2009, %v2121
        %v2123 = vpop.f32.mrb[0].mxu0
        %v2124 = vadd.f32 %v2011, %v2123
        %v2125 = vpop.f32.mrb[0].mxu0
        %v2126 = vadd.f32 %v2013, %v2125
        %v2127 = vpop.f32.mrb[0].mxu0
        %v2128 = vadd.f32 %v2015, %v2127
        %2129 = vdwg.mxu0
        %2130 = vmatprep.subr.bf16.mxu0 %v1617
        %2131 = vmatpush1.bf16.msra.mxu0 %v1616
        %2132 = vmatprep.subr.bf16.mxu0 %v1620
        %2133 = vmatpush1.bf16.msra.mxu0 %v1619
        %2134 = vmatprep.subr.bf16.mxu0 %v1623
        %2135 = vmatpush1.bf16.msra.mxu0 %v1622
        %2136 = vmatprep.subr.bf16.mxu0 %v1626
        %2137 = vmatpush1.bf16.msra.mxu0 %v1625
        %2138 = vmatprep.subr.bf16.mxu0 %v1629
        %2139 = vmatpush1.bf16.msra.mxu0 %v1628
        %2140 = vmatprep.subr.bf16.mxu0 %v1632
        %2141 = vmatpush1.bf16.msra.mxu0 %v1631
        %2142 = vmatprep.subr.bf16.mxu0 %v1635
        %2143 = vmatpush1.bf16.msra.mxu0 %v1634
        %2144 = vmatprep.subr.bf16.mxu0 %v1638
        %2145 = vmatpush1.bf16.msra.mxu0 %v1637
        %2146 = vmatprep.subr.bf16.mxu0 %v1641
        %2147 = vmatpush1.bf16.msra.mxu0 %v1640
        %2148 = vmatprep.subr.bf16.mxu0 %v1644
        %2149 = vmatpush1.bf16.msra.mxu0 %v1643
        %2150 = vmatprep.subr.bf16.mxu0 %v1647
        %2151 = vmatpush1.bf16.msra.mxu0 %v1646
        %2152 = vmatprep.subr.bf16.mxu0 %v1650
        %2153 = vmatpush1.bf16.msra.mxu0 %v1649
        %2154 = vmatprep.subr.bf16.mxu0 %v1653
        %2155 = vmatpush1.bf16.msra.mxu0 %v1652
        %2156 = vmatprep.subr.bf16.mxu0 %v1656
        %2157 = vmatpush1.bf16.msra.mxu0 %v1655
        %2158 = vmatprep.subr.bf16.mxu0 %v1659
        %2159 = vmatpush1.bf16.msra.mxu0 %v1658
        %2160 = vmatprep.subr.bf16.mxu0 %v1662
        %2161 = vmatpush1.bf16.msra.mxu0 %v1661
        %2162 = vmatprep.mubr.bf16.mxu0 %v548
        %2163 = vmatmul.mubr.bf16.gmra.mrb[0].mxu0 %v547
        %v2164 = vpop.f32.mrb[0].mxu0
        %v2165 = vadd.f32 %v2052, %v2164
        %v2166 = vpop.f32.mrb[0].mxu0
        %v2167 = vadd.f32 %v2054, %v2166
        %v2168 = vpop.f32.mrb[0].mxu0
        %v2169 = vadd.f32 %v2056, %v2168
        %v2170 = vpop.f32.mrb[0].mxu0
        %v2171 = vadd.f32 %v2058, %v2170
        %2172 = vmatprep.mubr.bf16.mxu0 %v556
        %2173 = vmatmul.mubr.bf16.gmra.mrb[0].mxu0 %v555
        %v2174 = vpop.f32.mrb[0].mxu0
        %v2175 = vadd.f32 %v2062, %v2174
        %v2176 = vpop.f32.mrb[0].mxu0
        %v2177 = vadd.f32 %v2064, %v2176
        %v2178 = vpop.f32.mrb[0].mxu0
        %v2179 = vadd.f32 %v2066, %v2178
        %v2180 = vpop.f32.mrb[0].mxu0
        %v2181 = vadd.f32 %v2068, %v2180
        %2182 = vmatprep.mubr.bf16.mxu0 %v564
        %2183 = vmatmul.mubr.bf16.gmra.mrb[0].mxu0 %v563
        %v2184 = vpop.f32.mrb[0].mxu0
        %v2185 = vadd.f32 %v2072, %v2184
        %v2186 = vpop.f32.mrb[0].mxu0
        %v2187 = vadd.f32 %v2074, %v2186
        %v2188 = vpop.f32.mrb[0].mxu0
        %v2189 = vadd.f32 %v2076, %v2188
        %v2190 = vpop.f32.mrb[0].mxu0
        %v2191 = vadd.f32 %v2078, %v2190
        %2192 = vmatprep.mubr.bf16.mxu0 %v572
        %2193 = vmatmul.mubr.bf16.gmra.mrb[0].mxu0 %v571
        %v2194 = vpop.f32.mrb[0].mxu0
        %v2195 = vadd.f32 %v2082, %v2194
        %v2196 = vpop.f32.mrb[0].mxu0
        %v2197 = vadd.f32 %v2084, %v2196
        %v2198 = vpop.f32.mrb[0].mxu0
        %v2199 = vadd.f32 %v2086, %v2198
        %v2200 = vpop.f32.mrb[0].mxu0
        %v2201 = vadd.f32 %v2088, %v2200
        %2202 = vmatprep.mubr.bf16.mxu0 %v580
        %2203 = vmatmul.mubr.bf16.gmra.mrb[0].mxu0 %v579
        %v2204 = vpop.f32.mrb[0].mxu0
        %v2205 = vadd.f32 %v2092, %v2204
        %v2206 = vpop.f32.mrb[0].mxu0
        %v2207 = vadd.f32 %v2094, %v2206
        %v2208 = vpop.f32.mrb[0].mxu0
        %v2209 = vadd.f32 %v2096, %v2208
        %v2210 = vpop.f32.mrb[0].mxu0
        %v2211 = vadd.f32 %v2098, %v2210
        %2212 = vmatprep.mubr.bf16.mxu0 %v588
        %2213 = vmatmul.mubr.bf16.gmra.mrb[0].mxu0 %v587
        %v2214 = vpop.f32.mrb[0].mxu0
        %v2215 = vadd.f32 %v2102, %v2214
        %v2216 = vpop.f32.mrb[0].mxu0
        %v2217 = vadd.f32 %v2104, %v2216
        %v2218 = vpop.f32.mrb[0].mxu0
        %v2219 = vadd.f32 %v2106, %v2218
        %v2220 = vpop.f32.mrb[0].mxu0
        %v2221 = vadd.f32 %v2108, %v2220
        %2222 = vmatprep.mubr.bf16.mxu0 %v596
        %2223 = vmatmul.mubr.bf16.gmra.mrb[0].mxu0 %v595
        %v2224 = vpop.f32.mrb[0].mxu0
        %v2225 = vadd.f32 %v2112, %v2224
        %v2226 = vpop.f32.mrb[0].mxu0
        %v2227 = vadd.f32 %v2114, %v2226
        %v2228 = vpop.f32.mrb[0].mxu0
        %v2229 = vadd.f32 %v2116, %v2228
        %v2230 = vpop.f32.mrb[0].mxu0
        %v2231 = vadd.f32 %v2118, %v2230
        %2232 = vmatprep.mubr.bf16.mxu0 %v604
        %2233 = vmatmul.mubr.bf16.gmra.mrb[0].mxu0 %v603
        %v2234 = vpop.f32.mrb[0].mxu0
        %v2235 = vadd.f32 %v2122, %v2234
        %v2236 = vpop.f32.mrb[0].mxu0
        %v2237 = vadd.f32 %v2124, %v2236
        %v2238 = vpop.f32.mrb[0].mxu0
        %v2239 = vadd.f32 %v2126, %v2238
        %v2240 = vpop.f32.mrb[0].mxu0
        %v2241 = vadd.f32 %v2128, %v2240
        %2242 = vdwg.mxu0
        %2243 = vmatprep.subr.bf16.mxu0 %v1665
        %2244 = vmatpush1.bf16.msra.mxu0 %v1664
        %2245 = vmatprep.subr.bf16.mxu0 %v1668
        %2246 = vmatpush1.bf16.msra.mxu0 %v1667
        %2247 = vmatprep.subr.bf16.mxu0 %v1671
        %2248 = vmatpush1.bf16.msra.mxu0 %v1670
        %2249 = vmatprep.subr.bf16.mxu0 %v1674
        %2250 = vmatpush1.bf16.msra.mxu0 %v1673
        %2251 = vmatprep.subr.bf16.mxu0 %v1677
        %2252 = vmatpush1.bf16.msra.mxu0 %v1676
        %2253 = vmatprep.subr.bf16.mxu0 %v1680
        %2254 = vmatpush1.bf16.msra.mxu0 %v1679
        %2255 = vmatprep.subr.bf16.mxu0 %v1683
        %2256 = vmatpush1.bf16.msra.mxu0 %v1682
        %2257 = vmatprep.subr.bf16.mxu0 %v1686
        %2258 = vmatpush1.bf16.msra.mxu0 %v1685
        %2259 = vmatprep.subr.bf16.mxu0 %v1689
        %2260 = vmatpush1.bf16.msra.mxu0 %v1688
        %2261 = vmatprep.subr.bf16.mxu0 %v1692
        %2262 = vmatpush1.bf16.msra.mxu0 %v1691
        %2263 = vmatprep.subr.bf16.mxu0 %v1695
        %2264 = vmatpush1.bf16.msra.mxu0 %v1694
        %2265 = vmatprep.subr.bf16.mxu0 %v1698
        %2266 = vmatpush1.bf16.msra.mxu0 %v1697
        %2267 = vmatprep.subr.bf16.mxu0 %v1701
        %2268 = vmatpush1.bf16.msra.mxu0 %v1700
        %2269 = vmatprep.subr.bf16.mxu0 %v1704
        %2270 = vmatpush1.bf16.msra.mxu0 %v1703
        %2271 = vmatprep.subr.bf16.mxu0 %v1707
        %2272 = vmatpush1.bf16.msra.mxu0 %v1706
        %2273 = vmatprep.subr.bf16.mxu0 %v1710
        %2274 = vmatpush1.bf16.msra.mxu0 %v1709
        %2275 = vmatprep.mubr.bf16.mxu0 %v550
        %2276 = vmatmul.mubr.bf16.gmra.mrb[0].mxu0 %v549
        %v2277 = vpop.f32.mrb[0].mxu0
        %v2278 = vadd.f32 %v2165, %v2277
        %v2279 = vpop.f32.mrb[0].mxu0
        %v2280 = vadd.f32 %v2167, %v2279
        %v2281 = vpop.f32.mrb[0].mxu0
        %v2282 = vadd.f32 %v2169, %v2281
        %v2283 = vpop.f32.mrb[0].mxu0
        %v2284 = vadd.f32 %v2171, %v2283
        %2285 = vmatprep.mubr.bf16.mxu0 %v558
        %2286 = vmatmul.mubr.bf16.gmra.mrb[0].mxu0 %v557
        %v2287 = vpop.f32.mrb[0].mxu0
        %v2288 = vadd.f32 %v2175, %v2287
        %v2289 = vpop.f32.mrb[0].mxu0
        %v2290 = vadd.f32 %v2177, %v2289
        %v2291 = vpop.f32.mrb[0].mxu0
        %v2292 = vadd.f32 %v2179, %v2291
        %v2293 = vpop.f32.mrb[0].mxu0
        %v2294 = vadd.f32 %v2181, %v2293
        %2295 = vmatprep.mubr.bf16.mxu0 %v566
        %2296 = vmatmul.mubr.bf16.gmra.mrb[0].mxu0 %v565
        %v2297 = vpop.f32.mrb[0].mxu0
        %v2298 = vadd.f32 %v2185, %v2297
        %v2299 = vpop.f32.mrb[0].mxu0
        %v2300 = vadd.f32 %v2187, %v2299
        %v2301 = vpop.f32.mrb[0].mxu0
        %v2302 = vadd.f32 %v2189, %v2301
        %v2303 = vpop.f32.mrb[0].mxu0
        %v2304 = vadd.f32 %v2191, %v2303
        %2305 = vmatprep.mubr.bf16.mxu0 %v574
        %2306 = vmatmul.mubr.bf16.gmra.mrb[0].mxu0 %v573
        %v2307 = vpop.f32.mrb[0].mxu0
        %v2308 = vadd.f32 %v2195, %v2307
        %v2309 = vpop.f32.mrb[0].mxu0
        %v2310 = vadd.f32 %v2197, %v2309
        %v2311 = vpop.f32.mrb[0].mxu0
        %v2312 = vadd.f32 %v2199, %v2311
        %v2313 = vpop.f32.mrb[0].mxu0
        %v2314 = vadd.f32 %v2201, %v2313
        %2315 = vmatprep.mubr.bf16.mxu0 %v582
        %2316 = vmatmul.mubr.bf16.gmra.mrb[0].mxu0 %v581
        %v2317 = vpop.f32.mrb[0].mxu0
        %v2318 = vadd.f32 %v2205, %v2317
        %v2319 = vpop.f32.mrb[0].mxu0
        %v2320 = vadd.f32 %v2207, %v2319
        %v2321 = vpop.f32.mrb[0].mxu0
        %v2322 = vadd.f32 %v2209, %v2321
        %v2323 = vpop.f32.mrb[0].mxu0
        %v2324 = vadd.f32 %v2211, %v2323
        %2325 = vmatprep.mubr.bf16.mxu0 %v590
        %2326 = vmatmul.mubr.bf16.gmra.mrb[0].mxu0 %v589
        %v2327 = vpop.f32.mrb[0].mxu0
        %v2328 = vadd.f32 %v2215, %v2327
        %v2329 = vpop.f32.mrb[0].mxu0
        %v2330 = vadd.f32 %v2217, %v2329
        %v2331 = vpop.f32.mrb[0].mxu0
        %v2332 = vadd.f32 %v2219, %v2331
        %v2333 = vpop.f32.mrb[0].mxu0
        %v2334 = vadd.f32 %v2221, %v2333
        %2335 = vmatprep.mubr.bf16.mxu0 %v598
        %2336 = vmatmul.mubr.bf16.gmra.mrb[0].mxu0 %v597
        %v2337 = vpop.f32.mrb[0].mxu0
        %v2338 = vadd.f32 %v2225, %v2337
        %v2339 = vpop.f32.mrb[0].mxu0
        %v2340 = vadd.f32 %v2227, %v2339
        %v2341 = vpop.f32.mrb[0].mxu0
        %v2342 = vadd.f32 %v2229, %v2341
        %v2343 = vpop.f32.mrb[0].mxu0
        %v2344 = vadd.f32 %v2231, %v2343
        %2345 = vmatprep.mubr.bf16.mxu0 %v606
        %2346 = vmatmul.mubr.bf16.gmra.mrb[0].mxu0 %v605
        %v2347 = vpop.f32.mrb[0].mxu0
        %v2348 = vadd.f32 %v2235, %v2347
        %v2349 = vpop.f32.mrb[0].mxu0
        %v2350 = vadd.f32 %v2237, %v2349
        %v2351 = vpop.f32.mrb[0].mxu0
        %v2352 = vadd.f32 %v2239, %v2351
        %v2353 = vpop.f32.mrb[0].mxu0
        %v2354 = vadd.f32 %v2241, %v2353
        %2355 = vdwg.mxu0
        %2356 = vmatprep.subr.bf16.mxu0 0
        %2357 = vmatpush1.bf16.msra.mxu0 %v1522
        %2358 = vmatprep.subr.bf16.mxu0 0
        %2359 = vmatpush1.bf16.msra.mxu0 %v1525
        %2360 = vmatprep.subr.bf16.mxu0 0
        %2361 = vmatpush1.bf16.msra.mxu0 %v1528
        %2362 = vmatprep.subr.bf16.mxu0 0
        %2363 = vmatpush1.bf16.msra.mxu0 %v1531
        %2364 = vmatprep.subr.bf16.mxu0 0
        %2365 = vmatpush1.bf16.msra.mxu0 %v1534
        %2366 = vmatprep.subr.bf16.mxu0 0
        %2367 = vmatpush1.bf16.msra.mxu0 %v1537
        %2368 = vmatprep.subr.bf16.mxu0 0
        %2369 = vmatpush1.bf16.msra.mxu0 %v1540
        %2370 = vmatprep.subr.bf16.mxu0 0
        %2371 = vmatpush1.bf16.msra.mxu0 %v1543
        %2372 = vmatprep.subr.bf16.mxu0 0
        %2373 = vmatpush1.bf16.msra.mxu0 %v1546
        %2374 = vmatprep.subr.bf16.mxu0 0
        %2375 = vmatpush1.bf16.msra.mxu0 %v1549
        %2376 = vmatprep.subr.bf16.mxu0 0
        %2377 = vmatpush1.bf16.msra.mxu0 %v1552
        %2378 = vmatprep.subr.bf16.mxu0 0
        %2379 = vmatpush1.bf16.msra.mxu0 %v1555
        %2380 = vmatprep.subr.bf16.mxu0 0
        %2381 = vmatpush1.bf16.msra.mxu0 %v1558
        %2382 = vmatprep.subr.bf16.mxu0 0
        %2383 = vmatpush1.bf16.msra.mxu0 %v1561
        %2384 = vmatprep.subr.bf16.mxu0 0
        %2385 = vmatpush1.bf16.msra.mxu0 %v1564
        %2386 = vmatprep.subr.bf16.mxu0 0
        %2387 = vmatpush1.bf16.msra.mxu0 %v1567
        %2388 = vmatprep.mubr.bf16.mxu0 %v544
        %2389 = vmatmul.mubr.bf16.gmra.mrb[0].mxu0 %v543
        %v2390 = vpop.f32.mrb[0].mxu0
        %v2391 = vadd.f32 %v876, %v2390
        %v2392 = vpop.f32.mrb[0].mxu0
        %v2393 = vpop.f32.mrb[0].mxu0
        %v2394 = vadd.f32 %v876, %v2393
        %v2395 = vpop.f32.mrb[0].mxu0
        %2396 = vmatprep.mubr.bf16.mxu0 %v552
        %2397 = vmatmul.mubr.bf16.gmra.mrb[0].mxu0 %v551
        %v2398 = vpop.f32.mrb[0].mxu0
        %v2399 = vadd.f32 %v876, %v2398
        %v2400 = vpop.f32.mrb[0].mxu0
        %v2401 = vpop.f32.mrb[0].mxu0
        %v2402 = vadd.f32 %v876, %v2401
        %v2403 = vpop.f32.mrb[0].mxu0
        %2404 = vmatprep.mubr.bf16.mxu0 %v560
        %2405 = vmatmul.mubr.bf16.gmra.mrb[0].mxu0 %v559
        %v2406 = vpop.f32.mrb[0].mxu0
        %v2407 = vadd.f32 %v876, %v2406
        %v2408 = vpop.f32.mrb[0].mxu0
        %v2409 = vpop.f32.mrb[0].mxu0
        %v2410 = vadd.f32 %v876, %v2409
        %v2411 = vpop.f32.mrb[0].mxu0
        %2412 = vmatprep.mubr.bf16.mxu0 %v568
        %2413 = vmatmul.mubr.bf16.gmra.mrb[0].mxu0 %v567
        %v2414 = vpop.f32.mrb[0].mxu0
        %v2415 = vadd.f32 %v876, %v2414
        %v2416 = vpop.f32.mrb[0].mxu0
        %v2417 = vpop.f32.mrb[0].mxu0
        %v2418 = vadd.f32 %v876, %v2417
        %v2419 = vpop.f32.mrb[0].mxu0
        %2420 = vmatprep.mubr.bf16.mxu0 %v576
        %2421 = vmatmul.mubr.bf16.gmra.mrb[0].mxu0 %v575
        %v2422 = vpop.f32.mrb[0].mxu0
        %v2423 = vadd.f32 %v876, %v2422
        %v2424 = vpop.f32.mrb[0].mxu0
        %v2425 = vpop.f32.mrb[0].mxu0
        %v2426 = vadd.f32 %v876, %v2425
        %v2427 = vpop.f32.mrb[0].mxu0
        %2428 = vmatprep.mubr.bf16.mxu0 %v584
        %2429 = vmatmul.mubr.bf16.gmra.mrb[0].mxu0 %v583
        %v2430 = vpop.f32.mrb[0].mxu0
        %v2431 = vadd.f32 %v876, %v2430
        %v2432 = vpop.f32.mrb[0].mxu0
        %v2433 = vpop.f32.mrb[0].mxu0
        %v2434 = vadd.f32 %v876, %v2433
        %v2435 = vpop.f32.mrb[0].mxu0
        %2436 = vmatprep.mubr.bf16.mxu0 %v592
        %2437 = vmatmul.mubr.bf16.gmra.mrb[0].mxu0 %v591
        %v2438 = vpop.f32.mrb[0].mxu0
        %v2439 = vadd.f32 %v876, %v2438
        %v2440 = vpop.f32.mrb[0].mxu0
        %v2441 = vpop.f32.mrb[0].mxu0
        %v2442 = vadd.f32 %v876, %v2441
        %v2443 = vpop.f32.mrb[0].mxu0
        %2444 = vmatprep.mubr.bf16.mxu0 %v600
        %2445 = vmatmul.mubr.bf16.gmra.mrb[0].mxu0 %v599
        %v2446 = vpop.f32.mrb[0].mxu0
        %v2447 = vadd.f32 %v876, %v2446
        %v2448 = vpop.f32.mrb[0].mxu0
        %v2449 = vpop.f32.mrb[0].mxu0
        %v2450 = vadd.f32 %v876, %v2449
        %v2451 = vpop.f32.mrb[0].mxu0
        %2452 = vdwg.mxu0
        %2453 = vmatprep.subr.bf16.mxu0 0
        %2454 = vmatpush1.bf16.msra.mxu0 %v1570
        %2455 = vmatprep.subr.bf16.mxu0 0
        %2456 = vmatpush1.bf16.msra.mxu0 %v1573
        %2457 = vmatprep.subr.bf16.mxu0 0
        %2458 = vmatpush1.bf16.msra.mxu0 %v1576
        %2459 = vmatprep.subr.bf16.mxu0 0
        %2460 = vmatpush1.bf16.msra.mxu0 %v1579
        %2461 = vmatprep.subr.bf16.mxu0 0
        %2462 = vmatpush1.bf16.msra.mxu0 %v1582
        %2463 = vmatprep.subr.bf16.mxu0 0
        %2464 = vmatpush1.bf16.msra.mxu0 %v1585
        %2465 = vmatprep.subr.bf16.mxu0 0
        %2466 = vmatpush1.bf16.msra.mxu0 %v1588
        %2467 = vmatprep.subr.bf16.mxu0 0
        %2468 = vmatpush1.bf16.msra.mxu0 %v1591
        %2469 = vmatprep.subr.bf16.mxu0 0
        %2470 = vmatpush1.bf16.msra.mxu0 %v1594
        %2471 = vmatprep.subr.bf16.mxu0 0
        %2472 = vmatpush1.bf16.msra.mxu0 %v1597
        %2473 = vmatprep.subr.bf16.mxu0 0
        %2474 = vmatpush1.bf16.msra.mxu0 %v1600
        %2475 = vmatprep.subr.bf16.mxu0 0
        %2476 = vmatpush1.bf16.msra.mxu0 %v1603
        %2477 = vmatprep.subr.bf16.mxu0 0
        %2478 = vmatpush1.bf16.msra.mxu0 %v1606
        %2479 = vmatprep.subr.bf16.mxu0 0
        %2480 = vmatpush1.bf16.msra.mxu0 %v1609
        %2481 = vmatprep.subr.bf16.mxu0 0
        %2482 = vmatpush1.bf16.msra.mxu0 %v1612
        %2483 = vmatprep.subr.bf16.mxu0 0
        %2484 = vmatpush1.bf16.msra.mxu0 %v1615
        %2485 = vmatprep.mubr.bf16.mxu0 %v546
        %2486 = vmatmul.mubr.bf16.gmra.mrb[0].mxu0 %v545
        %v2487 = vpop.f32.mrb[0].mxu0
        %v2488 = vadd.f32 %v2391, %v2487
        %v2489 = vpop.f32.mrb[0].mxu0
        %v2490 = vpop.f32.mrb[0].mxu0
        %v2491 = vadd.f32 %v2394, %v2490
        %v2492 = vpop.f32.mrb[0].mxu0
        %2493 = vmatprep.mubr.bf16.mxu0 %v554
        %2494 = vmatmul.mubr.bf16.gmra.mrb[0].mxu0 %v553
        %v2495 = vpop.f32.mrb[0].mxu0
        %v2496 = vadd.f32 %v2399, %v2495
        %v2497 = vpop.f32.mrb[0].mxu0
        %v2498 = vpop.f32.mrb[0].mxu0
        %v2499 = vadd.f32 %v2402, %v2498
        %v2500 = vpop.f32.mrb[0].mxu0
        %2501 = vmatprep.mubr.bf16.mxu0 %v562
        %2502 = vmatmul.mubr.bf16.gmra.mrb[0].mxu0 %v561
        %v2503 = vpop.f32.mrb[0].mxu0
        %v2504 = vadd.f32 %v2407, %v2503
        %v2505 = vpop.f32.mrb[0].mxu0
        %v2506 = vpop.f32.mrb[0].mxu0
        %v2507 = vadd.f32 %v2410, %v2506
        %v2508 = vpop.f32.mrb[0].mxu0
        %2509 = vmatprep.mubr.bf16.mxu0 %v570
        %2510 = vmatmul.mubr.bf16.gmra.mrb[0].mxu0 %v569
        %v2511 = vpop.f32.mrb[0].mxu0
        %v2512 = vadd.f32 %v2415, %v2511
        %v2513 = vpop.f32.mrb[0].mxu0
        %v2514 = vpop.f32.mrb[0].mxu0
        %v2515 = vadd.f32 %v2418, %v2514
        %v2516 = vpop.f32.mrb[0].mxu0
        %2517 = vmatprep.mubr.bf16.mxu0 %v578
        %2518 = vmatmul.mubr.bf16.gmra.mrb[0].mxu0 %v577
        %v2519 = vpop.f32.mrb[0].mxu0
        %v2520 = vadd.f32 %v2423, %v2519
        %v2521 = vpop.f32.mrb[0].mxu0
        %v2522 = vpop.f32.mrb[0].mxu0
        %v2523 = vadd.f32 %v2426, %v2522
        %v2524 = vpop.f32.mrb[0].mxu0
        %2525 = vmatprep.mubr.bf16.mxu0 %v586
        %2526 = vmatmul.mubr.bf16.gmra.mrb[0].mxu0 %v585
        %v2527 = vpop.f32.mrb[0].mxu0
        %v2528 = vadd.f32 %v2431, %v2527
        %v2529 = vpop.f32.mrb[0].mxu0
        %v2530 = vpop.f32.mrb[0].mxu0
        %v2531 = vadd.f32 %v2434, %v2530
        %v2532 = vpop.f32.mrb[0].mxu0
        %2533 = vmatprep.mubr.bf16.mxu0 %v594
        %2534 = vmatmul.mubr.bf16.gmra.mrb[0].mxu0 %v593
        %v2535 = vpop.f32.mrb[0].mxu0
        %v2536 = vadd.f32 %v2439, %v2535
        %v2537 = vpop.f32.mrb[0].mxu0
        %v2538 = vpop.f32.mrb[0].mxu0
        %v2539 = vadd.f32 %v2442, %v2538
        %v2540 = vpop.f32.mrb[0].mxu0
        %2541 = vmatprep.mubr.bf16.mxu0 %v602
        %2542 = vmatmul.mubr.bf16.gmra.mrb[0].mxu0 %v601
        %v2543 = vpop.f32.mrb[0].mxu0
        %v2544 = vadd.f32 %v2447, %v2543
        %v2545 = vpop.f32.mrb[0].mxu0
        %v2546 = vpop.f32.mrb[0].mxu0
        %v2547 = vadd.f32 %v2450, %v2546
        %v2548 = vpop.f32.mrb[0].mxu0
        %2549 = vdwg.mxu0
        %2550 = vmatprep.subr.bf16.mxu0 0
        %2551 = vmatpush1.bf16.msra.mxu0 %v1618
        %2552 = vmatprep.subr.bf16.mxu0 0
        %2553 = vmatpush1.bf16.msra.mxu0 %v1621
        %2554 = vmatprep.subr.bf16.mxu0 0
        %2555 = vmatpush1.bf16.msra.mxu0 %v1624
        %2556 = vmatprep.subr.bf16.mxu0 0
        %2557 = vmatpush1.bf16.msra.mxu0 %v1627
        %2558 = vmatprep.subr.bf16.mxu0 0
        %2559 = vmatpush1.bf16.msra.mxu0 %v1630
        %2560 = vmatprep.subr.bf16.mxu0 0
        %2561 = vmatpush1.bf16.msra.mxu0 %v1633
        %2562 = vmatprep.subr.bf16.mxu0 0
        %2563 = vmatpush1.bf16.msra.mxu0 %v1636
        %2564 = vmatprep.subr.bf16.mxu0 0
        %2565 = vmatpush1.bf16.msra.mxu0 %v1639
        %2566 = vmatprep.subr.bf16.mxu0 0
        %2567 = vmatpush1.bf16.msra.mxu0 %v1642
        %2568 = vmatprep.subr.bf16.mxu0 0
        %2569 = vmatpush1.bf16.msra.mxu0 %v1645
        %2570 = vmatprep.subr.bf16.mxu0 0
        %2571 = vmatpush1.bf16.msra.mxu0 %v1648
        %2572 = vmatprep.subr.bf16.mxu0 0
        %2573 = vmatpush1.bf16.msra.mxu0 %v1651
        %2574 = vmatprep.subr.bf16.mxu0 0
        %2575 = vmatpush1.bf16.msra.mxu0 %v1654
        %2576 = vmatprep.subr.bf16.mxu0 0
        %2577 = vmatpush1.bf16.msra.mxu0 %v1657
        %2578 = vmatprep.subr.bf16.mxu0 0
        %2579 = vmatpush1.bf16.msra.mxu0 %v1660
        %2580 = vmatprep.subr.bf16.mxu0 0
        %2581 = vmatpush1.bf16.msra.mxu0 %v1663
        %2582 = vmatprep.mubr.bf16.mxu0 %v548
        %2583 = vmatmul.mubr.bf16.gmra.mrb[0].mxu0 %v547
        %v2584 = vpop.f32.mrb[0].mxu0
        %v2585 = vadd.f32 %v2488, %v2584
        %v2586 = vpop.f32.mrb[0].mxu0
        %v2587 = vpop.f32.mrb[0].mxu0
        %v2588 = vadd.f32 %v2491, %v2587
        %v2589 = vpop.f32.mrb[0].mxu0
        %2590 = vmatprep.mubr.bf16.mxu0 %v556
        %2591 = vmatmul.mubr.bf16.gmra.mrb[0].mxu0 %v555
        %v2592 = vpop.f32.mrb[0].mxu0
        %v2593 = vadd.f32 %v2496, %v2592
        %v2594 = vpop.f32.mrb[0].mxu0
        %v2595 = vpop.f32.mrb[0].mxu0
        %v2596 = vadd.f32 %v2499, %v2595
        %v2597 = vpop.f32.mrb[0].mxu0
        %2598 = vmatprep.mubr.bf16.mxu0 %v564
        %2599 = vmatmul.mubr.bf16.gmra.mrb[0].mxu0 %v563
        %v2600 = vpop.f32.mrb[0].mxu0
        %v2601 = vadd.f32 %v2504, %v2600
        %v2602 = vpop.f32.mrb[0].mxu0
        %v2603 = vpop.f32.mrb[0].mxu0
        %v2604 = vadd.f32 %v2507, %v2603
        %v2605 = vpop.f32.mrb[0].mxu0
        %2606 = vmatprep.mubr.bf16.mxu0 %v572
        %2607 = vmatmul.mubr.bf16.gmra.mrb[0].mxu0 %v571
        %v2608 = vpop.f32.mrb[0].mxu0
        %v2609 = vadd.f32 %v2512, %v2608
        %v2610 = vpop.f32.mrb[0].mxu0
        %v2611 = vpop.f32.mrb[0].mxu0
        %v2612 = vadd.f32 %v2515, %v2611
        %v2613 = vpop.f32.mrb[0].mxu0
        %2614 = vmatprep.mubr.bf16.mxu0 %v580
        %2615 = vmatmul.mubr.bf16.gmra.mrb[0].mxu0 %v579
        %v2616 = vpop.f32.mrb[0].mxu0
        %v2617 = vadd.f32 %v2520, %v2616
        %v2618 = vpop.f32.mrb[0].mxu0
        %v2619 = vpop.f32.mrb[0].mxu0
        %v2620 = vadd.f32 %v2523, %v2619
        %v2621 = vpop.f32.mrb[0].mxu0
        %2622 = vmatprep.mubr.bf16.mxu0 %v588
        %2623 = vmatmul.mubr.bf16.gmra.mrb[0].mxu0 %v587
        %v2624 = vpop.f32.mrb[0].mxu0
        %v2625 = vadd.f32 %v2528, %v2624
        %v2626 = vpop.f32.mrb[0].mxu0
        %v2627 = vpop.f32.mrb[0].mxu0
        %v2628 = vadd.f32 %v2531, %v2627
        %v2629 = vpop.f32.mrb[0].mxu0
        %2630 = vmatprep.mubr.bf16.mxu0 %v596
        %2631 = vmatmul.mubr.bf16.gmra.mrb[0].mxu0 %v595
        %v2632 = vpop.f32.mrb[0].mxu0
        %v2633 = vadd.f32 %v2536, %v2632
        %v2634 = vpop.f32.mrb[0].mxu0
        %v2635 = vpop.f32.mrb[0].mxu0
        %v2636 = vadd.f32 %v2539, %v2635
        %v2637 = vpop.f32.mrb[0].mxu0
        %2638 = vmatprep.mubr.bf16.mxu0 %v604
        %2639 = vmatmul.mubr.bf16.gmra.mrb[0].mxu0 %v603
        %v2640 = vpop.f32.mrb[0].mxu0
        %v2641 = vadd.f32 %v2544, %v2640
        %v2642 = vpop.f32.mrb[0].mxu0
        %v2643 = vpop.f32.mrb[0].mxu0
        %v2644 = vadd.f32 %v2547, %v2643
        %v2645 = vpop.f32.mrb[0].mxu0
        %2646 = vdwg.mxu0
        %2647 = vmatprep.subr.bf16.mxu0 0
        %2648 = vmatpush1.bf16.msra.mxu0 %v1666
        %2649 = vmatprep.subr.bf16.mxu0 0
        %2650 = vmatpush1.bf16.msra.mxu0 %v1669
        %2651 = vmatprep.subr.bf16.mxu0 0
        %2652 = vmatpush1.bf16.msra.mxu0 %v1672
        %2653 = vmatprep.subr.bf16.mxu0 0
        %2654 = vmatpush1.bf16.msra.mxu0 %v1675
        %2655 = vmatprep.subr.bf16.mxu0 0
        %2656 = vmatpush1.bf16.msra.mxu0 %v1678
        %2657 = vmatprep.subr.bf16.mxu0 0
        %2658 = vmatpush1.bf16.msra.mxu0 %v1681
        %2659 = vmatprep.subr.bf16.mxu0 0
        %2660 = vmatpush1.bf16.msra.mxu0 %v1684
        %2661 = vmatprep.subr.bf16.mxu0 0
        %2662 = vmatpush1.bf16.msra.mxu0 %v1687
        %2663 = vmatprep.subr.bf16.mxu0 0
        %2664 = vmatpush1.bf16.msra.mxu0 %v1690
        %2665 = vmatprep.subr.bf16.mxu0 0
        %2666 = vmatpush1.bf16.msra.mxu0 %v1693
        %2667 = vmatprep.subr.bf16.mxu0 0
        %2668 = vmatpush1.bf16.msra.mxu0 %v1696
        %2669 = vmatprep.subr.bf16.mxu0 0
        %2670 = vmatpush1.bf16.msra.mxu0 %v1699
        %2671 = vmatprep.subr.bf16.mxu0 0
        %2672 = vmatpush1.bf16.msra.mxu0 %v1702
        %2673 = vmatprep.subr.bf16.mxu0 0
        %2674 = vmatpush1.bf16.msra.mxu0 %v1705
        %2675 = vmatprep.subr.bf16.mxu0 0
        %2676 = vmatpush1.bf16.msra.mxu0 %v1708
        %2677 = vmatprep.subr.bf16.mxu0 0
        %2678 = vmatpush1.bf16.msra.mxu0 %v1711
        %2679 = vmatprep.mubr.bf16.mxu0 %v550
        %2680 = vmatmul.mubr.bf16.gmra.mrb[0].mxu0 %v549
        %v2681 = vpop.f32.mrb[0].mxu0
        %v2682 = vadd.f32 %v2585, %v2681
        %v2683 = vpop.f32.mrb[0].mxu0
        %v2684 = vpop.f32.mrb[0].mxu0
        %v2685 = vadd.f32 %v2588, %v2684
        %v2686 = vpop.f32.mrb[0].mxu0
        %2687 = vmatprep.mubr.bf16.mxu0 %v558
        %2688 = vmatmul.mubr.bf16.gmra.mrb[0].mxu0 %v557
        %v2689 = vpop.f32.mrb[0].mxu0
        %v2690 = vadd.f32 %v2593, %v2689
        %v2691 = vpop.f32.mrb[0].mxu0
        %v2692 = vpop.f32.mrb[0].mxu0
        %v2693 = vadd.f32 %v2596, %v2692
        %v2694 = vpop.f32.mrb[0].mxu0
        %2695 = vmatprep.mubr.bf16.mxu0 %v566
        %2696 = vmatmul.mubr.bf16.gmra.mrb[0].mxu0 %v565
        %v2697 = vpop.f32.mrb[0].mxu0
        %v2698 = vadd.f32 %v2601, %v2697
        %v2699 = vpop.f32.mrb[0].mxu0
        %v2700 = vpop.f32.mrb[0].mxu0
        %v2701 = vadd.f32 %v2604, %v2700
        %v2702 = vpop.f32.mrb[0].mxu0
        %2703 = vmatprep.mubr.bf16.mxu0 %v574
        %2704 = vmatmul.mubr.bf16.gmra.mrb[0].mxu0 %v573
        %v2705 = vpop.f32.mrb[0].mxu0
        %v2706 = vadd.f32 %v2609, %v2705
        %v2707 = vpop.f32.mrb[0].mxu0
        %v2708 = vpop.f32.mrb[0].mxu0
        %v2709 = vadd.f32 %v2612, %v2708
        %v2710 = vpop.f32.mrb[0].mxu0
        %2711 = vmatprep.mubr.bf16.mxu0 %v582
        %2712 = vmatmul.mubr.bf16.gmra.mrb[0].mxu0 %v581
        %v2713 = vpop.f32.mrb[0].mxu0
        %v2714 = vadd.f32 %v2617, %v2713
        %v2715 = vpop.f32.mrb[0].mxu0
        %v2716 = vpop.f32.mrb[0].mxu0
        %v2717 = vadd.f32 %v2620, %v2716
        %v2718 = vpop.f32.mrb[0].mxu0
        %2719 = vmatprep.mubr.bf16.mxu0 %v590
        %2720 = vmatmul.mubr.bf16.gmra.mrb[0].mxu0 %v589
        %v2721 = vpop.f32.mrb[0].mxu0
        %v2722 = vadd.f32 %v2625, %v2721
        %v2723 = vpop.f32.mrb[0].mxu0
        %v2724 = vpop.f32.mrb[0].mxu0
        %v2725 = vadd.f32 %v2628, %v2724
        %v2726 = vpop.f32.mrb[0].mxu0
        %2727 = vmatprep.mubr.bf16.mxu0 %v598
        %2728 = vmatmul.mubr.bf16.gmra.mrb[0].mxu0 %v597
        %v2729 = vpop.f32.mrb[0].mxu0
        %v2730 = vadd.f32 %v2633, %v2729
        %v2731 = vpop.f32.mrb[0].mxu0
        %v2732 = vpop.f32.mrb[0].mxu0
        %v2733 = vadd.f32 %v2636, %v2732
        %v2734 = vpop.f32.mrb[0].mxu0
        %2735 = vmatprep.mubr.bf16.mxu0 %v606
        %2736 = vmatmul.mubr.bf16.gmra.mrb[0].mxu0 %v605
        %v2737 = vpop.f32.mrb[0].mxu0
        %v2738 = vadd.f32 %v2641, %v2737
        %v2739 = vpop.f32.mrb[0].mxu0
        %v2740 = vpop.f32.mrb[0].mxu0
        %v2741 = vadd.f32 %v2644, %v2740
        %v2742 = vpop.f32.mrb[0].mxu0
        %2743 = vdwg.mxu0
        %v2744 = vmax.f32 %v2278, 0.0
        %v2745 = vmax.f32 %v2280, 0.0
        %v2746 = vmax.f32 %v2682, 0.0
        %v2747 = vmax.f32 %v2282, 0.0
        %v2748 = vmax.f32 %v2284, 0.0
        %v2749 = vmax.f32 %v2685, 0.0
        %v2750 = vmax.f32 %v2288, 0.0
        %v2751 = vmax.f32 %v2290, 0.0
        %v2752 = vmax.f32 %v2690, 0.0
        %v2753 = vmax.f32 %v2292, 0.0
        %v2754 = vmax.f32 %v2294, 0.0
        %v2755 = vmax.f32 %v2693, 0.0
        %v2756 = vmax.f32 %v2298, 0.0
        %v2757 = vmax.f32 %v2300, 0.0
        %v2758 = vmax.f32 %v2698, 0.0
        %v2759 = vmax.f32 %v2302, 0.0
        %v2760 = vmax.f32 %v2304, 0.0
        %v2761 = vmax.f32 %v2701, 0.0
        %v2762 = vmax.f32 %v2308, 0.0
        %v2763 = vmax.f32 %v2310, 0.0
        %v2764 = vmax.f32 %v2706, 0.0
        %v2765 = vmax.f32 %v2312, 0.0
        %v2766 = vmax.f32 %v2314, 0.0
        %v2767 = vmax.f32 %v2709, 0.0
        %v2768 = vmax.f32 %v2318, 0.0
        %v2769 = vmax.f32 %v2320, 0.0
        %v2770 = vmax.f32 %v2714, 0.0
        %v2771 = vmax.f32 %v2322, 0.0
        %v2772 = vmax.f32 %v2324, 0.0
        %v2773 = vmax.f32 %v2717, 0.0
        %v2774 = vmax.f32 %v2328, 0.0
        %v2775 = vmax.f32 %v2330, 0.0
        %v2776 = vmax.f32 %v2722, 0.0
        %v2777 = vmax.f32 %v2332, 0.0
        %v2778 = vmax.f32 %v2334, 0.0
        %v2779 = vmax.f32 %v2725, 0.0
        %v2780 = vmax.f32 %v2338, 0.0
        %v2781 = vmax.f32 %v2340, 0.0
        %v2782 = vmax.f32 %v2730, 0.0
        %v2783 = vmax.f32 %v2342, 0.0
        %v2784 = vmax.f32 %v2344, 0.0
        %v2785 = vmax.f32 %v2733, 0.0
        %v2786 = vmax.f32 %v2348, 0.0
        %v2787 = vmax.f32 %v2350, 0.0
        %v2788 = vmax.f32 %v2738, 0.0
        %v2789 = vmax.f32 %v2352, 0.0
        %v2790 = vmax.f32 %v2354, 0.0
        %v2791 = vmax.f32 %v2741, 0.0
        %v2792 = vpack.c.bf16 %v2747, %v2744
        %v2793 = vpack.c.bf16 %v2748, %v2745
        %v2794 = vpack.c.bf16 %v2749, %v2746
        %v2795 = vpack.c.bf16 %v2753, %v2750
        %v2796 = vpack.c.bf16 %v2754, %v2751
        %v2797 = vpack.c.bf16 %v2755, %v2752
        %v2798 = vpack.c.bf16 %v2759, %v2756
        %v2799 = vpack.c.bf16 %v2760, %v2757
        %v2800 = vpack.c.bf16 %v2761, %v2758
        %v2801 = vpack.c.bf16 %v2765, %v2762
        %v2802 = vpack.c.bf16 %v2766, %v2763
        %v2803 = vpack.c.bf16 %v2767, %v2764
        %v2804 = vpack.c.bf16 %v2771, %v2768
        %v2805 = vpack.c.bf16 %v2772, %v2769
        %v2806 = vpack.c.bf16 %v2773, %v2770
        %v2807 = vpack.c.bf16 %v2777, %v2774
        %v2808 = vpack.c.bf16 %v2778, %v2775
        %v2809 = vpack.c.bf16 %v2779, %v2776
        %v2810 = vpack.c.bf16 %v2783, %v2780
        %v2811 = vpack.c.bf16 %v2784, %v2781
        %v2812 = vpack.c.bf16 %v2785, %v2782
        %v2813 = vpack.c.bf16 %v2789, %v2786
        %v2814 = vpack.c.bf16 %v2790, %v2787
        %v2815 = vpack.c.bf16 %v2791, %v2788
        %v2816 = vld [vmem:[#allocation6] sm:$0xff]
        %v2817 = vld [vmem:[#allocation6 + $0x8] sm:$0xf]
        %v2818 = vld [vmem:[#allocation6 + $0xc] sm:$0xff]
        %v2819 = vld [vmem:[#allocation6 + $0x14] sm:$0xf]
        %v2820 = vld [vmem:[#allocation6 + $0x18] sm:$0xff]
        %v2821 = vld [vmem:[#allocation6 + $0x20] sm:$0xf]
        %v2822 = vld [vmem:[#allocation6 + $0x24] sm:$0xff]
        %v2823 = vld [vmem:[#allocation6 + $0x2c] sm:$0xf]
        %v2824 = vld [vmem:[#allocation6 + $0x30] sm:$0xff]
        %v2825 = vld [vmem:[#allocation6 + $0x38] sm:$0xf]
        %v2826 = vld [vmem:[#allocation6 + $0x3c] sm:$0xff]
        %v2827 = vld [vmem:[#allocation6 + $0x44] sm:$0xf]
        %v2828 = vld [vmem:[#allocation6 + $0x48] sm:$0xff]
        %v2829 = vld [vmem:[#allocation6 + $0x50] sm:$0xf]
        %v2830 = vld [vmem:[#allocation6 + $0x54] sm:$0xff]
        %v2831 = vld [vmem:[#allocation6 + $0x5c] sm:$0xf]
        %v2832 = vld [vmem:[#allocation6 + $0x60] sm:$0xff]
        %v2833 = vld [vmem:[#allocation6 + $0x68] sm:$0xf]
        %v2834 = vld [vmem:[#allocation6 + $0x6c] sm:$0xff]
        %v2835 = vld [vmem:[#allocation6 + $0x74] sm:$0xf]
        %v2836 = vld [vmem:[#allocation6 + $0x78] sm:$0xff]
        %v2837 = vld [vmem:[#allocation6 + $0x80] sm:$0xf]
        %v2838 = vld [vmem:[#allocation6 + $0x84] sm:$0xff]
        %v2839 = vld [vmem:[#allocation6 + $0x8c] sm:$0xf]
        %v2840 = vld [vmem:[#allocation6 + $0x90] sm:$0xff]
        %v2841 = vld [vmem:[#allocation6 + $0x98] sm:$0xf]
        %v2842 = vld [vmem:[#allocation6 + $0x9c] sm:$0xff]
        %v2843 = vld [vmem:[#allocation6 + $0xa4] sm:$0xf]
        %v2844 = vld [vmem:[#allocation6 + $0xa8] sm:$0xff]
        %v2845 = vld [vmem:[#allocation6 + $0xb0] sm:$0xf]
        %v2846 = vld [vmem:[#allocation6 + $0xb4] sm:$0xff]
        %v2847 = vld [vmem:[#allocation6 + $0xbc] sm:$0xf]
        %v2848 = vld [vmem:[#allocation6 + $0xc0] sm:$0xff]
        %v2849 = vld [vmem:[#allocation6 + $0xc8] sm:$0xf]
        %v2850 = vld [vmem:[#allocation6 + $0xcc] sm:$0xff]
        %v2851 = vld [vmem:[#allocation6 + $0xd4] sm:$0xf]
        %v2852 = vld [vmem:[#allocation6 + $0xd8] sm:$0xff]
        %v2853 = vld [vmem:[#allocation6 + $0xe0] sm:$0xf]
        %v2854 = vld [vmem:[#allocation6 + $0xe4] sm:$0xff]
        %v2855 = vld [vmem:[#allocation6 + $0xec] sm:$0xf]
        %v2856 = vld [vmem:[#allocation6 + $0xf0] sm:$0xff]
        %v2857 = vld [vmem:[#allocation6 + $0xf8] sm:$0xf]
        %v2858 = vld [vmem:[#allocation6 + $0xfc] sm:$0xff]
        %v2859 = vld [vmem:[#allocation6 + $0x104] sm:$0xf]
        %v2860 = vld [vmem:[#allocation6 + $0x108] sm:$0xff]
        %v2861 = vld [vmem:[#allocation6 + $0x110] sm:$0xf]
        %v2862 = vld [vmem:[#allocation6 + $0x114] sm:$0xff]
        %v2863 = vld [vmem:[#allocation6 + $0x11c] sm:$0xf]
        %v2864 = vld [vmem:[#allocation6 + $0x120] sm:$0xff]
        %v2865 = vld [vmem:[#allocation6 + $0x128] sm:$0xf]
        %v2866 = vld [vmem:[#allocation6 + $0x12c] sm:$0xff]
        %v2867 = vld [vmem:[#allocation6 + $0x134] sm:$0xf]
        %v2868 = vld [vmem:[#allocation6 + $0x138] sm:$0xff]
        %v2869 = vld [vmem:[#allocation6 + $0x140] sm:$0xf]
        %v2870 = vld [vmem:[#allocation6 + $0x144] sm:$0xff]
        %v2871 = vld [vmem:[#allocation6 + $0x14c] sm:$0xf]
        %v2872 = vld [vmem:[#allocation6 + $0x150] sm:$0xff]
        %v2873 = vld [vmem:[#allocation6 + $0x158] sm:$0xf]
        %v2874 = vld [vmem:[#allocation6 + $0x15c] sm:$0xff]
        %v2875 = vld [vmem:[#allocation6 + $0x164] sm:$0xf]
        %v2876 = vld [vmem:[#allocation6 + $0x168] sm:$0xff]
        %v2877 = vld [vmem:[#allocation6 + $0x170] sm:$0xf]
        %v2878 = vld [vmem:[#allocation6 + $0x174] sm:$0xff]
        %v2879 = vld [vmem:[#allocation6 + $0x17c] sm:$0xf]
        %v2880 = vld [vmem:[#allocation6 + $0x180] sm:$0xff]
        %v2881 = vld [vmem:[#allocation6 + $0x188] sm:$0xf]
        %v2882 = vld [vmem:[#allocation6 + $0x18c] sm:$0xff]
        %v2883 = vld [vmem:[#allocation6 + $0x194] sm:$0xf]
        %v2884 = vld [vmem:[#allocation6 + $0x198] sm:$0xff]
        %v2885 = vld [vmem:[#allocation6 + $0x1a0] sm:$0xf]
        %v2886 = vld [vmem:[#allocation6 + $0x1a4] sm:$0xff]
        %v2887 = vld [vmem:[#allocation6 + $0x1ac] sm:$0xf]
        %v2888 = vld [vmem:[#allocation6 + $0x1b0] sm:$0xff]
        %v2889 = vld [vmem:[#allocation6 + $0x1b8] sm:$0xf]
        %v2890 = vld [vmem:[#allocation6 + $0x1bc] sm:$0xff]
        %v2891 = vld [vmem:[#allocation6 + $0x1c4] sm:$0xf]
        %v2892 = vld [vmem:[#allocation6 + $0x1c8] sm:$0xff]
        %v2893 = vld [vmem:[#allocation6 + $0x1d0] sm:$0xf]
        %v2894 = vld [vmem:[#allocation6 + $0x1d4] sm:$0xff]
        %v2895 = vld [vmem:[#allocation6 + $0x1dc] sm:$0xf]
        %v2896 = vld [vmem:[#allocation6 + $0x1e0] sm:$0xff]
        %v2897 = vld [vmem:[#allocation6 + $0x1e8] sm:$0xf]
        %v2898 = vld [vmem:[#allocation6 + $0x1ec] sm:$0xff]
        %v2899 = vld [vmem:[#allocation6 + $0x1f4] sm:$0xf]
        %v2900 = vld [vmem:[#allocation6 + $0x1f8] sm:$0xff]
        %v2901 = vld [vmem:[#allocation6 + $0x200] sm:$0xf]
        %v2902 = vld [vmem:[#allocation6 + $0x204] sm:$0xff]
        %v2903 = vld [vmem:[#allocation6 + $0x20c] sm:$0xf]
        %v2904 = vld [vmem:[#allocation6 + $0x210] sm:$0xff]
        %v2905 = vld [vmem:[#allocation6 + $0x218] sm:$0xf]
        %v2906 = vld [vmem:[#allocation6 + $0x21c] sm:$0xff]
        %v2907 = vld [vmem:[#allocation6 + $0x224] sm:$0xf]
        %v2908 = vld [vmem:[#allocation6 + $0x228] sm:$0xff]
        %v2909 = vld [vmem:[#allocation6 + $0x230] sm:$0xf]
        %v2910 = vld [vmem:[#allocation6 + $0x234] sm:$0xff]
        %v2911 = vld [vmem:[#allocation6 + $0x23c] sm:$0xf]
        %v2912 = vld [vmem:[%s4] sm:$0x7]
        %v2914 = vlaneseq
        %v2915 = vshrl.u32 %v2914, 7
        %v2916 = vsub.s32 0, %v2915
        %v2917 = vrot.slane %v2912, %v2916
        %v2918 = vlaneseq
        %v2919 = vshrl.u32 %v2918, 7
        %v2920 = vsub.s32 1, %v2919
        %v2921 = vrot.slane %v2912, %v2920
        %v2922 = vlaneseq
        %v2923 = vshrl.u32 %v2922, 7
        %v2924 = vsub.s32 2, %v2923
        %v2925 = vrot.slane %v2912, %v2924
        %v3025 = vunpack.c.l.b16 %v2816
        %v3026 = vunpack.c.h.b16 %v2816
        %v3027 = vunpack.c.l.b16 %v2817
        %v3028 = vunpack.c.l.b16 %v2818
        %v3029 = vunpack.c.h.b16 %v2818
        %v3030 = vunpack.c.l.b16 %v2819
        %v3031 = vunpack.c.l.b16 %v2820
        %v3032 = vunpack.c.h.b16 %v2820
        %v3033 = vunpack.c.l.b16 %v2821
        %v3034 = vunpack.c.l.b16 %v2822
        %v3035 = vunpack.c.h.b16 %v2822
        %v3036 = vunpack.c.l.b16 %v2823
        %v3037 = vunpack.c.l.b16 %v2824
        %v3038 = vunpack.c.h.b16 %v2824
        %v3039 = vunpack.c.l.b16 %v2825
        %v3040 = vunpack.c.l.b16 %v2826
        %v3041 = vunpack.c.h.b16 %v2826
        %v3042 = vunpack.c.l.b16 %v2827
        %v3043 = vunpack.c.l.b16 %v2828
        %v3044 = vunpack.c.h.b16 %v2828
        %v3045 = vunpack.c.l.b16 %v2829
        %v3046 = vunpack.c.l.b16 %v2830
        %v3047 = vunpack.c.h.b16 %v2830
        %v3048 = vunpack.c.l.b16 %v2831
        %v3049 = vunpack.c.l.b16 %v2832
        %v3050 = vunpack.c.h.b16 %v2832
        %v3051 = vunpack.c.l.b16 %v2833
        %v3052 = vunpack.c.l.b16 %v2834
        %v3053 = vunpack.c.h.b16 %v2834
        %v3054 = vunpack.c.l.b16 %v2835
        %v3055 = vunpack.c.l.b16 %v2836
        %v3056 = vunpack.c.h.b16 %v2836
        %v3057 = vunpack.c.l.b16 %v2837
        %v3058 = vunpack.c.l.b16 %v2838
        %v3059 = vunpack.c.h.b16 %v2838
        %v3060 = vunpack.c.l.b16 %v2839
        %v3061 = vunpack.c.l.b16 %v2840
        %v3062 = vunpack.c.h.b16 %v2840
        %v3063 = vunpack.c.l.b16 %v2841
        %v3064 = vunpack.c.l.b16 %v2842
        %v3065 = vunpack.c.h.b16 %v2842
        %v3066 = vunpack.c.l.b16 %v2843
        %v3067 = vunpack.c.l.b16 %v2844
        %v3068 = vunpack.c.h.b16 %v2844
        %v3069 = vunpack.c.l.b16 %v2845
        %v3070 = vunpack.c.l.b16 %v2846
        %v3071 = vunpack.c.h.b16 %v2846
        %v3072 = vunpack.c.l.b16 %v2847
        %v3073 = vunpack.c.l.b16 %v2848
        %v3074 = vunpack.c.h.b16 %v2848
        %v3075 = vunpack.c.l.b16 %v2849
        %v3076 = vunpack.c.l.b16 %v2850
        %v3077 = vunpack.c.h.b16 %v2850
        %v3078 = vunpack.c.l.b16 %v2851
        %v3079 = vunpack.c.l.b16 %v2852
        %v3080 = vunpack.c.h.b16 %v2852
        %v3081 = vunpack.c.l.b16 %v2853
        %v3082 = vunpack.c.l.b16 %v2854
        %v3083 = vunpack.c.h.b16 %v2854
        %v3084 = vunpack.c.l.b16 %v2855
        %v3085 = vunpack.c.l.b16 %v2856
        %v3086 = vunpack.c.h.b16 %v2856
        %v3087 = vunpack.c.l.b16 %v2857
        %v3088 = vunpack.c.l.b16 %v2858
        %v3089 = vunpack.c.h.b16 %v2858
        %v3090 = vunpack.c.l.b16 %v2859
        %v3091 = vunpack.c.l.b16 %v2860
        %v3092 = vunpack.c.h.b16 %v2860
        %v3093 = vunpack.c.l.b16 %v2861
        %v3094 = vunpack.c.l.b16 %v2862
        %v3095 = vunpack.c.h.b16 %v2862
        %v3096 = vunpack.c.l.b16 %v2863
        %v3097 = vunpack.c.l.b16 %v2864
        %v3098 = vunpack.c.h.b16 %v2864
        %v3099 = vunpack.c.l.b16 %v2865
        %v3100 = vunpack.c.l.b16 %v2866
        %v3101 = vunpack.c.h.b16 %v2866
        %v3102 = vunpack.c.l.b16 %v2867
        %v3103 = vunpack.c.l.b16 %v2868
        %v3104 = vunpack.c.h.b16 %v2868
        %v3105 = vunpack.c.l.b16 %v2869
        %v3106 = vunpack.c.l.b16 %v2870
        %v3107 = vunpack.c.h.b16 %v2870
        %v3108 = vunpack.c.l.b16 %v2871
        %v3109 = vunpack.c.l.b16 %v2872
        %v3110 = vunpack.c.h.b16 %v2872
        %v3111 = vunpack.c.l.b16 %v2873
        %v3112 = vunpack.c.l.b16 %v2874
        %v3113 = vunpack.c.h.b16 %v2874
        %v3114 = vunpack.c.l.b16 %v2875
        %v3115 = vunpack.c.l.b16 %v2876
        %v3116 = vunpack.c.h.b16 %v2876
        %v3117 = vunpack.c.l.b16 %v2877
        %v3118 = vunpack.c.l.b16 %v2878
        %v3119 = vunpack.c.h.b16 %v2878
        %v3120 = vunpack.c.l.b16 %v2879
        %v3121 = vunpack.c.l.b16 %v2880
        %v3122 = vunpack.c.h.b16 %v2880
        %v3123 = vunpack.c.l.b16 %v2881
        %v3124 = vunpack.c.l.b16 %v2882
        %v3125 = vunpack.c.h.b16 %v2882
        %v3126 = vunpack.c.l.b16 %v2883
        %v3127 = vunpack.c.l.b16 %v2884
        %v3128 = vunpack.c.h.b16 %v2884
        %v3129 = vunpack.c.l.b16 %v2885
        %v3130 = vunpack.c.l.b16 %v2886
        %v3131 = vunpack.c.h.b16 %v2886
        %v3132 = vunpack.c.l.b16 %v2887
        %v3133 = vunpack.c.l.b16 %v2888
        %v3134 = vunpack.c.h.b16 %v2888
        %v3135 = vunpack.c.l.b16 %v2889
        %v3136 = vunpack.c.l.b16 %v2890
        %v3137 = vunpack.c.h.b16 %v2890
        %v3138 = vunpack.c.l.b16 %v2891
        %v3139 = vunpack.c.l.b16 %v2892
        %v3140 = vunpack.c.h.b16 %v2892
        %v3141 = vunpack.c.l.b16 %v2893
        %v3142 = vunpack.c.l.b16 %v2894
        %v3143 = vunpack.c.h.b16 %v2894
        %v3144 = vunpack.c.l.b16 %v2895
        %v3145 = vunpack.c.l.b16 %v2896
        %v3146 = vunpack.c.h.b16 %v2896
        %v3147 = vunpack.c.l.b16 %v2897
        %v3148 = vunpack.c.l.b16 %v2898
        %v3149 = vunpack.c.h.b16 %v2898
        %v3150 = vunpack.c.l.b16 %v2899
        %v3151 = vunpack.c.l.b16 %v2900
        %v3152 = vunpack.c.h.b16 %v2900
        %v3153 = vunpack.c.l.b16 %v2901
        %v3154 = vunpack.c.l.b16 %v2902
        %v3155 = vunpack.c.h.b16 %v2902
        %v3156 = vunpack.c.l.b16 %v2903
        %v3157 = vunpack.c.l.b16 %v2904
        %v3158 = vunpack.c.h.b16 %v2904
        %v3159 = vunpack.c.l.b16 %v2905
        %v3160 = vunpack.c.l.b16 %v2906
        %v3161 = vunpack.c.h.b16 %v2906
        %v3162 = vunpack.c.l.b16 %v2907
        %v3163 = vunpack.c.l.b16 %v2908
        %v3164 = vunpack.c.h.b16 %v2908
        %v3165 = vunpack.c.l.b16 %v2909
        %v3166 = vunpack.c.l.b16 %v2910
        %v3167 = vunpack.c.h.b16 %v2910
        %v3168 = vunpack.c.l.b16 %v2911
        %v3169 = vpack.c.b16 %v3028, %v3025
        %v3170 = vpack.c.b16 %v3029, %v3026
        %v3171 = vpack.c.b16 %v3030, %v3027
        %v3172 = vpack.c.b16 %v3034, %v3031
        %v3173 = vpack.c.b16 %v3035, %v3032
        %v3174 = vpack.c.b16 %v3036, %v3033
        %v3175 = vpack.c.b16 %v3040, %v3037
        %v3176 = vpack.c.b16 %v3041, %v3038
        %v3177 = vpack.c.b16 %v3042, %v3039
        %v3178 = vpack.c.b16 %v3046, %v3043
        %v3179 = vpack.c.b16 %v3047, %v3044
        %v3180 = vpack.c.b16 %v3048, %v3045
        %v3181 = vpack.c.b16 %v3052, %v3049
        %v3182 = vpack.c.b16 %v3053, %v3050
        %v3183 = vpack.c.b16 %v3054, %v3051
        %v3184 = vpack.c.b16 %v3058, %v3055
        %v3185 = vpack.c.b16 %v3059, %v3056
        %v3186 = vpack.c.b16 %v3060, %v3057
        %v3187 = vpack.c.b16 %v3064, %v3061
        %v3188 = vpack.c.b16 %v3065, %v3062
        %v3189 = vpack.c.b16 %v3066, %v3063
        %v3190 = vpack.c.b16 %v3070, %v3067
        %v3191 = vpack.c.b16 %v3071, %v3068
        %v3192 = vpack.c.b16 %v3072, %v3069
        %v3193 = vpack.c.b16 %v3076, %v3073
        %v3194 = vpack.c.b16 %v3077, %v3074
        %v3195 = vpack.c.b16 %v3078, %v3075
        %v3196 = vpack.c.b16 %v3082, %v3079
        %v3197 = vpack.c.b16 %v3083, %v3080
        %v3198 = vpack.c.b16 %v3084, %v3081
        %v3199 = vpack.c.b16 %v3088, %v3085
        %v3200 = vpack.c.b16 %v3089, %v3086
        %v3201 = vpack.c.b16 %v3090, %v3087
        %v3202 = vpack.c.b16 %v3094, %v3091
        %v3203 = vpack.c.b16 %v3095, %v3092
        %v3204 = vpack.c.b16 %v3096, %v3093
        %v3205 = vpack.c.b16 %v3100, %v3097
        %v3206 = vpack.c.b16 %v3101, %v3098
        %v3207 = vpack.c.b16 %v3102, %v3099
        %v3208 = vpack.c.b16 %v3106, %v3103
        %v3209 = vpack.c.b16 %v3107, %v3104
        %v3210 = vpack.c.b16 %v3108, %v3105
        %v3211 = vpack.c.b16 %v3112, %v3109
        %v3212 = vpack.c.b16 %v3113, %v3110
        %v3213 = vpack.c.b16 %v3114, %v3111
        %v3214 = vpack.c.b16 %v3118, %v3115
        %v3215 = vpack.c.b16 %v3119, %v3116
        %v3216 = vpack.c.b16 %v3120, %v3117
        %v3217 = vpack.c.b16 %v3124, %v3121
        %v3218 = vpack.c.b16 %v3125, %v3122
        %v3219 = vpack.c.b16 %v3126, %v3123
        %v3220 = vpack.c.b16 %v3130, %v3127
        %v3221 = vpack.c.b16 %v3131, %v3128
        %v3222 = vpack.c.b16 %v3132, %v3129
        %v3223 = vpack.c.b16 %v3136, %v3133
        %v3224 = vpack.c.b16 %v3137, %v3134
        %v3225 = vpack.c.b16 %v3138, %v3135
        %v3226 = vpack.c.b16 %v3142, %v3139
        %v3227 = vpack.c.b16 %v3143, %v3140
        %v3228 = vpack.c.b16 %v3144, %v3141
        %v3229 = vpack.c.b16 %v3148, %v3145
        %v3230 = vpack.c.b16 %v3149, %v3146
        %v3231 = vpack.c.b16 %v3150, %v3147
        %v3232 = vpack.c.b16 %v3154, %v3151
        %v3233 = vpack.c.b16 %v3155, %v3152
        %v3234 = vpack.c.b16 %v3156, %v3153
        %v3235 = vpack.c.b16 %v3160, %v3157
        %v3236 = vpack.c.b16 %v3161, %v3158
        %v3237 = vpack.c.b16 %v3162, %v3159
        %v3238 = vpack.c.b16 %v3166, %v3163
        %v3239 = vpack.c.b16 %v3167, %v3164
        %v3240 = vpack.c.b16 %v3168, %v3165
        %3313 = vmatprep.subr.bf16.mxu0 %v3170
        %3314 = vmatpush1.bf16.msra.mxu0 %v3169
        %3315 = vmatprep.subr.bf16.mxu0 %v3173
        %3316 = vmatpush1.bf16.msra.mxu0 %v3172
        %3317 = vmatprep.subr.bf16.mxu0 %v3176
        %3318 = vmatpush1.bf16.msra.mxu0 %v3175
        %3319 = vmatprep.subr.bf16.mxu0 %v3179
        %3320 = vmatpush1.bf16.msra.mxu0 %v3178
        %3321 = vmatprep.subr.bf16.mxu0 %v3182
        %3322 = vmatpush1.bf16.msra.mxu0 %v3181
        %3323 = vmatprep.subr.bf16.mxu0 %v3185
        %3324 = vmatpush1.bf16.msra.mxu0 %v3184
        %3325 = vmatprep.subr.bf16.mxu0 %v3188
        %3326 = vmatpush1.bf16.msra.mxu0 %v3187
        %3327 = vmatprep.subr.bf16.mxu0 %v3191
        %3328 = vmatpush1.bf16.msra.mxu0 %v3190
        %3329 = vmatprep.subr.bf16.mxu0 %v3194
        %3330 = vmatpush1.bf16.msra.mxu0 %v3193
        %3331 = vmatprep.subr.bf16.mxu0 %v3197
        %3332 = vmatpush1.bf16.msra.mxu0 %v3196
        %3333 = vmatprep.subr.bf16.mxu0 %v3200
        %3334 = vmatpush1.bf16.msra.mxu0 %v3199
        %3335 = vmatprep.subr.bf16.mxu0 %v3203
        %3336 = vmatpush1.bf16.msra.mxu0 %v3202
        %3337 = vmatprep.subr.bf16.mxu0 %v3206
        %3338 = vmatpush1.bf16.msra.mxu0 %v3205
        %3339 = vmatprep.subr.bf16.mxu0 %v3209
        %3340 = vmatpush1.bf16.msra.mxu0 %v3208
        %3341 = vmatprep.subr.bf16.mxu0 %v3212
        %3342 = vmatpush1.bf16.msra.mxu0 %v3211
        %3343 = vmatprep.subr.bf16.mxu0 %v3215
        %3344 = vmatpush1.bf16.msra.mxu0 %v3214
        %3345 = vmatprep.mubr.bf16.mxu0 %v2793
        %3346 = vmatmul.mubr.bf16.gmra.mrb[0].mxu0 %v2792
        %v3347 = vpop.f32.mrb[0].mxu0
        %v3348 = vadd.f32 %v2917, %v3347
        %v3349 = vpop.f32.mrb[0].mxu0
        %v3350 = vadd.f32 %v2921, %v3349
        %v3351 = vpop.f32.mrb[0].mxu0
        %v3352 = vadd.f32 %v2917, %v3351
        %v3353 = vpop.f32.mrb[0].mxu0
        %v3354 = vadd.f32 %v2921, %v3353
        %3355 = vmatprep.mubr.bf16.mxu0 %v2796
        %3356 = vmatmul.mubr.bf16.gmra.mrb[0].mxu0 %v2795
        %v3357 = vpop.f32.mrb[0].mxu0
        %v3358 = vadd.f32 %v2917, %v3357
        %v3359 = vpop.f32.mrb[0].mxu0
        %v3360 = vadd.f32 %v2921, %v3359
        %v3361 = vpop.f32.mrb[0].mxu0
        %v3362 = vadd.f32 %v2917, %v3361
        %v3363 = vpop.f32.mrb[0].mxu0
        %v3364 = vadd.f32 %v2921, %v3363
        %3365 = vmatprep.mubr.bf16.mxu0 %v2799
        %3366 = vmatmul.mubr.bf16.gmra.mrb[0].mxu0 %v2798
        %v3367 = vpop.f32.mrb[0].mxu0
        %v3368 = vadd.f32 %v2917, %v3367
        %v3369 = vpop.f32.mrb[0].mxu0
        %v3370 = vadd.f32 %v2921, %v3369
        %v3371 = vpop.f32.mrb[0].mxu0
        %v3372 = vadd.f32 %v2917, %v3371
        %v3373 = vpop.f32.mrb[0].mxu0
        %v3374 = vadd.f32 %v2921, %v3373
        %3375 = vmatprep.mubr.bf16.mxu0 %v2802
        %3376 = vmatmul.mubr.bf16.gmra.mrb[0].mxu0 %v2801
        %v3377 = vpop.f32.mrb[0].mxu0
        %v3378 = vadd.f32 %v2917, %v3377
        %v3379 = vpop.f32.mrb[0].mxu0
        %v3380 = vadd.f32 %v2921, %v3379
        %v3381 = vpop.f32.mrb[0].mxu0
        %v3382 = vadd.f32 %v2917, %v3381
        %v3383 = vpop.f32.mrb[0].mxu0
        %v3384 = vadd.f32 %v2921, %v3383
        %3385 = vmatprep.mubr.bf16.mxu0 %v2805
        %3386 = vmatmul.mubr.bf16.gmra.mrb[0].mxu0 %v2804
        %v3387 = vpop.f32.mrb[0].mxu0
        %v3388 = vadd.f32 %v2917, %v3387
        %v3389 = vpop.f32.mrb[0].mxu0
        %v3390 = vadd.f32 %v2921, %v3389
        %v3391 = vpop.f32.mrb[0].mxu0
        %v3392 = vadd.f32 %v2917, %v3391
        %v3393 = vpop.f32.mrb[0].mxu0
        %v3394 = vadd.f32 %v2921, %v3393
        %3395 = vmatprep.mubr.bf16.mxu0 %v2808
        %3396 = vmatmul.mubr.bf16.gmra.mrb[0].mxu0 %v2807
        %v3397 = vpop.f32.mrb[0].mxu0
        %v3398 = vadd.f32 %v2917, %v3397
        %v3399 = vpop.f32.mrb[0].mxu0
        %v3400 = vadd.f32 %v2921, %v3399
        %v3401 = vpop.f32.mrb[0].mxu0
        %v3402 = vadd.f32 %v2917, %v3401
        %v3403 = vpop.f32.mrb[0].mxu0
        %v3404 = vadd.f32 %v2921, %v3403
        %3405 = vmatprep.mubr.bf16.mxu0 %v2811
        %3406 = vmatmul.mubr.bf16.gmra.mrb[0].mxu0 %v2810
        %v3407 = vpop.f32.mrb[0].mxu0
        %v3408 = vadd.f32 %v2917, %v3407
        %v3409 = vpop.f32.mrb[0].mxu0
        %v3410 = vadd.f32 %v2921, %v3409
        %v3411 = vpop.f32.mrb[0].mxu0
        %v3412 = vadd.f32 %v2917, %v3411
        %v3413 = vpop.f32.mrb[0].mxu0
        %v3414 = vadd.f32 %v2921, %v3413
        %3415 = vmatprep.mubr.bf16.mxu0 %v2814
        %3416 = vmatmul.mubr.bf16.gmra.mrb[0].mxu0 %v2813
        %v3417 = vpop.f32.mrb[0].mxu0
        %v3418 = vadd.f32 %v2917, %v3417
        %v3419 = vpop.f32.mrb[0].mxu0
        %v3420 = vadd.f32 %v2921, %v3419
        %v3421 = vpop.f32.mrb[0].mxu0
        %v3422 = vadd.f32 %v2917, %v3421
        %v3423 = vpop.f32.mrb[0].mxu0
        %v3424 = vadd.f32 %v2921, %v3423
        %3425 = vdwg.mxu0
        %3426 = vmatprep.subr.bf16.mxu0 %v3218
        %3427 = vmatpush1.bf16.msra.mxu0 %v3217
        %3428 = vmatprep.subr.bf16.mxu0 %v3221
        %3429 = vmatpush1.bf16.msra.mxu0 %v3220
        %3430 = vmatprep.subr.bf16.mxu0 %v3224
        %3431 = vmatpush1.bf16.msra.mxu0 %v3223
        %3432 = vmatprep.subr.bf16.mxu0 %v3227
        %3433 = vmatpush1.bf16.msra.mxu0 %v3226
        %3434 = vmatprep.subr.bf16.mxu0 %v3230
        %3435 = vmatpush1.bf16.msra.mxu0 %v3229
        %3436 = vmatprep.subr.bf16.mxu0 %v3233
        %3437 = vmatpush1.bf16.msra.mxu0 %v3232
        %3438 = vmatprep.subr.bf16.mxu0 %v3236
        %3439 = vmatpush1.bf16.msra.mxu0 %v3235
        %3440 = vmatprep.subr.bf16.mxu0 %v3239
        %3441 = vmatpush1.bf16.msra.mxu0 %v3238
        %3442 = vmatprep.subr.bf16.mxu0 0
        %3443 = vmatpush1.bf16.msra.mxu0 0
        %3444 = vmatprep.subr.bf16.mxu0 0
        %3445 = vmatpush1.bf16.msra.mxu0 0
        %3446 = vmatprep.subr.bf16.mxu0 0
        %3447 = vmatpush1.bf16.msra.mxu0 0
        %3448 = vmatprep.subr.bf16.mxu0 0
        %3449 = vmatpush1.bf16.msra.mxu0 0
        %3450 = vmatprep.subr.bf16.mxu0 0
        %3451 = vmatpush1.bf16.msra.mxu0 0
        %3452 = vmatprep.subr.bf16.mxu0 0
        %3453 = vmatpush1.bf16.msra.mxu0 0
        %3454 = vmatprep.subr.bf16.mxu0 0
        %3455 = vmatpush1.bf16.msra.mxu0 0
        %3456 = vmatprep.subr.bf16.mxu0 0
        %3457 = vmatpush1.bf16.msra.mxu0 0
        %3458 = vmatprep.mubr.bf16.mxu0 0
        %3459 = vmatmul.mubr.bf16.gmra.mrb[0].mxu0 %v2794
        %v3460 = vpop.f32.mrb[0].mxu0
        %v3461 = vadd.f32 %v3348, %v3460
        %v3462 = vpop.f32.mrb[0].mxu0
        %v3463 = vadd.f32 %v3350, %v3462
        %v3464 = vpop.f32.mrb[0].mxu0
        %v3465 = vadd.f32 %v3352, %v3464
        %v3466 = vpop.f32.mrb[0].mxu0
        %v3467 = vadd.f32 %v3354, %v3466
        %3468 = vmatprep.mubr.bf16.mxu0 0
        %3469 = vmatmul.mubr.bf16.gmra.mrb[0].mxu0 %v2797
        %v3470 = vpop.f32.mrb[0].mxu0
        %v3471 = vadd.f32 %v3358, %v3470
        %v3472 = vpop.f32.mrb[0].mxu0
        %v3473 = vadd.f32 %v3360, %v3472
        %v3474 = vpop.f32.mrb[0].mxu0
        %v3475 = vadd.f32 %v3362, %v3474
        %v3476 = vpop.f32.mrb[0].mxu0
        %v3477 = vadd.f32 %v3364, %v3476
        %3478 = vmatprep.mubr.bf16.mxu0 0
        %3479 = vmatmul.mubr.bf16.gmra.mrb[0].mxu0 %v2800
        %v3480 = vpop.f32.mrb[0].mxu0
        %v3481 = vadd.f32 %v3368, %v3480
        %v3482 = vpop.f32.mrb[0].mxu0
        %v3483 = vadd.f32 %v3370, %v3482
        %v3484 = vpop.f32.mrb[0].mxu0
        %v3485 = vadd.f32 %v3372, %v3484
        %v3486 = vpop.f32.mrb[0].mxu0
        %v3487 = vadd.f32 %v3374, %v3486
        %3488 = vmatprep.mubr.bf16.mxu0 0
        %3489 = vmatmul.mubr.bf16.gmra.mrb[0].mxu0 %v2803
        %v3490 = vpop.f32.mrb[0].mxu0
        %v3491 = vadd.f32 %v3378, %v3490
        %v3492 = vpop.f32.mrb[0].mxu0
        %v3493 = vadd.f32 %v3380, %v3492
        %v3494 = vpop.f32.mrb[0].mxu0
        %v3495 = vadd.f32 %v3382, %v3494
        %v3496 = vpop.f32.mrb[0].mxu0
        %v3497 = vadd.f32 %v3384, %v3496
        %3498 = vmatprep.mubr.bf16.mxu0 0
        %3499 = vmatmul.mubr.bf16.gmra.mrb[0].mxu0 %v2806
        %v3500 = vpop.f32.mrb[0].mxu0
        %v3501 = vadd.f32 %v3388, %v3500
        %v3502 = vpop.f32.mrb[0].mxu0
        %v3503 = vadd.f32 %v3390, %v3502
        %v3504 = vpop.f32.mrb[0].mxu0
        %v3505 = vadd.f32 %v3392, %v3504
        %v3506 = vpop.f32.mrb[0].mxu0
        %v3507 = vadd.f32 %v3394, %v3506
        %3508 = vmatprep.mubr.bf16.mxu0 0
        %3509 = vmatmul.mubr.bf16.gmra.mrb[0].mxu0 %v2809
        %v3510 = vpop.f32.mrb[0].mxu0
        %v3511 = vadd.f32 %v3398, %v3510
        %v3512 = vpop.f32.mrb[0].mxu0
        %v3513 = vadd.f32 %v3400, %v3512
        %v3514 = vpop.f32.mrb[0].mxu0
        %v3515 = vadd.f32 %v3402, %v3514
        %v3516 = vpop.f32.mrb[0].mxu0
        %v3517 = vadd.f32 %v3404, %v3516
        %3518 = vmatprep.mubr.bf16.mxu0 0
        %3519 = vmatmul.mubr.bf16.gmra.mrb[0].mxu0 %v2812
        %v3520 = vpop.f32.mrb[0].mxu0
        %v3521 = vadd.f32 %v3408, %v3520
        %v3522 = vpop.f32.mrb[0].mxu0
        %v3523 = vadd.f32 %v3410, %v3522
        %v3524 = vpop.f32.mrb[0].mxu0
        %v3525 = vadd.f32 %v3412, %v3524
        %v3526 = vpop.f32.mrb[0].mxu0
        %v3527 = vadd.f32 %v3414, %v3526
        %3528 = vmatprep.mubr.bf16.mxu0 0
        %3529 = vmatmul.mubr.bf16.gmra.mrb[0].mxu0 %v2815
        %v3530 = vpop.f32.mrb[0].mxu0
        %v3531 = vadd.f32 %v3418, %v3530
        %v3532 = vpop.f32.mrb[0].mxu0
        %v3533 = vadd.f32 %v3420, %v3532
        %v3534 = vpop.f32.mrb[0].mxu0
        %v3535 = vadd.f32 %v3422, %v3534
        %v3536 = vpop.f32.mrb[0].mxu0
        %v3537 = vadd.f32 %v3424, %v3536
        %3538 = vdwg.mxu0
        %3539 = vmatprep.subr.bf16.mxu0 0
        %3540 = vmatpush1.bf16.msra.mxu0 %v3171
        %3541 = vmatprep.subr.bf16.mxu0 0
        %3542 = vmatpush1.bf16.msra.mxu0 %v3174
        %3543 = vmatprep.subr.bf16.mxu0 0
        %3544 = vmatpush1.bf16.msra.mxu0 %v3177
        %3545 = vmatprep.subr.bf16.mxu0 0
        %3546 = vmatpush1.bf16.msra.mxu0 %v3180
        %3547 = vmatprep.subr.bf16.mxu0 0
        %3548 = vmatpush1.bf16.msra.mxu0 %v3183
        %3549 = vmatprep.subr.bf16.mxu0 0
        %3550 = vmatpush1.bf16.msra.mxu0 %v3186
        %3551 = vmatprep.subr.bf16.mxu0 0
        %3552 = vmatpush1.bf16.msra.mxu0 %v3189
        %3553 = vmatprep.subr.bf16.mxu0 0
        %3554 = vmatpush1.bf16.msra.mxu0 %v3192
        %3555 = vmatprep.subr.bf16.mxu0 0
        %3556 = vmatpush1.bf16.msra.mxu0 %v3195
        %3557 = vmatprep.subr.bf16.mxu0 0
        %3558 = vmatpush1.bf16.msra.mxu0 %v3198
        %3559 = vmatprep.subr.bf16.mxu0 0
        %3560 = vmatpush1.bf16.msra.mxu0 %v3201
        %3561 = vmatprep.subr.bf16.mxu0 0
        %3562 = vmatpush1.bf16.msra.mxu0 %v3204
        %3563 = vmatprep.subr.bf16.mxu0 0
        %3564 = vmatpush1.bf16.msra.mxu0 %v3207
        %3565 = vmatprep.subr.bf16.mxu0 0
        %3566 = vmatpush1.bf16.msra.mxu0 %v3210
        %3567 = vmatprep.subr.bf16.mxu0 0
        %3568 = vmatpush1.bf16.msra.mxu0 %v3213
        %3569 = vmatprep.subr.bf16.mxu0 0
        %3570 = vmatpush1.bf16.msra.mxu0 %v3216
        %3571 = vmatprep.mubr.bf16.mxu0 %v2793
        %3572 = vmatmul.mubr.bf16.gmra.mrb[0].mxu0 %v2792
        %v3573 = vpop.f32.mrb[0].mxu0
        %v3574 = vadd.f32 %v2925, %v3573
        %v3575 = vpop.f32.mrb[0].mxu0
        %v3576 = vpop.f32.mrb[0].mxu0
        %v3577 = vadd.f32 %v2925, %v3576
        %v3578 = vpop.f32.mrb[0].mxu0
        %3579 = vmatprep.mubr.bf16.mxu0 %v2796
        %3580 = vmatmul.mubr.bf16.gmra.mrb[0].mxu0 %v2795
        %v3581 = vpop.f32.mrb[0].mxu0
        %v3582 = vadd.f32 %v2925, %v3581
        %v3583 = vpop.f32.mrb[0].mxu0
        %v3584 = vpop.f32.mrb[0].mxu0
        %v3585 = vadd.f32 %v2925, %v3584
        %v3586 = vpop.f32.mrb[0].mxu0
        %3587 = vmatprep.mubr.bf16.mxu0 %v2799
        %3588 = vmatmul.mubr.bf16.gmra.mrb[0].mxu0 %v2798
        %v3589 = vpop.f32.mrb[0].mxu0
        %v3590 = vadd.f32 %v2925, %v3589
        %v3591 = vpop.f32.mrb[0].mxu0
        %v3592 = vpop.f32.mrb[0].mxu0
        %v3593 = vadd.f32 %v2925, %v3592
        %v3594 = vpop.f32.mrb[0].mxu0
        %3595 = vmatprep.mubr.bf16.mxu0 %v2802
        %3596 = vmatmul.mubr.bf16.gmra.mrb[0].mxu0 %v2801
        %v3597 = vpop.f32.mrb[0].mxu0
        %v3598 = vadd.f32 %v2925, %v3597
        %v3599 = vpop.f32.mrb[0].mxu0
        %v3600 = vpop.f32.mrb[0].mxu0
        %v3601 = vadd.f32 %v2925, %v3600
        %v3602 = vpop.f32.mrb[0].mxu0
        %3603 = vmatprep.mubr.bf16.mxu0 %v2805
        %3604 = vmatmul.mubr.bf16.gmra.mrb[0].mxu0 %v2804
        %v3605 = vpop.f32.mrb[0].mxu0
        %v3606 = vadd.f32 %v2925, %v3605
        %v3607 = vpop.f32.mrb[0].mxu0
        %v3608 = vpop.f32.mrb[0].mxu0
        %v3609 = vadd.f32 %v2925, %v3608
        %v3610 = vpop.f32.mrb[0].mxu0
        %3611 = vmatprep.mubr.bf16.mxu0 %v2808
        %3612 = vmatmul.mubr.bf16.gmra.mrb[0].mxu0 %v2807
        %v3613 = vpop.f32.mrb[0].mxu0
        %v3614 = vadd.f32 %v2925, %v3613
        %v3615 = vpop.f32.mrb[0].mxu0
        %v3616 = vpop.f32.mrb[0].mxu0
        %v3617 = vadd.f32 %v2925, %v3616
        %v3618 = vpop.f32.mrb[0].mxu0
        %3619 = vmatprep.mubr.bf16.mxu0 %v2811
        %3620 = vmatmul.mubr.bf16.gmra.mrb[0].mxu0 %v2810
        %v3621 = vpop.f32.mrb[0].mxu0
        %v3622 = vadd.f32 %v2925, %v3621
        %v3623 = vpop.f32.mrb[0].mxu0
        %v3624 = vpop.f32.mrb[0].mxu0
        %v3625 = vadd.f32 %v2925, %v3624
        %v3626 = vpop.f32.mrb[0].mxu0
        %3627 = vmatprep.mubr.bf16.mxu0 %v2814
        %3628 = vmatmul.mubr.bf16.gmra.mrb[0].mxu0 %v2813
        %v3629 = vpop.f32.mrb[0].mxu0
        %v3630 = vadd.f32 %v2925, %v3629
        %v3631 = vpop.f32.mrb[0].mxu0
        %v3632 = vpop.f32.mrb[0].mxu0
        %v3633 = vadd.f32 %v2925, %v3632
        %v3634 = vpop.f32.mrb[0].mxu0
        %3635 = vdwg.mxu0
        %3636 = vmatprep.subr.bf16.mxu0 0
        %3637 = vmatpush1.bf16.msra.mxu0 %v3219
        %3638 = vmatprep.subr.bf16.mxu0 0
        %3639 = vmatpush1.bf16.msra.mxu0 %v3222
        %3640 = vmatprep.subr.bf16.mxu0 0
        %3641 = vmatpush1.bf16.msra.mxu0 %v3225
        %3642 = vmatprep.subr.bf16.mxu0 0
        %3643 = vmatpush1.bf16.msra.mxu0 %v3228
        %3644 = vmatprep.subr.bf16.mxu0 0
        %3645 = vmatpush1.bf16.msra.mxu0 %v3231
        %3646 = vmatprep.subr.bf16.mxu0 0
        %3647 = vmatpush1.bf16.msra.mxu0 %v3234
        %3648 = vmatprep.subr.bf16.mxu0 0
        %3649 = vmatpush1.bf16.msra.mxu0 %v3237
        %3650 = vmatprep.subr.bf16.mxu0 0
        %3651 = vmatpush1.bf16.msra.mxu0 %v3240
        %3652 = vmatprep.subr.bf16.mxu0 0
        %3653 = vmatpush1.bf16.msra.mxu0 0
        %3654 = vmatprep.subr.bf16.mxu0 0
        %3655 = vmatpush1.bf16.msra.mxu0 0
        %3656 = vmatprep.subr.bf16.mxu0 0
        %3657 = vmatpush1.bf16.msra.mxu0 0
        %3658 = vmatprep.subr.bf16.mxu0 0
        %3659 = vmatpush1.bf16.msra.mxu0 0
        %3660 = vmatprep.subr.bf16.mxu0 0
        %3661 = vmatpush1.bf16.msra.mxu0 0
        %3662 = vmatprep.subr.bf16.mxu0 0
        %3663 = vmatpush1.bf16.msra.mxu0 0
        %3664 = vmatprep.subr.bf16.mxu0 0
        %3665 = vmatpush1.bf16.msra.mxu0 0
        %3666 = vmatprep.subr.bf16.mxu0 0
        %3667 = vmatpush1.bf16.msra.mxu0 0
        %3668 = vmatprep.mubr.bf16.mxu0 0
        %3669 = vmatmul.mubr.bf16.gmra.mrb[0].mxu0 %v2794
        %v3670 = vpop.f32.mrb[0].mxu0
        %v3671 = vadd.f32 %v3574, %v3670
        %v3672 = vpop.f32.mrb[0].mxu0
        %v3673 = vpop.f32.mrb[0].mxu0
        %v3674 = vadd.f32 %v3577, %v3673
        %v3675 = vpop.f32.mrb[0].mxu0
        %3676 = vmatprep.mubr.bf16.mxu0 0
        %3677 = vmatmul.mubr.bf16.gmra.mrb[0].mxu0 %v2797
        %v3678 = vpop.f32.mrb[0].mxu0
        %v3679 = vadd.f32 %v3582, %v3678
        %v3680 = vpop.f32.mrb[0].mxu0
        %v3681 = vpop.f32.mrb[0].mxu0
        %v3682 = vadd.f32 %v3585, %v3681
        %v3683 = vpop.f32.mrb[0].mxu0
        %3684 = vmatprep.mubr.bf16.mxu0 0
        %3685 = vmatmul.mubr.bf16.gmra.mrb[0].mxu0 %v2800
        %v3686 = vpop.f32.mrb[0].mxu0
        %v3687 = vadd.f32 %v3590, %v3686
        %v3688 = vpop.f32.mrb[0].mxu0
        %v3689 = vpop.f32.mrb[0].mxu0
        %v3690 = vadd.f32 %v3593, %v3689
        %v3691 = vpop.f32.mrb[0].mxu0
        %3692 = vmatprep.mubr.bf16.mxu0 0
        %3693 = vmatmul.mubr.bf16.gmra.mrb[0].mxu0 %v2803
        %v3694 = vpop.f32.mrb[0].mxu0
        %v3695 = vadd.f32 %v3598, %v3694
        %v3696 = vpop.f32.mrb[0].mxu0
        %v3697 = vpop.f32.mrb[0].mxu0
        %v3698 = vadd.f32 %v3601, %v3697
        %v3699 = vpop.f32.mrb[0].mxu0
        %3700 = vmatprep.mubr.bf16.mxu0 0
        %3701 = vmatmul.mubr.bf16.gmra.mrb[0].mxu0 %v2806
        %v3702 = vpop.f32.mrb[0].mxu0
        %v3703 = vadd.f32 %v3606, %v3702
        %v3704 = vpop.f32.mrb[0].mxu0
        %v3705 = vpop.f32.mrb[0].mxu0
        %v3706 = vadd.f32 %v3609, %v3705
        %v3707 = vpop.f32.mrb[0].mxu0
        %3708 = vmatprep.mubr.bf16.mxu0 0
        %3709 = vmatmul.mubr.bf16.gmra.mrb[0].mxu0 %v2809
        %v3710 = vpop.f32.mrb[0].mxu0
        %v3711 = vadd.f32 %v3614, %v3710
        %v3712 = vpop.f32.mrb[0].mxu0
        %v3713 = vpop.f32.mrb[0].mxu0
        %v3714 = vadd.f32 %v3617, %v3713
        %v3715 = vpop.f32.mrb[0].mxu0
        %3716 = vmatprep.mubr.bf16.mxu0 0
        %3717 = vmatmul.mubr.bf16.gmra.mrb[0].mxu0 %v2812
        %v3718 = vpop.f32.mrb[0].mxu0
        %v3719 = vadd.f32 %v3622, %v3718
        %v3720 = vpop.f32.mrb[0].mxu0
        %v3721 = vpop.f32.mrb[0].mxu0
        %v3722 = vadd.f32 %v3625, %v3721
        %v3723 = vpop.f32.mrb[0].mxu0
        %3724 = vmatprep.mubr.bf16.mxu0 0
        %3725 = vmatmul.mubr.bf16.gmra.mrb[0].mxu0 %v2815
        %v3726 = vpop.f32.mrb[0].mxu0
        %v3727 = vadd.f32 %v3630, %v3726
        %v3728 = vpop.f32.mrb[0].mxu0
        %v3729 = vpop.f32.mrb[0].mxu0
        %v3730 = vadd.f32 %v3633, %v3729
        %v3731 = vpop.f32.mrb[0].mxu0
        %3732 = vdwg.mxu0
        %v3733 = vmax.f32 %v3461, 0.0
        %v3734 = vmax.f32 %v3463, 0.0
        %v3735 = vmax.f32 %v3671, 0.0
        %v3736 = vmax.f32 %v3465, 0.0
        %v3737 = vmax.f32 %v3467, 0.0
        %v3738 = vmax.f32 %v3674, 0.0
        %v3739 = vmax.f32 %v3471, 0.0
        %v3740 = vmax.f32 %v3473, 0.0
        %v3741 = vmax.f32 %v3679, 0.0
        %v3742 = vmax.f32 %v3475, 0.0
        %v3743 = vmax.f32 %v3477, 0.0
        %v3744 = vmax.f32 %v3682, 0.0
        %v3745 = vmax.f32 %v3481, 0.0
        %v3746 = vmax.f32 %v3483, 0.0
        %v3747 = vmax.f32 %v3687, 0.0
        %v3748 = vmax.f32 %v3485, 0.0
        %v3749 = vmax.f32 %v3487, 0.0
        %v3750 = vmax.f32 %v3690, 0.0
        %v3751 = vmax.f32 %v3491, 0.0
        %v3752 = vmax.f32 %v3493, 0.0
        %v3753 = vmax.f32 %v3695, 0.0
        %v3754 = vmax.f32 %v3495, 0.0
        %v3755 = vmax.f32 %v3497, 0.0
        %v3756 = vmax.f32 %v3698, 0.0
        %v3757 = vmax.f32 %v3501, 0.0
        %v3758 = vmax.f32 %v3503, 0.0
        %v3759 = vmax.f32 %v3703, 0.0
        %v3760 = vmax.f32 %v3505, 0.0
        %v3761 = vmax.f32 %v3507, 0.0
        %v3762 = vmax.f32 %v3706, 0.0
        %v3763 = vmax.f32 %v3511, 0.0
        %v3764 = vmax.f32 %v3513, 0.0
        %v3765 = vmax.f32 %v3711, 0.0
        %v3766 = vmax.f32 %v3515, 0.0
        %v3767 = vmax.f32 %v3517, 0.0
        %v3768 = vmax.f32 %v3714, 0.0
        %v3769 = vmax.f32 %v3521, 0.0
        %v3770 = vmax.f32 %v3523, 0.0
        %v3771 = vmax.f32 %v3719, 0.0
        %v3772 = vmax.f32 %v3525, 0.0
        %v3773 = vmax.f32 %v3527, 0.0
        %v3774 = vmax.f32 %v3722, 0.0
        %v3775 = vmax.f32 %v3531, 0.0
        %v3776 = vmax.f32 %v3533, 0.0
        %v3777 = vmax.f32 %v3727, 0.0
        %v3778 = vmax.f32 %v3535, 0.0
        %v3779 = vmax.f32 %v3537, 0.0
        %v3780 = vmax.f32 %v3730, 0.0
        %v3781 = vpack.c.bf16 %v3736, %v3733
        %v3782 = vpack.c.bf16 %v3737, %v3734
        %v3783 = vpack.c.bf16 %v3738, %v3735
        %v3784 = vpack.c.bf16 %v3742, %v3739
        %v3785 = vpack.c.bf16 %v3743, %v3740
        %v3786 = vpack.c.bf16 %v3744, %v3741
        %v3787 = vpack.c.bf16 %v3748, %v3745
        %v3788 = vpack.c.bf16 %v3749, %v3746
        %v3789 = vpack.c.bf16 %v3750, %v3747
        %v3790 = vpack.c.bf16 %v3754, %v3751
        %v3791 = vpack.c.bf16 %v3755, %v3752
        %v3792 = vpack.c.bf16 %v3756, %v3753
        %v3793 = vpack.c.bf16 %v3760, %v3757
        %v3794 = vpack.c.bf16 %v3761, %v3758
        %v3795 = vpack.c.bf16 %v3762, %v3759
        %v3796 = vpack.c.bf16 %v3766, %v3763
        %v3797 = vpack.c.bf16 %v3767, %v3764
        %v3798 = vpack.c.bf16 %v3768, %v3765
        %v3799 = vpack.c.bf16 %v3772, %v3769
        %v3800 = vpack.c.bf16 %v3773, %v3770
        %v3801 = vpack.c.bf16 %v3774, %v3771
        %v3802 = vpack.c.bf16 %v3778, %v3775
        %v3803 = vpack.c.bf16 %v3779, %v3776
        %v3804 = vpack.c.bf16 %v3780, %v3777
        %v3805 = vld [vmem:[#allocation7] sm:$0xff]
        %v3806 = vld [vmem:[#allocation7 + $0x8] sm:$0xf]
        %v3807 = vld [vmem:[#allocation7 + $0xc] sm:$0xff]
        %v3808 = vld [vmem:[#allocation7 + $0x14] sm:$0xf]
        %v3809 = vld [vmem:[#allocation7 + $0x18] sm:$0xff]
        %v3810 = vld [vmem:[#allocation7 + $0x20] sm:$0xf]
        %v3811 = vld [vmem:[#allocation7 + $0x24] sm:$0xff]
        %v3812 = vld [vmem:[#allocation7 + $0x2c] sm:$0xf]
        %v3813 = vld [vmem:[#allocation7 + $0x30] sm:$0xff]
        %v3814 = vld [vmem:[#allocation7 + $0x38] sm:$0xf]
        %v3815 = vld [vmem:[#allocation7 + $0x3c] sm:$0xff]
        %v3816 = vld [vmem:[#allocation7 + $0x44] sm:$0xf]
        %v3817 = vld [vmem:[#allocation7 + $0x48] sm:$0xff]
        %v3818 = vld [vmem:[#allocation7 + $0x50] sm:$0xf]
        %v3819 = vld [vmem:[#allocation7 + $0x54] sm:$0xff]
        %v3820 = vld [vmem:[#allocation7 + $0x5c] sm:$0xf]
        %v3821 = vld [vmem:[#allocation7 + $0x60] sm:$0xff]
        %v3822 = vld [vmem:[#allocation7 + $0x68] sm:$0xf]
        %v3823 = vld [vmem:[#allocation7 + $0x6c] sm:$0xff]
        %v3824 = vld [vmem:[#allocation7 + $0x74] sm:$0xf]
        %v3825 = vld [vmem:[#allocation7 + $0x78] sm:$0xff]
        %v3826 = vld [vmem:[#allocation7 + $0x80] sm:$0xf]
        %v3827 = vld [vmem:[#allocation7 + $0x84] sm:$0xff]
        %v3828 = vld [vmem:[#allocation7 + $0x8c] sm:$0xf]
        %v3829 = vld [vmem:[#allocation7 + $0x90] sm:$0xff]
        %v3830 = vld [vmem:[#allocation7 + $0x98] sm:$0xf]
        %v3831 = vld [vmem:[#allocation7 + $0x9c] sm:$0xff]
        %v3832 = vld [vmem:[#allocation7 + $0xa4] sm:$0xf]
        %v3833 = vld [vmem:[#allocation7 + $0xa8] sm:$0xff]
        %v3834 = vld [vmem:[#allocation7 + $0xb0] sm:$0xf]
        %v3835 = vld [vmem:[#allocation7 + $0xb4] sm:$0xff]
        %v3836 = vld [vmem:[#allocation7 + $0xbc] sm:$0xf]
        %v3837 = vld [vmem:[#allocation7 + $0xc0] sm:$0xff]
        %v3838 = vld [vmem:[#allocation7 + $0xc8] sm:$0xf]
        %v3839 = vld [vmem:[#allocation7 + $0xcc] sm:$0xff]
        %v3840 = vld [vmem:[#allocation7 + $0xd4] sm:$0xf]
        %v3841 = vld [vmem:[#allocation7 + $0xd8] sm:$0xff]
        %v3842 = vld [vmem:[#allocation7 + $0xe0] sm:$0xf]
        %v3843 = vld [vmem:[#allocation7 + $0xe4] sm:$0xff]
        %v3844 = vld [vmem:[#allocation7 + $0xec] sm:$0xf]
        %v3845 = vld [vmem:[#allocation7 + $0xf0] sm:$0xff]
        %v3846 = vld [vmem:[#allocation7 + $0xf8] sm:$0xf]
        %v3847 = vld [vmem:[#allocation7 + $0xfc] sm:$0xff]
        %v3848 = vld [vmem:[#allocation7 + $0x104] sm:$0xf]
        %v3849 = vld [vmem:[#allocation7 + $0x108] sm:$0xff]
        %v3850 = vld [vmem:[#allocation7 + $0x110] sm:$0xf]
        %v3851 = vld [vmem:[#allocation7 + $0x114] sm:$0xff]
        %v3852 = vld [vmem:[#allocation7 + $0x11c] sm:$0xf]
        %v3853 = vld [vmem:[#allocation7 + $0x120] sm:$0xff]
        %v3854 = vld [vmem:[#allocation7 + $0x128] sm:$0xf]
        %v3855 = vld [vmem:[#allocation7 + $0x12c] sm:$0xff]
        %v3856 = vld [vmem:[#allocation7 + $0x134] sm:$0xf]
        %v3857 = vld [vmem:[#allocation7 + $0x138] sm:$0xff]
        %v3858 = vld [vmem:[#allocation7 + $0x140] sm:$0xf]
        %v3859 = vld [vmem:[#allocation7 + $0x144] sm:$0xff]
        %v3860 = vld [vmem:[#allocation7 + $0x14c] sm:$0xf]
        %v3861 = vld [vmem:[#allocation7 + $0x150] sm:$0xff]
        %v3862 = vld [vmem:[#allocation7 + $0x158] sm:$0xf]
        %v3863 = vld [vmem:[#allocation7 + $0x15c] sm:$0xff]
        %v3864 = vld [vmem:[#allocation7 + $0x164] sm:$0xf]
        %v3865 = vld [vmem:[#allocation7 + $0x168] sm:$0xff]
        %v3866 = vld [vmem:[#allocation7 + $0x170] sm:$0xf]
        %v3867 = vld [vmem:[#allocation7 + $0x174] sm:$0xff]
        %v3868 = vld [vmem:[#allocation7 + $0x17c] sm:$0xf]
        %v3869 = vld [vmem:[#allocation7 + $0x180] sm:$0xff]
        %v3870 = vld [vmem:[#allocation7 + $0x188] sm:$0xf]
        %v3871 = vld [vmem:[#allocation7 + $0x18c] sm:$0xff]
        %v3872 = vld [vmem:[#allocation7 + $0x194] sm:$0xf]
        %v3873 = vld [vmem:[#allocation7 + $0x198] sm:$0xff]
        %v3874 = vld [vmem:[#allocation7 + $0x1a0] sm:$0xf]
        %v3875 = vld [vmem:[#allocation7 + $0x1a4] sm:$0xff]
        %v3876 = vld [vmem:[#allocation7 + $0x1ac] sm:$0xf]
        %v3877 = vld [vmem:[#allocation7 + $0x1b0] sm:$0xff]
        %v3878 = vld [vmem:[#allocation7 + $0x1b8] sm:$0xf]
        %v3879 = vld [vmem:[#allocation7 + $0x1bc] sm:$0xff]
        %v3880 = vld [vmem:[#allocation7 + $0x1c4] sm:$0xf]
        %v3881 = vld [vmem:[#allocation7 + $0x1c8] sm:$0xff]
        %v3882 = vld [vmem:[#allocation7 + $0x1d0] sm:$0xf]
        %v3883 = vld [vmem:[#allocation7 + $0x1d4] sm:$0xff]
        %v3884 = vld [vmem:[#allocation7 + $0x1dc] sm:$0xf]
        %v3885 = vld [vmem:[#allocation7 + $0x1e0] sm:$0xff]
        %v3886 = vld [vmem:[#allocation7 + $0x1e8] sm:$0xf]
        %v3887 = vld [vmem:[#allocation7 + $0x1ec] sm:$0xff]
        %v3888 = vld [vmem:[#allocation7 + $0x1f4] sm:$0xf]
        %v3889 = vld [vmem:[#allocation7 + $0x1f8] sm:$0xff]
        %v3890 = vld [vmem:[#allocation7 + $0x200] sm:$0xf]
        %v3891 = vld [vmem:[#allocation7 + $0x204] sm:$0xff]
        %v3892 = vld [vmem:[#allocation7 + $0x20c] sm:$0xf]
        %v3893 = vld [vmem:[#allocation7 + $0x210] sm:$0xff]
        %v3894 = vld [vmem:[#allocation7 + $0x218] sm:$0xf]
        %v3895 = vld [vmem:[#allocation7 + $0x21c] sm:$0xff]
        %v3896 = vld [vmem:[#allocation7 + $0x224] sm:$0xf]
        %v3897 = vld [vmem:[#allocation7 + $0x228] sm:$0xff]
        %v3898 = vld [vmem:[#allocation7 + $0x230] sm:$0xf]
        %v3899 = vld [vmem:[#allocation7 + $0x234] sm:$0xff]
        %v3900 = vld [vmem:[#allocation7 + $0x23c] sm:$0xf]
        %v3901 = vld [vmem:[%s6] sm:$0x7]
        %v3903 = vlaneseq
        %v3904 = vshrl.u32 %v3903, 7
        %v3905 = vsub.s32 0, %v3904
        %v3906 = vrot.slane %v3901, %v3905
        %v3907 = vlaneseq
        %v3908 = vshrl.u32 %v3907, 7
        %v3909 = vsub.s32 1, %v3908
        %v3910 = vrot.slane %v3901, %v3909
        %v3911 = vlaneseq
        %v3912 = vshrl.u32 %v3911, 7
        %v3913 = vsub.s32 2, %v3912
        %v3914 = vrot.slane %v3901, %v3913
        %v4014 = vunpack.c.l.b16 %v3805
        %v4015 = vunpack.c.h.b16 %v3805
        %v4016 = vunpack.c.l.b16 %v3806
        %v4017 = vunpack.c.l.b16 %v3807
        %v4018 = vunpack.c.h.b16 %v3807
        %v4019 = vunpack.c.l.b16 %v3808
        %v4020 = vunpack.c.l.b16 %v3809
        %v4021 = vunpack.c.h.b16 %v3809
        %v4022 = vunpack.c.l.b16 %v3810
        %v4023 = vunpack.c.l.b16 %v3811
        %v4024 = vunpack.c.h.b16 %v3811
        %v4025 = vunpack.c.l.b16 %v3812
        %v4026 = vunpack.c.l.b16 %v3813
        %v4027 = vunpack.c.h.b16 %v3813
        %v4028 = vunpack.c.l.b16 %v3814
        %v4029 = vunpack.c.l.b16 %v3815
        %v4030 = vunpack.c.h.b16 %v3815
        %v4031 = vunpack.c.l.b16 %v3816
        %v4032 = vunpack.c.l.b16 %v3817
        %v4033 = vunpack.c.h.b16 %v3817
        %v4034 = vunpack.c.l.b16 %v3818
        %v4035 = vunpack.c.l.b16 %v3819
        %v4036 = vunpack.c.h.b16 %v3819
        %v4037 = vunpack.c.l.b16 %v3820
        %v4038 = vunpack.c.l.b16 %v3821
        %v4039 = vunpack.c.h.b16 %v3821
        %v4040 = vunpack.c.l.b16 %v3822
        %v4041 = vunpack.c.l.b16 %v3823
        %v4042 = vunpack.c.h.b16 %v3823
        %v4043 = vunpack.c.l.b16 %v3824
        %v4044 = vunpack.c.l.b16 %v3825
        %v4045 = vunpack.c.h.b16 %v3825
        %v4046 = vunpack.c.l.b16 %v3826
        %v4047 = vunpack.c.l.b16 %v3827
        %v4048 = vunpack.c.h.b16 %v3827
        %v4049 = vunpack.c.l.b16 %v3828
        %v4050 = vunpack.c.l.b16 %v3829
        %v4051 = vunpack.c.h.b16 %v3829
        %v4052 = vunpack.c.l.b16 %v3830
        %v4053 = vunpack.c.l.b16 %v3831
        %v4054 = vunpack.c.h.b16 %v3831
        %v4055 = vunpack.c.l.b16 %v3832
        %v4056 = vunpack.c.l.b16 %v3833
        %v4057 = vunpack.c.h.b16 %v3833
        %v4058 = vunpack.c.l.b16 %v3834
        %v4059 = vunpack.c.l.b16 %v3835
        %v4060 = vunpack.c.h.b16 %v3835
        %v4061 = vunpack.c.l.b16 %v3836
        %v4062 = vunpack.c.l.b16 %v3837
        %v4063 = vunpack.c.h.b16 %v3837
        %v4064 = vunpack.c.l.b16 %v3838
        %v4065 = vunpack.c.l.b16 %v3839
        %v4066 = vunpack.c.h.b16 %v3839
        %v4067 = vunpack.c.l.b16 %v3840
        %v4068 = vunpack.c.l.b16 %v3841
        %v4069 = vunpack.c.h.b16 %v3841
        %v4070 = vunpack.c.l.b16 %v3842
        %v4071 = vunpack.c.l.b16 %v3843
        %v4072 = vunpack.c.h.b16 %v3843
        %v4073 = vunpack.c.l.b16 %v3844
        %v4074 = vunpack.c.l.b16 %v3845
        %v4075 = vunpack.c.h.b16 %v3845
        %v4076 = vunpack.c.l.b16 %v3846
        %v4077 = vunpack.c.l.b16 %v3847
        %v4078 = vunpack.c.h.b16 %v3847
        %v4079 = vunpack.c.l.b16 %v3848
        %v4080 = vunpack.c.l.b16 %v3849
        %v4081 = vunpack.c.h.b16 %v3849
        %v4082 = vunpack.c.l.b16 %v3850
        %v4083 = vunpack.c.l.b16 %v3851
        %v4084 = vunpack.c.h.b16 %v3851
        %v4085 = vunpack.c.l.b16 %v3852
        %v4086 = vunpack.c.l.b16 %v3853
        %v4087 = vunpack.c.h.b16 %v3853
        %v4088 = vunpack.c.l.b16 %v3854
        %v4089 = vunpack.c.l.b16 %v3855
        %v4090 = vunpack.c.h.b16 %v3855
        %v4091 = vunpack.c.l.b16 %v3856
        %v4092 = vunpack.c.l.b16 %v3857
        %v4093 = vunpack.c.h.b16 %v3857
        %v4094 = vunpack.c.l.b16 %v3858
        %v4095 = vunpack.c.l.b16 %v3859
        %v4096 = vunpack.c.h.b16 %v3859
        %v4097 = vunpack.c.l.b16 %v3860
        %v4098 = vunpack.c.l.b16 %v3861
        %v4099 = vunpack.c.h.b16 %v3861
        %v4100 = vunpack.c.l.b16 %v3862
        %v4101 = vunpack.c.l.b16 %v3863
        %v4102 = vunpack.c.h.b16 %v3863
        %v4103 = vunpack.c.l.b16 %v3864
        %v4104 = vunpack.c.l.b16 %v3865
        %v4105 = vunpack.c.h.b16 %v3865
        %v4106 = vunpack.c.l.b16 %v3866
        %v4107 = vunpack.c.l.b16 %v3867
        %v4108 = vunpack.c.h.b16 %v3867
        %v4109 = vunpack.c.l.b16 %v3868
        %v4110 = vunpack.c.l.b16 %v3869
        %v4111 = vunpack.c.h.b16 %v3869
        %v4112 = vunpack.c.l.b16 %v3870
        %v4113 = vunpack.c.l.b16 %v3871
        %v4114 = vunpack.c.h.b16 %v3871
        %v4115 = vunpack.c.l.b16 %v3872
        %v4116 = vunpack.c.l.b16 %v3873
        %v4117 = vunpack.c.h.b16 %v3873
        %v4118 = vunpack.c.l.b16 %v3874
        %v4119 = vunpack.c.l.b16 %v3875
        %v4120 = vunpack.c.h.b16 %v3875
        %v4121 = vunpack.c.l.b16 %v3876
        %v4122 = vunpack.c.l.b16 %v3877
        %v4123 = vunpack.c.h.b16 %v3877
        %v4124 = vunpack.c.l.b16 %v3878
        %v4125 = vunpack.c.l.b16 %v3879
        %v4126 = vunpack.c.h.b16 %v3879
        %v4127 = vunpack.c.l.b16 %v3880
        %v4128 = vunpack.c.l.b16 %v3881
        %v4129 = vunpack.c.h.b16 %v3881
        %v4130 = vunpack.c.l.b16 %v3882
        %v4131 = vunpack.c.l.b16 %v3883
        %v4132 = vunpack.c.h.b16 %v3883
        %v4133 = vunpack.c.l.b16 %v3884
        %v4134 = vunpack.c.l.b16 %v3885
        %v4135 = vunpack.c.h.b16 %v3885
        %v4136 = vunpack.c.l.b16 %v3886
        %v4137 = vunpack.c.l.b16 %v3887
        %v4138 = vunpack.c.h.b16 %v3887
        %v4139 = vunpack.c.l.b16 %v3888
        %v4140 = vunpack.c.l.b16 %v3889
        %v4141 = vunpack.c.h.b16 %v3889
        %v4142 = vunpack.c.l.b16 %v3890
        %v4143 = vunpack.c.l.b16 %v3891
        %v4144 = vunpack.c.h.b16 %v3891
        %v4145 = vunpack.c.l.b16 %v3892
        %v4146 = vunpack.c.l.b16 %v3893
        %v4147 = vunpack.c.h.b16 %v3893
        %v4148 = vunpack.c.l.b16 %v3894
        %v4149 = vunpack.c.l.b16 %v3895
        %v4150 = vunpack.c.h.b16 %v3895
        %v4151 = vunpack.c.l.b16 %v3896
        %v4152 = vunpack.c.l.b16 %v3897
        %v4153 = vunpack.c.h.b16 %v3897
        %v4154 = vunpack.c.l.b16 %v3898
        %v4155 = vunpack.c.l.b16 %v3899
        %v4156 = vunpack.c.h.b16 %v3899
        %v4157 = vunpack.c.l.b16 %v3900
        %v4158 = vpack.c.b16 %v4017, %v4014
        %v4159 = vpack.c.b16 %v4018, %v4015
        %v4160 = vpack.c.b16 %v4019, %v4016
        %v4161 = vpack.c.b16 %v4023, %v4020
        %v4162 = vpack.c.b16 %v4024, %v4021
        %v4163 = vpack.c.b16 %v4025, %v4022
        %v4164 = vpack.c.b16 %v4029, %v4026
        %v4165 = vpack.c.b16 %v4030, %v4027
        %v4166 = vpack.c.b16 %v4031, %v4028
        %v4167 = vpack.c.b16 %v4035, %v4032
        %v4168 = vpack.c.b16 %v4036, %v4033
        %v4169 = vpack.c.b16 %v4037, %v4034
        %v4170 = vpack.c.b16 %v4041, %v4038
        %v4171 = vpack.c.b16 %v4042, %v4039
        %v4172 = vpack.c.b16 %v4043, %v4040
        %v4173 = vpack.c.b16 %v4047, %v4044
        %v4174 = vpack.c.b16 %v4048, %v4045
        %v4175 = vpack.c.b16 %v4049, %v4046
        %v4176 = vpack.c.b16 %v4053, %v4050
        %v4177 = vpack.c.b16 %v4054, %v4051
        %v4178 = vpack.c.b16 %v4055, %v4052
        %v4179 = vpack.c.b16 %v4059, %v4056
        %v4180 = vpack.c.b16 %v4060, %v4057
        %v4181 = vpack.c.b16 %v4061, %v4058
        %v4182 = vpack.c.b16 %v4065, %v4062
        %v4183 = vpack.c.b16 %v4066, %v4063
        %v4184 = vpack.c.b16 %v4067, %v4064
        %v4185 = vpack.c.b16 %v4071, %v4068
        %v4186 = vpack.c.b16 %v4072, %v4069
        %v4187 = vpack.c.b16 %v4073, %v4070
        %v4188 = vpack.c.b16 %v4077, %v4074
        %v4189 = vpack.c.b16 %v4078, %v4075
        %v4190 = vpack.c.b16 %v4079, %v4076
        %v4191 = vpack.c.b16 %v4083, %v4080
        %v4192 = vpack.c.b16 %v4084, %v4081
        %v4193 = vpack.c.b16 %v4085, %v4082
        %v4194 = vpack.c.b16 %v4089, %v4086
        %v4195 = vpack.c.b16 %v4090, %v4087
        %v4196 = vpack.c.b16 %v4091, %v4088
        %v4197 = vpack.c.b16 %v4095, %v4092
        %v4198 = vpack.c.b16 %v4096, %v4093
        %v4199 = vpack.c.b16 %v4097, %v4094
        %v4200 = vpack.c.b16 %v4101, %v4098
        %v4201 = vpack.c.b16 %v4102, %v4099
        %v4202 = vpack.c.b16 %v4103, %v4100
        %v4203 = vpack.c.b16 %v4107, %v4104
        %v4204 = vpack.c.b16 %v4108, %v4105
        %v4205 = vpack.c.b16 %v4109, %v4106
        %v4206 = vpack.c.b16 %v4113, %v4110
        %v4207 = vpack.c.b16 %v4114, %v4111
        %v4208 = vpack.c.b16 %v4115, %v4112
        %v4209 = vpack.c.b16 %v4119, %v4116
        %v4210 = vpack.c.b16 %v4120, %v4117
        %v4211 = vpack.c.b16 %v4121, %v4118
        %v4212 = vpack.c.b16 %v4125, %v4122
        %v4213 = vpack.c.b16 %v4126, %v4123
        %v4214 = vpack.c.b16 %v4127, %v4124
        %v4215 = vpack.c.b16 %v4131, %v4128
        %v4216 = vpack.c.b16 %v4132, %v4129
        %v4217 = vpack.c.b16 %v4133, %v4130
        %v4218 = vpack.c.b16 %v4137, %v4134
        %v4219 = vpack.c.b16 %v4138, %v4135
        %v4220 = vpack.c.b16 %v4139, %v4136
        %v4221 = vpack.c.b16 %v4143, %v4140
        %v4222 = vpack.c.b16 %v4144, %v4141
        %v4223 = vpack.c.b16 %v4145, %v4142
        %v4224 = vpack.c.b16 %v4149, %v4146
        %v4225 = vpack.c.b16 %v4150, %v4147
        %v4226 = vpack.c.b16 %v4151, %v4148
        %v4227 = vpack.c.b16 %v4155, %v4152
        %v4228 = vpack.c.b16 %v4156, %v4153
        %v4229 = vpack.c.b16 %v4157, %v4154
        %4302 = vmatprep.subr.bf16.mxu0 %v4159
        %4303 = vmatpush1.bf16.msra.mxu0 %v4158
        %4304 = vmatprep.subr.bf16.mxu0 %v4162
        %4305 = vmatpush1.bf16.msra.mxu0 %v4161
        %4306 = vmatprep.subr.bf16.mxu0 %v4165
        %4307 = vmatpush1.bf16.msra.mxu0 %v4164
        %4308 = vmatprep.subr.bf16.mxu0 %v4168
        %4309 = vmatpush1.bf16.msra.mxu0 %v4167
        %4310 = vmatprep.subr.bf16.mxu0 %v4171
        %4311 = vmatpush1.bf16.msra.mxu0 %v4170
        %4312 = vmatprep.subr.bf16.mxu0 %v4174
        %4313 = vmatpush1.bf16.msra.mxu0 %v4173
        %4314 = vmatprep.subr.bf16.mxu0 %v4177
        %4315 = vmatpush1.bf16.msra.mxu0 %v4176
        %4316 = vmatprep.subr.bf16.mxu0 %v4180
        %4317 = vmatpush1.bf16.msra.mxu0 %v4179
        %4318 = vmatprep.subr.bf16.mxu0 %v4183
        %4319 = vmatpush1.bf16.msra.mxu0 %v4182
        %4320 = vmatprep.subr.bf16.mxu0 %v4186
        %4321 = vmatpush1.bf16.msra.mxu0 %v4185
        %4322 = vmatprep.subr.bf16.mxu0 %v4189
        %4323 = vmatpush1.bf16.msra.mxu0 %v4188
        %4324 = vmatprep.subr.bf16.mxu0 %v4192
        %4325 = vmatpush1.bf16.msra.mxu0 %v4191
        %4326 = vmatprep.subr.bf16.mxu0 %v4195
        %4327 = vmatpush1.bf16.msra.mxu0 %v4194
        %4328 = vmatprep.subr.bf16.mxu0 %v4198
        %4329 = vmatpush1.bf16.msra.mxu0 %v4197
        %4330 = vmatprep.subr.bf16.mxu0 %v4201
        %4331 = vmatpush1.bf16.msra.mxu0 %v4200
        %4332 = vmatprep.subr.bf16.mxu0 %v4204
        %4333 = vmatpush1.bf16.msra.mxu0 %v4203
        %4334 = vmatprep.mubr.bf16.mxu0 %v3782
        %4335 = vmatmul.mubr.bf16.gmra.mrb[0].mxu0 %v3781
        %v4336 = vpop.f32.mrb[0].mxu0
        %v4337 = vadd.f32 %v3906, %v4336
        %v4338 = vpop.f32.mrb[0].mxu0
        %v4339 = vadd.f32 %v3910, %v4338
        %v4340 = vpop.f32.mrb[0].mxu0
        %v4341 = vadd.f32 %v3906, %v4340
        %v4342 = vpop.f32.mrb[0].mxu0
        %v4343 = vadd.f32 %v3910, %v4342
        %4344 = vmatprep.mubr.bf16.mxu0 %v3785
        %4345 = vmatmul.mubr.bf16.gmra.mrb[0].mxu0 %v3784
        %v4346 = vpop.f32.mrb[0].mxu0
        %v4347 = vadd.f32 %v3906, %v4346
        %v4348 = vpop.f32.mrb[0].mxu0
        %v4349 = vadd.f32 %v3910, %v4348
        %v4350 = vpop.f32.mrb[0].mxu0
        %v4351 = vadd.f32 %v3906, %v4350
        %v4352 = vpop.f32.mrb[0].mxu0
        %v4353 = vadd.f32 %v3910, %v4352
        %4354 = vmatprep.mubr.bf16.mxu0 %v3788
        %4355 = vmatmul.mubr.bf16.gmra.mrb[0].mxu0 %v3787
        %v4356 = vpop.f32.mrb[0].mxu0
        %v4357 = vadd.f32 %v3906, %v4356
        %v4358 = vpop.f32.mrb[0].mxu0
        %v4359 = vadd.f32 %v3910, %v4358
        %v4360 = vpop.f32.mrb[0].mxu0
        %v4361 = vadd.f32 %v3906, %v4360
        %v4362 = vpop.f32.mrb[0].mxu0
        %v4363 = vadd.f32 %v3910, %v4362
        %4364 = vmatprep.mubr.bf16.mxu0 %v3791
        %4365 = vmatmul.mubr.bf16.gmra.mrb[0].mxu0 %v3790
        %v4366 = vpop.f32.mrb[0].mxu0
        %v4367 = vadd.f32 %v3906, %v4366
        %v4368 = vpop.f32.mrb[0].mxu0
        %v4369 = vadd.f32 %v3910, %v4368
        %v4370 = vpop.f32.mrb[0].mxu0
        %v4371 = vadd.f32 %v3906, %v4370
        %v4372 = vpop.f32.mrb[0].mxu0
        %v4373 = vadd.f32 %v3910, %v4372
        %4374 = vmatprep.mubr.bf16.mxu0 %v3794
        %4375 = vmatmul.mubr.bf16.gmra.mrb[0].mxu0 %v3793
        %v4376 = vpop.f32.mrb[0].mxu0
        %v4377 = vadd.f32 %v3906, %v4376
        %v4378 = vpop.f32.mrb[0].mxu0
        %v4379 = vadd.f32 %v3910, %v4378
        %v4380 = vpop.f32.mrb[0].mxu0
        %v4381 = vadd.f32 %v3906, %v4380
        %v4382 = vpop.f32.mrb[0].mxu0
        %v4383 = vadd.f32 %v3910, %v4382
        %4384 = vmatprep.mubr.bf16.mxu0 %v3797
        %4385 = vmatmul.mubr.bf16.gmra.mrb[0].mxu0 %v3796
        %v4386 = vpop.f32.mrb[0].mxu0
        %v4387 = vadd.f32 %v3906, %v4386
        %v4388 = vpop.f32.mrb[0].mxu0
        %v4389 = vadd.f32 %v3910, %v4388
        %v4390 = vpop.f32.mrb[0].mxu0
        %v4391 = vadd.f32 %v3906, %v4390
        %v4392 = vpop.f32.mrb[0].mxu0
        %v4393 = vadd.f32 %v3910, %v4392
        %4394 = vmatprep.mubr.bf16.mxu0 %v3800
        %4395 = vmatmul.mubr.bf16.gmra.mrb[0].mxu0 %v3799
        %v4396 = vpop.f32.mrb[0].mxu0
        %v4397 = vadd.f32 %v3906, %v4396
        %v4398 = vpop.f32.mrb[0].mxu0
        %v4399 = vadd.f32 %v3910, %v4398
        %v4400 = vpop.f32.mrb[0].mxu0
        %v4401 = vadd.f32 %v3906, %v4400
        %v4402 = vpop.f32.mrb[0].mxu0
        %v4403 = vadd.f32 %v3910, %v4402
        %4404 = vmatprep.mubr.bf16.mxu0 %v3803
        %4405 = vmatmul.mubr.bf16.gmra.mrb[0].mxu0 %v3802
        %v4406 = vpop.f32.mrb[0].mxu0
        %v4407 = vadd.f32 %v3906, %v4406
        %v4408 = vpop.f32.mrb[0].mxu0
        %v4409 = vadd.f32 %v3910, %v4408
        %v4410 = vpop.f32.mrb[0].mxu0
        %v4411 = vadd.f32 %v3906, %v4410
        %v4412 = vpop.f32.mrb[0].mxu0
        %v4413 = vadd.f32 %v3910, %v4412
        %4414 = vdwg.mxu0
        %4415 = vmatprep.subr.bf16.mxu0 %v4207
        %4416 = vmatpush1.bf16.msra.mxu0 %v4206
        %4417 = vmatprep.subr.bf16.mxu0 %v4210
        %4418 = vmatpush1.bf16.msra.mxu0 %v4209
        %4419 = vmatprep.subr.bf16.mxu0 %v4213
        %4420 = vmatpush1.bf16.msra.mxu0 %v4212
        %4421 = vmatprep.subr.bf16.mxu0 %v4216
        %4422 = vmatpush1.bf16.msra.mxu0 %v4215
        %4423 = vmatprep.subr.bf16.mxu0 %v4219
        %4424 = vmatpush1.bf16.msra.mxu0 %v4218
        %4425 = vmatprep.subr.bf16.mxu0 %v4222
        %4426 = vmatpush1.bf16.msra.mxu0 %v4221
        %4427 = vmatprep.subr.bf16.mxu0 %v4225
        %4428 = vmatpush1.bf16.msra.mxu0 %v4224
        %4429 = vmatprep.subr.bf16.mxu0 %v4228
        %4430 = vmatpush1.bf16.msra.mxu0 %v4227
        %4431 = vmatprep.subr.bf16.mxu0 0
        %4432 = vmatpush1.bf16.msra.mxu0 0
        %4433 = vmatprep.subr.bf16.mxu0 0
        %4434 = vmatpush1.bf16.msra.mxu0 0
        %4435 = vmatprep.subr.bf16.mxu0 0
        %4436 = vmatpush1.bf16.msra.mxu0 0
        %4437 = vmatprep.subr.bf16.mxu0 0
        %4438 = vmatpush1.bf16.msra.mxu0 0
        %4439 = vmatprep.subr.bf16.mxu0 0
        %4440 = vmatpush1.bf16.msra.mxu0 0
        %4441 = vmatprep.subr.bf16.mxu0 0
        %4442 = vmatpush1.bf16.msra.mxu0 0
        %4443 = vmatprep.subr.bf16.mxu0 0
        %4444 = vmatpush1.bf16.msra.mxu0 0
        %4445 = vmatprep.subr.bf16.mxu0 0
        %4446 = vmatpush1.bf16.msra.mxu0 0
        %4447 = vmatprep.mubr.bf16.mxu0 0
        %4448 = vmatmul.mubr.bf16.gmra.mrb[0].mxu0 %v3783
        %v4449 = vpop.f32.mrb[0].mxu0
        %v4450 = vadd.f32 %v4337, %v4449
        %v4451 = vpop.f32.mrb[0].mxu0
        %v4452 = vadd.f32 %v4339, %v4451
        %v4453 = vpop.f32.mrb[0].mxu0
        %v4454 = vadd.f32 %v4341, %v4453
        %v4455 = vpop.f32.mrb[0].mxu0
        %v4456 = vadd.f32 %v4343, %v4455
        %4457 = vmatprep.mubr.bf16.mxu0 0
        %4458 = vmatmul.mubr.bf16.gmra.mrb[0].mxu0 %v3786
        %v4459 = vpop.f32.mrb[0].mxu0
        %v4460 = vadd.f32 %v4347, %v4459
        %v4461 = vpop.f32.mrb[0].mxu0
        %v4462 = vadd.f32 %v4349, %v4461
        %v4463 = vpop.f32.mrb[0].mxu0
        %v4464 = vadd.f32 %v4351, %v4463
        %v4465 = vpop.f32.mrb[0].mxu0
        %v4466 = vadd.f32 %v4353, %v4465
        %4467 = vmatprep.mubr.bf16.mxu0 0
        %4468 = vmatmul.mubr.bf16.gmra.mrb[0].mxu0 %v3789
        %v4469 = vpop.f32.mrb[0].mxu0
        %v4470 = vadd.f32 %v4357, %v4469
        %v4471 = vpop.f32.mrb[0].mxu0
        %v4472 = vadd.f32 %v4359, %v4471
        %v4473 = vpop.f32.mrb[0].mxu0
        %v4474 = vadd.f32 %v4361, %v4473
        %v4475 = vpop.f32.mrb[0].mxu0
        %v4476 = vadd.f32 %v4363, %v4475
        %4477 = vmatprep.mubr.bf16.mxu0 0
        %4478 = vmatmul.mubr.bf16.gmra.mrb[0].mxu0 %v3792
        %v4479 = vpop.f32.mrb[0].mxu0
        %v4480 = vadd.f32 %v4367, %v4479
        %v4481 = vpop.f32.mrb[0].mxu0
        %v4482 = vadd.f32 %v4369, %v4481
        %v4483 = vpop.f32.mrb[0].mxu0
        %v4484 = vadd.f32 %v4371, %v4483
        %v4485 = vpop.f32.mrb[0].mxu0
        %v4486 = vadd.f32 %v4373, %v4485
        %4487 = vmatprep.mubr.bf16.mxu0 0
        %4488 = vmatmul.mubr.bf16.gmra.mrb[0].mxu0 %v3795
        %v4489 = vpop.f32.mrb[0].mxu0
        %v4490 = vadd.f32 %v4377, %v4489
        %v4491 = vpop.f32.mrb[0].mxu0
        %v4492 = vadd.f32 %v4379, %v4491
        %v4493 = vpop.f32.mrb[0].mxu0
        %v4494 = vadd.f32 %v4381, %v4493
        %v4495 = vpop.f32.mrb[0].mxu0
        %v4496 = vadd.f32 %v4383, %v4495
        %4497 = vmatprep.mubr.bf16.mxu0 0
        %4498 = vmatmul.mubr.bf16.gmra.mrb[0].mxu0 %v3798
        %v4499 = vpop.f32.mrb[0].mxu0
        %v4500 = vadd.f32 %v4387, %v4499
        %v4501 = vpop.f32.mrb[0].mxu0
        %v4502 = vadd.f32 %v4389, %v4501
        %v4503 = vpop.f32.mrb[0].mxu0
        %v4504 = vadd.f32 %v4391, %v4503
        %v4505 = vpop.f32.mrb[0].mxu0
        %v4506 = vadd.f32 %v4393, %v4505
        %4507 = vmatprep.mubr.bf16.mxu0 0
        %4508 = vmatmul.mubr.bf16.gmra.mrb[0].mxu0 %v3801
        %v4509 = vpop.f32.mrb[0].mxu0
        %v4510 = vadd.f32 %v4397, %v4509
        %v4511 = vpop.f32.mrb[0].mxu0
        %v4512 = vadd.f32 %v4399, %v4511
        %v4513 = vpop.f32.mrb[0].mxu0
        %v4514 = vadd.f32 %v4401, %v4513
        %v4515 = vpop.f32.mrb[0].mxu0
        %v4516 = vadd.f32 %v4403, %v4515
        %4517 = vmatprep.mubr.bf16.mxu0 0
        %4518 = vmatmul.mubr.bf16.gmra.mrb[0].mxu0 %v3804
        %v4519 = vpop.f32.mrb[0].mxu0
        %v4520 = vadd.f32 %v4407, %v4519
        %v4521 = vpop.f32.mrb[0].mxu0
        %v4522 = vadd.f32 %v4409, %v4521
        %v4523 = vpop.f32.mrb[0].mxu0
        %v4524 = vadd.f32 %v4411, %v4523
        %v4525 = vpop.f32.mrb[0].mxu0
        %v4526 = vadd.f32 %v4413, %v4525
        %4527 = vdwg.mxu0
        %4528 = vmatprep.subr.bf16.mxu0 0
        %4529 = vmatpush1.bf16.msra.mxu0 %v4160
        %4530 = vmatprep.subr.bf16.mxu0 0
        %4531 = vmatpush1.bf16.msra.mxu0 %v4163
        %4532 = vmatprep.subr.bf16.mxu0 0
        %4533 = vmatpush1.bf16.msra.mxu0 %v4166
        %4534 = vmatprep.subr.bf16.mxu0 0
        %4535 = vmatpush1.bf16.msra.mxu0 %v4169
        %4536 = vmatprep.subr.bf16.mxu0 0
        %4537 = vmatpush1.bf16.msra.mxu0 %v4172
        %4538 = vmatprep.subr.bf16.mxu0 0
        %4539 = vmatpush1.bf16.msra.mxu0 %v4175
        %4540 = vmatprep.subr.bf16.mxu0 0
        %4541 = vmatpush1.bf16.msra.mxu0 %v4178
        %4542 = vmatprep.subr.bf16.mxu0 0
        %4543 = vmatpush1.bf16.msra.mxu0 %v4181
        %4544 = vmatprep.subr.bf16.mxu0 0
        %4545 = vmatpush1.bf16.msra.mxu0 %v4184
        %4546 = vmatprep.subr.bf16.mxu0 0
        %4547 = vmatpush1.bf16.msra.mxu0 %v4187
        %4548 = vmatprep.subr.bf16.mxu0 0
        %4549 = vmatpush1.bf16.msra.mxu0 %v4190
        %4550 = vmatprep.subr.bf16.mxu0 0
        %4551 = vmatpush1.bf16.msra.mxu0 %v4193
        %4552 = vmatprep.subr.bf16.mxu0 0
        %4553 = vmatpush1.bf16.msra.mxu0 %v4196
        %4554 = vmatprep.subr.bf16.mxu0 0
        %4555 = vmatpush1.bf16.msra.mxu0 %v4199
        %4556 = vmatprep.subr.bf16.mxu0 0
        %4557 = vmatpush1.bf16.msra.mxu0 %v4202
        %4558 = vmatprep.subr.bf16.mxu0 0
        %4559 = vmatpush1.bf16.msra.mxu0 %v4205
        %4560 = vmatprep.mubr.bf16.mxu0 %v3782
        %4561 = vmatmul.mubr.bf16.gmra.mrb[0].mxu0 %v3781
        %v4562 = vpop.f32.mrb[0].mxu0
        %v4563 = vadd.f32 %v3914, %v4562
        %v4564 = vpop.f32.mrb[0].mxu0
        %v4565 = vpop.f32.mrb[0].mxu0
        %v4566 = vadd.f32 %v3914, %v4565
        %v4567 = vpop.f32.mrb[0].mxu0
        %4568 = vmatprep.mubr.bf16.mxu0 %v3785
        %4569 = vmatmul.mubr.bf16.gmra.mrb[0].mxu0 %v3784
        %v4570 = vpop.f32.mrb[0].mxu0
        %v4571 = vadd.f32 %v3914, %v4570
        %v4572 = vpop.f32.mrb[0].mxu0
        %v4573 = vpop.f32.mrb[0].mxu0
        %v4574 = vadd.f32 %v3914, %v4573
        %v4575 = vpop.f32.mrb[0].mxu0
        %4576 = vmatprep.mubr.bf16.mxu0 %v3788
        %4577 = vmatmul.mubr.bf16.gmra.mrb[0].mxu0 %v3787
        %v4578 = vpop.f32.mrb[0].mxu0
        %v4579 = vadd.f32 %v3914, %v4578
        %v4580 = vpop.f32.mrb[0].mxu0
        %v4581 = vpop.f32.mrb[0].mxu0
        %v4582 = vadd.f32 %v3914, %v4581
        %v4583 = vpop.f32.mrb[0].mxu0
        %4584 = vmatprep.mubr.bf16.mxu0 %v3791
        %4585 = vmatmul.mubr.bf16.gmra.mrb[0].mxu0 %v3790
        %v4586 = vpop.f32.mrb[0].mxu0
        %v4587 = vadd.f32 %v3914, %v4586
        %v4588 = vpop.f32.mrb[0].mxu0
        %v4589 = vpop.f32.mrb[0].mxu0
        %v4590 = vadd.f32 %v3914, %v4589
        %v4591 = vpop.f32.mrb[0].mxu0
        %4592 = vmatprep.mubr.bf16.mxu0 %v3794
        %4593 = vmatmul.mubr.bf16.gmra.mrb[0].mxu0 %v3793
        %v4594 = vpop.f32.mrb[0].mxu0
        %v4595 = vadd.f32 %v3914, %v4594
        %v4596 = vpop.f32.mrb[0].mxu0
        %v4597 = vpop.f32.mrb[0].mxu0
        %v4598 = vadd.f32 %v3914, %v4597
        %v4599 = vpop.f32.mrb[0].mxu0
        %4600 = vmatprep.mubr.bf16.mxu0 %v3797
        %4601 = vmatmul.mubr.bf16.gmra.mrb[0].mxu0 %v3796
        %v4602 = vpop.f32.mrb[0].mxu0
        %v4603 = vadd.f32 %v3914, %v4602
        %v4604 = vpop.f32.mrb[0].mxu0
        %v4605 = vpop.f32.mrb[0].mxu0
        %v4606 = vadd.f32 %v3914, %v4605
        %v4607 = vpop.f32.mrb[0].mxu0
        %4608 = vmatprep.mubr.bf16.mxu0 %v3800
        %4609 = vmatmul.mubr.bf16.gmra.mrb[0].mxu0 %v3799
        %v4610 = vpop.f32.mrb[0].mxu0
        %v4611 = vadd.f32 %v3914, %v4610
        %v4612 = vpop.f32.mrb[0].mxu0
        %v4613 = vpop.f32.mrb[0].mxu0
        %v4614 = vadd.f32 %v3914, %v4613
        %v4615 = vpop.f32.mrb[0].mxu0
        %4616 = vmatprep.mubr.bf16.mxu0 %v3803
        %4617 = vmatmul.mubr.bf16.gmra.mrb[0].mxu0 %v3802
        %v4618 = vpop.f32.mrb[0].mxu0
        %v4619 = vadd.f32 %v3914, %v4618
        %v4620 = vpop.f32.mrb[0].mxu0
        %v4621 = vpop.f32.mrb[0].mxu0
        %v4622 = vadd.f32 %v3914, %v4621
        %v4623 = vpop.f32.mrb[0].mxu0
        %4624 = vdwg.mxu0
        %4625 = vmatprep.subr.bf16.mxu0 0
        %4626 = vmatpush1.bf16.msra.mxu0 %v4208
        %4627 = vmatprep.subr.bf16.mxu0 0
        %4628 = vmatpush1.bf16.msra.mxu0 %v4211
        %4629 = vmatprep.subr.bf16.mxu0 0
        %4630 = vmatpush1.bf16.msra.mxu0 %v4214
        %4631 = vmatprep.subr.bf16.mxu0 0
        %4632 = vmatpush1.bf16.msra.mxu0 %v4217
        %4633 = vmatprep.subr.bf16.mxu0 0
        %4634 = vmatpush1.bf16.msra.mxu0 %v4220
        %4635 = vmatprep.subr.bf16.mxu0 0
        %4636 = vmatpush1.bf16.msra.mxu0 %v4223
        %4637 = vmatprep.subr.bf16.mxu0 0
        %4638 = vmatpush1.bf16.msra.mxu0 %v4226
        %4639 = vmatprep.subr.bf16.mxu0 0
        %4640 = vmatpush1.bf16.msra.mxu0 %v4229
        %4641 = vmatprep.subr.bf16.mxu0 0
        %4642 = vmatpush1.bf16.msra.mxu0 0
        %4643 = vmatprep.subr.bf16.mxu0 0
        %4644 = vmatpush1.bf16.msra.mxu0 0
        %4645 = vmatprep.subr.bf16.mxu0 0
        %4646 = vmatpush1.bf16.msra.mxu0 0
        %4647 = vmatprep.subr.bf16.mxu0 0
        %4648 = vmatpush1.bf16.msra.mxu0 0
        %4649 = vmatprep.subr.bf16.mxu0 0
        %4650 = vmatpush1.bf16.msra.mxu0 0
        %4651 = vmatprep.subr.bf16.mxu0 0
        %4652 = vmatpush1.bf16.msra.mxu0 0
        %4653 = vmatprep.subr.bf16.mxu0 0
        %4654 = vmatpush1.bf16.msra.mxu0 0
        %4655 = vmatprep.subr.bf16.mxu0 0
        %4656 = vmatpush1.bf16.msra.mxu0 0
        %4657 = vmatprep.mubr.bf16.mxu0 0
        %4658 = vmatmul.mubr.bf16.gmra.mrb[0].mxu0 %v3783
        %v4659 = vpop.f32.mrb[0].mxu0
        %v4660 = vadd.f32 %v4563, %v4659
        %v4661 = vpop.f32.mrb[0].mxu0
        %v4662 = vpop.f32.mrb[0].mxu0
        %v4663 = vadd.f32 %v4566, %v4662
        %v4664 = vpop.f32.mrb[0].mxu0
        %4665 = vmatprep.mubr.bf16.mxu0 0
        %4666 = vmatmul.mubr.bf16.gmra.mrb[0].mxu0 %v3786
        %v4667 = vpop.f32.mrb[0].mxu0
        %v4668 = vadd.f32 %v4571, %v4667
        %v4669 = vpop.f32.mrb[0].mxu0
        %v4670 = vpop.f32.mrb[0].mxu0
        %v4671 = vadd.f32 %v4574, %v4670
        %v4672 = vpop.f32.mrb[0].mxu0
        %4673 = vmatprep.mubr.bf16.mxu0 0
        %4674 = vmatmul.mubr.bf16.gmra.mrb[0].mxu0 %v3789
        %v4675 = vpop.f32.mrb[0].mxu0
        %v4676 = vadd.f32 %v4579, %v4675
        %v4677 = vpop.f32.mrb[0].mxu0
        %v4678 = vpop.f32.mrb[0].mxu0
        %v4679 = vadd.f32 %v4582, %v4678
        %v4680 = vpop.f32.mrb[0].mxu0
        %4681 = vmatprep.mubr.bf16.mxu0 0
        %4682 = vmatmul.mubr.bf16.gmra.mrb[0].mxu0 %v3792
        %v4683 = vpop.f32.mrb[0].mxu0
        %v4684 = vadd.f32 %v4587, %v4683
        %v4685 = vpop.f32.mrb[0].mxu0
        %v4686 = vpop.f32.mrb[0].mxu0
        %v4687 = vadd.f32 %v4590, %v4686
        %v4688 = vpop.f32.mrb[0].mxu0
        %4689 = vmatprep.mubr.bf16.mxu0 0
        %4690 = vmatmul.mubr.bf16.gmra.mrb[0].mxu0 %v3795
        %v4691 = vpop.f32.mrb[0].mxu0
        %v4692 = vadd.f32 %v4595, %v4691
        %v4693 = vpop.f32.mrb[0].mxu0
        %v4694 = vpop.f32.mrb[0].mxu0
        %v4695 = vadd.f32 %v4598, %v4694
        %v4696 = vpop.f32.mrb[0].mxu0
        %4697 = vmatprep.mubr.bf16.mxu0 0
        %4698 = vmatmul.mubr.bf16.gmra.mrb[0].mxu0 %v3798
        %v4699 = vpop.f32.mrb[0].mxu0
        %v4700 = vadd.f32 %v4603, %v4699
        %v4701 = vpop.f32.mrb[0].mxu0
        %v4702 = vpop.f32.mrb[0].mxu0
        %v4703 = vadd.f32 %v4606, %v4702
        %v4704 = vpop.f32.mrb[0].mxu0
        %4705 = vmatprep.mubr.bf16.mxu0 0
        %4706 = vmatmul.mubr.bf16.gmra.mrb[0].mxu0 %v3801
        %v4707 = vpop.f32.mrb[0].mxu0
        %v4708 = vadd.f32 %v4611, %v4707
        %v4709 = vpop.f32.mrb[0].mxu0
        %v4710 = vpop.f32.mrb[0].mxu0
        %v4711 = vadd.f32 %v4614, %v4710
        %v4712 = vpop.f32.mrb[0].mxu0
        %4713 = vmatprep.mubr.bf16.mxu0 0
        %4714 = vmatmul.mubr.bf16.gmra.mrb[0].mxu0 %v3804
        %v4715 = vpop.f32.mrb[0].mxu0
        %v4716 = vadd.f32 %v4619, %v4715
        %v4717 = vpop.f32.mrb[0].mxu0
        %v4718 = vpop.f32.mrb[0].mxu0
        %v4719 = vadd.f32 %v4622, %v4718
        %v4720 = vpop.f32.mrb[0].mxu0
        %4721 = vdwg.mxu0
        %v4722 = vmax.f32 %v4450, 0.0
        %v4723 = vmax.f32 %v4452, 0.0
        %v4724 = vmax.f32 %v4660, 0.0
        %v4725 = vmax.f32 %v4454, 0.0
        %v4726 = vmax.f32 %v4456, 0.0
        %v4727 = vmax.f32 %v4663, 0.0
        %v4728 = vmax.f32 %v4460, 0.0
        %v4729 = vmax.f32 %v4462, 0.0
        %v4730 = vmax.f32 %v4668, 0.0
        %v4731 = vmax.f32 %v4464, 0.0
        %v4732 = vmax.f32 %v4466, 0.0
        %v4733 = vmax.f32 %v4671, 0.0
        %v4734 = vmax.f32 %v4470, 0.0
        %v4735 = vmax.f32 %v4472, 0.0
        %v4736 = vmax.f32 %v4676, 0.0
        %v4737 = vmax.f32 %v4474, 0.0
        %v4738 = vmax.f32 %v4476, 0.0
        %v4739 = vmax.f32 %v4679, 0.0
        %v4740 = vmax.f32 %v4480, 0.0
        %v4741 = vmax.f32 %v4482, 0.0
        %v4742 = vmax.f32 %v4684, 0.0
        %v4743 = vmax.f32 %v4484, 0.0
        %v4744 = vmax.f32 %v4486, 0.0
        %v4745 = vmax.f32 %v4687, 0.0
        %v4746 = vmax.f32 %v4490, 0.0
        %v4747 = vmax.f32 %v4492, 0.0
        %v4748 = vmax.f32 %v4692, 0.0
        %v4749 = vmax.f32 %v4494, 0.0
        %v4750 = vmax.f32 %v4496, 0.0
        %v4751 = vmax.f32 %v4695, 0.0
        %v4752 = vmax.f32 %v4500, 0.0
        %v4753 = vmax.f32 %v4502, 0.0
        %v4754 = vmax.f32 %v4700, 0.0
        %v4755 = vmax.f32 %v4504, 0.0
        %v4756 = vmax.f32 %v4506, 0.0
        %v4757 = vmax.f32 %v4703, 0.0
        %v4758 = vmax.f32 %v4510, 0.0
        %v4759 = vmax.f32 %v4512, 0.0
        %v4760 = vmax.f32 %v4708, 0.0
        %v4761 = vmax.f32 %v4514, 0.0
        %v4762 = vmax.f32 %v4516, 0.0
        %v4763 = vmax.f32 %v4711, 0.0
        %v4764 = vmax.f32 %v4520, 0.0
        %v4765 = vmax.f32 %v4522, 0.0
        %v4766 = vmax.f32 %v4716, 0.0
        %v4767 = vmax.f32 %v4524, 0.0
        %v4768 = vmax.f32 %v4526, 0.0
        %v4769 = vmax.f32 %v4719, 0.0
        %v4770 = vpack.c.bf16 %v4725, %v4722
        %v4771 = vpack.c.bf16 %v4726, %v4723
        %v4772 = vpack.c.bf16 %v4727, %v4724
        %v4773 = vpack.c.bf16 %v4731, %v4728
        %v4774 = vpack.c.bf16 %v4732, %v4729
        %v4775 = vpack.c.bf16 %v4733, %v4730
        %v4776 = vpack.c.bf16 %v4737, %v4734
        %v4777 = vpack.c.bf16 %v4738, %v4735
        %v4778 = vpack.c.bf16 %v4739, %v4736
        %v4779 = vpack.c.bf16 %v4743, %v4740
        %v4780 = vpack.c.bf16 %v4744, %v4741
        %v4781 = vpack.c.bf16 %v4745, %v4742
        %v4782 = vpack.c.bf16 %v4749, %v4746
        %v4783 = vpack.c.bf16 %v4750, %v4747
        %v4784 = vpack.c.bf16 %v4751, %v4748
        %v4785 = vpack.c.bf16 %v4755, %v4752
        %v4786 = vpack.c.bf16 %v4756, %v4753
        %v4787 = vpack.c.bf16 %v4757, %v4754
        %v4788 = vpack.c.bf16 %v4761, %v4758
        %v4789 = vpack.c.bf16 %v4762, %v4759
        %v4790 = vpack.c.bf16 %v4763, %v4760
        %v4791 = vpack.c.bf16 %v4767, %v4764
        %v4792 = vpack.c.bf16 %v4768, %v4765
        %v4793 = vpack.c.bf16 %v4769, %v4766
        %v4794 = vld [vmem:[#allocation9] sm:$0xf]
        %v4795 = vld [vmem:[#allocation9 + $0x4] sm:$0xf]
        %v4796 = vld [vmem:[#allocation9 + $0x8] sm:$0xf]
        %v4797 = vld [vmem:[#allocation9 + $0xc] sm:$0xf]
        %v4798 = vld [vmem:[#allocation9 + $0x10] sm:$0xf]
        %v4799 = vld [vmem:[#allocation9 + $0x14] sm:$0xf]
        %v4800 = vld [vmem:[#allocation9 + $0x18] sm:$0xf]
        %v4801 = vld [vmem:[#allocation9 + $0x1c] sm:$0xf]
        %v4802 = vld [vmem:[#allocation9 + $0x20] sm:$0xf]
        %v4803 = vld [vmem:[#allocation9 + $0x24] sm:$0xf]
        %v4804 = vld [vmem:[#allocation9 + $0x28] sm:$0xf]
        %v4805 = vld [vmem:[#allocation9 + $0x2c] sm:$0xf]
        %v4806 = vld [vmem:[#allocation9 + $0x30] sm:$0xf]
        %v4807 = vld [vmem:[#allocation9 + $0x34] sm:$0xf]
        %v4808 = vld [vmem:[#allocation9 + $0x38] sm:$0xf]
        %v4809 = vld [vmem:[#allocation9 + $0x3c] sm:$0xf]
        %v4810 = vld [vmem:[#allocation9 + $0x40] sm:$0xf]
        %v4811 = vld [vmem:[#allocation9 + $0x44] sm:$0xf]
        %v4812 = vld [vmem:[#allocation9 + $0x48] sm:$0xf]
        %v4813 = vld [vmem:[#allocation9 + $0x4c] sm:$0xf]
        %v4814 = vld [vmem:[#allocation9 + $0x50] sm:$0xf]
        %v4815 = vld [vmem:[#allocation9 + $0x54] sm:$0xf]
        %v4816 = vld [vmem:[#allocation9 + $0x58] sm:$0xf]
        %v4817 = vld [vmem:[#allocation9 + $0x5c] sm:$0xf]
        %v4818 = vld [vmem:[#allocation9 + $0x60] sm:$0xf]
        %v4819 = vld [vmem:[#allocation9 + $0x64] sm:$0xf]
        %v4820 = vld [vmem:[#allocation9 + $0x68] sm:$0xf]
        %v4821 = vld [vmem:[#allocation9 + $0x6c] sm:$0xf]
        %v4822 = vld [vmem:[#allocation9 + $0x70] sm:$0xf]
        %v4823 = vld [vmem:[#allocation9 + $0x74] sm:$0xf]
        %v4824 = vld [vmem:[#allocation9 + $0x78] sm:$0xf]
        %v4825 = vld [vmem:[#allocation9 + $0x7c] sm:$0xf]
        %v4826 = vld [vmem:[#allocation9 + $0x80] sm:$0xf]
        %v4827 = vld [vmem:[#allocation9 + $0x84] sm:$0xf]
        %v4828 = vld [vmem:[#allocation9 + $0x88] sm:$0xf]
        %v4829 = vld [vmem:[#allocation9 + $0x8c] sm:$0xf]
        %v4830 = vld [vmem:[#allocation9 + $0x90] sm:$0xf]
        %v4831 = vld [vmem:[#allocation9 + $0x94] sm:$0xf]
        %v4832 = vld [vmem:[#allocation9 + $0x98] sm:$0xf]
        %v4833 = vld [vmem:[#allocation9 + $0x9c] sm:$0xf]
        %v4834 = vld [vmem:[#allocation9 + $0xa0] sm:$0xf]
        %v4835 = vld [vmem:[#allocation9 + $0xa4] sm:$0xf]
        %v4836 = vld [vmem:[#allocation9 + $0xa8] sm:$0xf]
        %v4837 = vld [vmem:[#allocation9 + $0xac] sm:$0xf]
        %v4838 = vld [vmem:[#allocation9 + $0xb0] sm:$0xf]
        %v4839 = vld [vmem:[#allocation9 + $0xb4] sm:$0xf]
        %v4840 = vld [vmem:[#allocation9 + $0xb8] sm:$0xf]
        %v4841 = vld [vmem:[#allocation9 + $0xbc] sm:$0xf]
        %v4842 = vld [vmem:[%s8] sm:$0x1]
        %v4844 = vlaneseq
        %v4845 = vshrl.u32 %v4844, 7
        %v4846 = vsub.s32 0, %v4845
        %v4847 = vrot.slane %v4842, %v4846
        %v4897 = vunpack.c.l.b16 %v4794
        %v4898 = vunpack.c.l.b16 %v4795
        %v4899 = vunpack.c.l.b16 %v4796
        %v4900 = vunpack.c.l.b16 %v4797
        %v4901 = vunpack.c.l.b16 %v4798
        %v4902 = vunpack.c.l.b16 %v4799
        %v4903 = vunpack.c.l.b16 %v4800
        %v4904 = vunpack.c.l.b16 %v4801
        %v4905 = vunpack.c.l.b16 %v4802
        %v4906 = vunpack.c.l.b16 %v4803
        %v4907 = vunpack.c.l.b16 %v4804
        %v4908 = vunpack.c.l.b16 %v4805
        %v4909 = vunpack.c.l.b16 %v4806
        %v4910 = vunpack.c.l.b16 %v4807
        %v4911 = vunpack.c.l.b16 %v4808
        %v4912 = vunpack.c.l.b16 %v4809
        %v4913 = vunpack.c.l.b16 %v4810
        %v4914 = vunpack.c.l.b16 %v4811
        %v4915 = vunpack.c.l.b16 %v4812
        %v4916 = vunpack.c.l.b16 %v4813
        %v4917 = vunpack.c.l.b16 %v4814
        %v4918 = vunpack.c.l.b16 %v4815
        %v4919 = vunpack.c.l.b16 %v4816
        %v4920 = vunpack.c.l.b16 %v4817
        %v4921 = vunpack.c.l.b16 %v4818
        %v4922 = vunpack.c.l.b16 %v4819
        %v4923 = vunpack.c.l.b16 %v4820
        %v4924 = vunpack.c.l.b16 %v4821
        %v4925 = vunpack.c.l.b16 %v4822
        %v4926 = vunpack.c.l.b16 %v4823
        %v4927 = vunpack.c.l.b16 %v4824
        %v4928 = vunpack.c.l.b16 %v4825
        %v4929 = vunpack.c.l.b16 %v4826
        %v4930 = vunpack.c.l.b16 %v4827
        %v4931 = vunpack.c.l.b16 %v4828
        %v4932 = vunpack.c.l.b16 %v4829
        %v4933 = vunpack.c.l.b16 %v4830
        %v4934 = vunpack.c.l.b16 %v4831
        %v4935 = vunpack.c.l.b16 %v4832
        %v4936 = vunpack.c.l.b16 %v4833
        %v4937 = vunpack.c.l.b16 %v4834
        %v4938 = vunpack.c.l.b16 %v4835
        %v4939 = vunpack.c.l.b16 %v4836
        %v4940 = vunpack.c.l.b16 %v4837
        %v4941 = vunpack.c.l.b16 %v4838
        %v4942 = vunpack.c.l.b16 %v4839
        %v4943 = vunpack.c.l.b16 %v4840
        %v4944 = vunpack.c.l.b16 %v4841
        %v4945 = vpack.c.b16 %v4898, %v4897
        %v4946 = vpack.c.b16 %v4900, %v4899
        %v4947 = vpack.c.b16 %v4902, %v4901
        %v4948 = vpack.c.b16 %v4904, %v4903
        %v4949 = vpack.c.b16 %v4906, %v4905
        %v4950 = vpack.c.b16 %v4908, %v4907
        %v4951 = vpack.c.b16 %v4910, %v4909
        %v4952 = vpack.c.b16 %v4912, %v4911
        %v4953 = vpack.c.b16 %v4914, %v4913
        %v4954 = vpack.c.b16 %v4916, %v4915
        %v4955 = vpack.c.b16 %v4918, %v4917
        %v4956 = vpack.c.b16 %v4920, %v4919
        %v4957 = vpack.c.b16 %v4922, %v4921
        %v4958 = vpack.c.b16 %v4924, %v4923
        %v4959 = vpack.c.b16 %v4926, %v4925
        %v4960 = vpack.c.b16 %v4928, %v4927
        %v4961 = vpack.c.b16 %v4930, %v4929
        %v4962 = vpack.c.b16 %v4932, %v4931
        %v4963 = vpack.c.b16 %v4934, %v4933
        %v4964 = vpack.c.b16 %v4936, %v4935
        %v4965 = vpack.c.b16 %v4938, %v4937
        %v4966 = vpack.c.b16 %v4940, %v4939
        %v4967 = vpack.c.b16 %v4942, %v4941
        %v4968 = vpack.c.b16 %v4944, %v4943
        %4993 = vmatprep.subr.bf16.mxu0 0
        %4994 = vmatpush1.bf16.msra.mxu0 %v4945
        %4995 = vmatprep.subr.bf16.mxu0 0
        %4996 = vmatpush1.bf16.msra.mxu0 %v4946
        %4997 = vmatprep.subr.bf16.mxu0 0
        %4998 = vmatpush1.bf16.msra.mxu0 %v4947
        %4999 = vmatprep.subr.bf16.mxu0 0
        %5000 = vmatpush1.bf16.msra.mxu0 %v4948
        %5001 = vmatprep.subr.bf16.mxu0 0
        %5002 = vmatpush1.bf16.msra.mxu0 %v4949
        %5003 = vmatprep.subr.bf16.mxu0 0
        %5004 = vmatpush1.bf16.msra.mxu0 %v4950
        %5005 = vmatprep.subr.bf16.mxu0 0
        %5006 = vmatpush1.bf16.msra.mxu0 %v4951
        %5007 = vmatprep.subr.bf16.mxu0 0
        %5008 = vmatpush1.bf16.msra.mxu0 %v4952
        %5009 = vmatprep.subr.bf16.mxu0 0
        %5010 = vmatpush1.bf16.msra.mxu0 %v4953
        %5011 = vmatprep.subr.bf16.mxu0 0
        %5012 = vmatpush1.bf16.msra.mxu0 %v4954
        %5013 = vmatprep.subr.bf16.mxu0 0
        %5014 = vmatpush1.bf16.msra.mxu0 %v4955
        %5015 = vmatprep.subr.bf16.mxu0 0
        %5016 = vmatpush1.bf16.msra.mxu0 %v4956
        %5017 = vmatprep.subr.bf16.mxu0 0
        %5018 = vmatpush1.bf16.msra.mxu0 %v4957
        %5019 = vmatprep.subr.bf16.mxu0 0
        %5020 = vmatpush1.bf16.msra.mxu0 %v4958
        %5021 = vmatprep.subr.bf16.mxu0 0
        %5022 = vmatpush1.bf16.msra.mxu0 %v4959
        %5023 = vmatprep.subr.bf16.mxu0 0
        %5024 = vmatpush1.bf16.msra.mxu0 %v4960
        %5025 = vmatprep.mubr.bf16.mxu0 %v4771
        %5026 = vmatmul.mubr.bf16.gmra.mrb[0].mxu0 %v4770
        %v5027 = vpop.f32.mrb[0].mxu0
        %v5028 = vadd.f32 %v4847, %v5027
        %v5029 = vpop.f32.mrb[0].mxu0
        %v5030 = vpop.f32.mrb[0].mxu0
        %v5031 = vadd.f32 %v4847, %v5030
        %v5032 = vpop.f32.mrb[0].mxu0
        %5033 = vmatprep.mubr.bf16.mxu0 %v4774
        %5034 = vmatmul.mubr.bf16.gmra.mrb[0].mxu0 %v4773
        %v5035 = vpop.f32.mrb[0].mxu0
        %v5036 = vadd.f32 %v4847, %v5035
        %v5037 = vpop.f32.mrb[0].mxu0
        %v5038 = vpop.f32.mrb[0].mxu0
        %v5039 = vadd.f32 %v4847, %v5038
        %v5040 = vpop.f32.mrb[0].mxu0
        %5041 = vmatprep.mubr.bf16.mxu0 %v4777
        %5042 = vmatmul.mubr.bf16.gmra.mrb[0].mxu0 %v4776
        %v5043 = vpop.f32.mrb[0].mxu0
        %v5044 = vadd.f32 %v4847, %v5043
        %v5045 = vpop.f32.mrb[0].mxu0
        %v5046 = vpop.f32.mrb[0].mxu0
        %v5047 = vadd.f32 %v4847, %v5046
        %v5048 = vpop.f32.mrb[0].mxu0
        %5049 = vmatprep.mubr.bf16.mxu0 %v4780
        %5050 = vmatmul.mubr.bf16.gmra.mrb[0].mxu0 %v4779
        %v5051 = vpop.f32.mrb[0].mxu0
        %v5052 = vadd.f32 %v4847, %v5051
        %v5053 = vpop.f32.mrb[0].mxu0
        %v5054 = vpop.f32.mrb[0].mxu0
        %v5055 = vadd.f32 %v4847, %v5054
        %v5056 = vpop.f32.mrb[0].mxu0
        %5057 = vmatprep.mubr.bf16.mxu0 %v4783
        %5058 = vmatmul.mubr.bf16.gmra.mrb[0].mxu0 %v4782
        %v5059 = vpop.f32.mrb[0].mxu0
        %v5060 = vadd.f32 %v4847, %v5059
        %v5061 = vpop.f32.mrb[0].mxu0
        %v5062 = vpop.f32.mrb[0].mxu0
        %v5063 = vadd.f32 %v4847, %v5062
        %v5064 = vpop.f32.mrb[0].mxu0
        %5065 = vmatprep.mubr.bf16.mxu0 %v4786
        %5066 = vmatmul.mubr.bf16.gmra.mrb[0].mxu0 %v4785
        %v5067 = vpop.f32.mrb[0].mxu0
        %v5068 = vadd.f32 %v4847, %v5067
        %v5069 = vpop.f32.mrb[0].mxu0
        %v5070 = vpop.f32.mrb[0].mxu0
        %v5071 = vadd.f32 %v4847, %v5070
        %v5072 = vpop.f32.mrb[0].mxu0
        %5073 = vmatprep.mubr.bf16.mxu0 %v4789
        %5074 = vmatmul.mubr.bf16.gmra.mrb[0].mxu0 %v4788
        %v5075 = vpop.f32.mrb[0].mxu0
        %v5076 = vadd.f32 %v4847, %v5075
        %v5077 = vpop.f32.mrb[0].mxu0
        %v5078 = vpop.f32.mrb[0].mxu0
        %v5079 = vadd.f32 %v4847, %v5078
        %v5080 = vpop.f32.mrb[0].mxu0
        %5081 = vmatprep.mubr.bf16.mxu0 %v4792
        %5082 = vmatmul.mubr.bf16.gmra.mrb[0].mxu0 %v4791
        %v5083 = vpop.f32.mrb[0].mxu0
        %v5084 = vadd.f32 %v4847, %v5083
        %v5085 = vpop.f32.mrb[0].mxu0
        %v5086 = vpop.f32.mrb[0].mxu0
        %v5087 = vadd.f32 %v4847, %v5086
        %v5088 = vpop.f32.mrb[0].mxu0
        %5089 = vdwg.mxu0
        %5090 = vmatprep.subr.bf16.mxu0 0
        %5091 = vmatpush1.bf16.msra.mxu0 %v4961
        %5092 = vmatprep.subr.bf16.mxu0 0
        %5093 = vmatpush1.bf16.msra.mxu0 %v4962
        %5094 = vmatprep.subr.bf16.mxu0 0
        %5095 = vmatpush1.bf16.msra.mxu0 %v4963
        %5096 = vmatprep.subr.bf16.mxu0 0
        %5097 = vmatpush1.bf16.msra.mxu0 %v4964
        %5098 = vmatprep.subr.bf16.mxu0 0
        %5099 = vmatpush1.bf16.msra.mxu0 %v4965
        %5100 = vmatprep.subr.bf16.mxu0 0
        %5101 = vmatpush1.bf16.msra.mxu0 %v4966
        %5102 = vmatprep.subr.bf16.mxu0 0
        %5103 = vmatpush1.bf16.msra.mxu0 %v4967
        %5104 = vmatprep.subr.bf16.mxu0 0
        %5105 = vmatpush1.bf16.msra.mxu0 %v4968
        %5106 = vmatprep.subr.bf16.mxu0 0
        %5107 = vmatpush1.bf16.msra.mxu0 0
        %5108 = vmatprep.subr.bf16.mxu0 0
        %5109 = vmatpush1.bf16.msra.mxu0 0
        %5110 = vmatprep.subr.bf16.mxu0 0
        %5111 = vmatpush1.bf16.msra.mxu0 0
        %5112 = vmatprep.subr.bf16.mxu0 0
        %5113 = vmatpush1.bf16.msra.mxu0 0
        %5114 = vmatprep.subr.bf16.mxu0 0
        %5115 = vmatpush1.bf16.msra.mxu0 0
        %5116 = vmatprep.subr.bf16.mxu0 0
        %5117 = vmatpush1.bf16.msra.mxu0 0
        %5118 = vmatprep.subr.bf16.mxu0 0
        %5119 = vmatpush1.bf16.msra.mxu0 0
        %5120 = vmatprep.subr.bf16.mxu0 0
        %5121 = vmatpush1.bf16.msra.mxu0 0
        %5122 = vmatprep.mubr.bf16.mxu0 0
        %5123 = vmatmul.mubr.bf16.gmra.mrb[0].mxu0 %v4772
        %v5124 = vpop.f32.mrb[0].mxu0
        %v5125 = vadd.f32 %v5028, %v5124
        %v5126 = vpop.f32.mrb[0].mxu0
        %v5127 = vpop.f32.mrb[0].mxu0
        %v5128 = vadd.f32 %v5031, %v5127
        %v5129 = vpop.f32.mrb[0].mxu0
        %5130 = vmatprep.mubr.bf16.mxu0 0
        %5131 = vmatmul.mubr.bf16.gmra.mrb[0].mxu0 %v4775
        %v5132 = vpop.f32.mrb[0].mxu0
        %v5133 = vadd.f32 %v5036, %v5132
        %v5134 = vpop.f32.mrb[0].mxu0
        %v5135 = vpop.f32.mrb[0].mxu0
        %v5136 = vadd.f32 %v5039, %v5135
        %v5137 = vpop.f32.mrb[0].mxu0
        %5138 = vmatprep.mubr.bf16.mxu0 0
        %5139 = vmatmul.mubr.bf16.gmra.mrb[0].mxu0 %v4778
        %v5140 = vpop.f32.mrb[0].mxu0
        %v5141 = vadd.f32 %v5044, %v5140
        %v5142 = vpop.f32.mrb[0].mxu0
        %v5143 = vpop.f32.mrb[0].mxu0
        %v5144 = vadd.f32 %v5047, %v5143
        %v5145 = vpop.f32.mrb[0].mxu0
        %5146 = vmatprep.mubr.bf16.mxu0 0
        %5147 = vmatmul.mubr.bf16.gmra.mrb[0].mxu0 %v4781
        %v5148 = vpop.f32.mrb[0].mxu0
        %v5149 = vadd.f32 %v5052, %v5148
        %v5150 = vpop.f32.mrb[0].mxu0
        %v5151 = vpop.f32.mrb[0].mxu0
        %v5152 = vadd.f32 %v5055, %v5151
        %v5153 = vpop.f32.mrb[0].mxu0
        %5154 = vmatprep.mubr.bf16.mxu0 0
        %5155 = vmatmul.mubr.bf16.gmra.mrb[0].mxu0 %v4784
        %v5156 = vpop.f32.mrb[0].mxu0
        %v5157 = vadd.f32 %v5060, %v5156
        %v5158 = vpop.f32.mrb[0].mxu0
        %v5159 = vpop.f32.mrb[0].mxu0
        %v5160 = vadd.f32 %v5063, %v5159
        %v5161 = vpop.f32.mrb[0].mxu0
        %5162 = vmatprep.mubr.bf16.mxu0 0
        %5163 = vmatmul.mubr.bf16.gmra.mrb[0].mxu0 %v4787
        %v5164 = vpop.f32.mrb[0].mxu0
        %v5165 = vadd.f32 %v5068, %v5164
        %v5166 = vpop.f32.mrb[0].mxu0
        %v5167 = vpop.f32.mrb[0].mxu0
        %v5168 = vadd.f32 %v5071, %v5167
        %v5169 = vpop.f32.mrb[0].mxu0
        %5170 = vmatprep.mubr.bf16.mxu0 0
        %5171 = vmatmul.mubr.bf16.gmra.mrb[0].mxu0 %v4790
        %v5172 = vpop.f32.mrb[0].mxu0
        %v5173 = vadd.f32 %v5076, %v5172
        %v5174 = vpop.f32.mrb[0].mxu0
        %v5175 = vpop.f32.mrb[0].mxu0
        %v5176 = vadd.f32 %v5079, %v5175
        %v5177 = vpop.f32.mrb[0].mxu0
        %5178 = vmatprep.mubr.bf16.mxu0 0
        %5179 = vmatmul.mubr.bf16.gmra.mrb[0].mxu0 %v4793
        %v5180 = vpop.f32.mrb[0].mxu0
        %v5181 = vadd.f32 %v5084, %v5180
        %v5182 = vpop.f32.mrb[0].mxu0
        %v5183 = vpop.f32.mrb[0].mxu0
        %v5184 = vadd.f32 %v5087, %v5183
        %v5185 = vpop.f32.mrb[0].mxu0
        %5186 = vdwg.mxu0
        %v5187 = vxor.u32 %v5125, 2147483648
        %v5188 = vxor.u32 %v5128, 2147483648
        %v5189 = vxor.u32 %v5133, 2147483648
        %v5190 = vxor.u32 %v5136, 2147483648
        %v5191 = vxor.u32 %v5141, 2147483648
        %v5192 = vxor.u32 %v5144, 2147483648
        %v5193 = vxor.u32 %v5149, 2147483648
        %v5194 = vxor.u32 %v5152, 2147483648
        %v5195 = vxor.u32 %v5157, 2147483648
        %v5196 = vxor.u32 %v5160, 2147483648
        %v5197 = vxor.u32 %v5165, 2147483648
        %v5198 = vxor.u32 %v5168, 2147483648
        %v5199 = vxor.u32 %v5173, 2147483648
        %v5200 = vxor.u32 %v5176, 2147483648
        %v5201 = vxor.u32 %v5181, 2147483648
        %v5202 = vxor.u32 %v5184, 2147483648
        %v5203 = vmul.f32 %v5187, 1.442695
        %v5204 = vpow.pop %v5203
        %v5205 = vmul.f32 %v5188, 1.442695
        %v5206 = vpow.pop %v5205
        %v5207 = vmul.f32 %v5189, 1.442695
        %v5208 = vpow.pop %v5207
        %v5209 = vmul.f32 %v5190, 1.442695
        %v5210 = vpow.pop %v5209
        %v5211 = vmul.f32 %v5191, 1.442695
        %v5212 = vpow.pop %v5211
        %v5213 = vmul.f32 %v5192, 1.442695
        %v5214 = vpow.pop %v5213
        %v5215 = vmul.f32 %v5193, 1.442695
        %v5216 = vpow.pop %v5215
        %v5217 = vmul.f32 %v5194, 1.442695
        %v5218 = vpow.pop %v5217
        %v5219 = vmul.f32 %v5195, 1.442695
        %v5220 = vpow.pop %v5219
        %v5221 = vmul.f32 %v5196, 1.442695
        %v5222 = vpow.pop %v5221
        %v5223 = vmul.f32 %v5197, 1.442695
        %v5224 = vpow.pop %v5223
        %v5225 = vmul.f32 %v5198, 1.442695
        %v5226 = vpow.pop %v5225
        %v5227 = vmul.f32 %v5199, 1.442695
        %v5228 = vpow.pop %v5227
        %v5229 = vmul.f32 %v5200, 1.442695
        %v5230 = vpow.pop %v5229
        %v5231 = vmul.f32 %v5201, 1.442695
        %v5232 = vpow.pop %v5231
        %v5233 = vmul.f32 %v5202, 1.442695
        %v5234 = vpow.pop %v5233
        %v5235 = vadd.f32 %v5204, 1.0
        %v5236 = vadd.f32 %v5206, 1.0
        %v5237 = vadd.f32 %v5208, 1.0
        %v5238 = vadd.f32 %v5210, 1.0
        %v5239 = vadd.f32 %v5212, 1.0
        %v5240 = vadd.f32 %v5214, 1.0
        %v5241 = vadd.f32 %v5216, 1.0
        %v5242 = vadd.f32 %v5218, 1.0
        %v5243 = vadd.f32 %v5220, 1.0
        %v5244 = vadd.f32 %v5222, 1.0
        %v5245 = vadd.f32 %v5224, 1.0
        %v5246 = vadd.f32 %v5226, 1.0
        %v5247 = vadd.f32 %v5228, 1.0
        %v5248 = vadd.f32 %v5230, 1.0
        %v5249 = vadd.f32 %v5232, 1.0
        %v5250 = vadd.f32 %v5234, 1.0
        %v5251 = vrcp.pop %v5235
        %v5252 = vmul.f32 1.0, %v5251
        %v5253 = vrcp.pop %v5236
        %v5254 = vmul.f32 1.0, %v5253
        %v5255 = vrcp.pop %v5237
        %v5256 = vmul.f32 1.0, %v5255
        %v5257 = vrcp.pop %v5238
        %v5258 = vmul.f32 1.0, %v5257
        %v5259 = vrcp.pop %v5239
        %v5260 = vmul.f32 1.0, %v5259
        %v5261 = vrcp.pop %v5240
        %v5262 = vmul.f32 1.0, %v5261
        %v5263 = vrcp.pop %v5241
        %v5264 = vmul.f32 1.0, %v5263
        %v5265 = vrcp.pop %v5242
        %v5266 = vmul.f32 1.0, %v5265
        %v5267 = vrcp.pop %v5243
        %v5268 = vmul.f32 1.0, %v5267
        %v5269 = vrcp.pop %v5244
        %v5270 = vmul.f32 1.0, %v5269
        %v5271 = vrcp.pop %v5245
        %v5272 = vmul.f32 1.0, %v5271
        %v5273 = vrcp.pop %v5246
        %v5274 = vmul.f32 1.0, %v5273
        %v5275 = vrcp.pop %v5247
        %v5276 = vmul.f32 1.0, %v5275
        %v5277 = vrcp.pop %v5248
        %v5278 = vmul.f32 1.0, %v5277
        %v5279 = vrcp.pop %v5249
        %v5280 = vmul.f32 1.0, %v5279
        %v5281 = vrcp.pop %v5250
        %v5282 = vmul.f32 1.0, %v5281
        %v5283 = vmul.f32 %v5252, 4.0
        %v5284 = vmul.f32 %v5254, 4.0
        %v5285 = vmul.f32 %v5256, 4.0
        %v5286 = vmul.f32 %v5258, 4.0
        %v5287 = vmul.f32 %v5260, 4.0
        %v5288 = vmul.f32 %v5262, 4.0
        %v5289 = vmul.f32 %v5264, 4.0
        %v5290 = vmul.f32 %v5266, 4.0
        %v5291 = vmul.f32 %v5268, 4.0
        %v5292 = vmul.f32 %v5270, 4.0
        %v5293 = vmul.f32 %v5272, 4.0
        %v5294 = vmul.f32 %v5274, 4.0
        %v5295 = vmul.f32 %v5276, 4.0
        %v5296 = vmul.f32 %v5278, 4.0
        %v5297 = vmul.f32 %v5280, 4.0
        %v5298 = vmul.f32 %v5282, 4.0
        %v5299 = vadd.f32 %v5283, 1.0
        %v5300 = vadd.f32 %v5284, 1.0
        %v5301 = vadd.f32 %v5285, 1.0
        %v5302 = vadd.f32 %v5286, 1.0
        %v5303 = vadd.f32 %v5287, 1.0
        %v5304 = vadd.f32 %v5288, 1.0
        %v5305 = vadd.f32 %v5289, 1.0
        %v5306 = vadd.f32 %v5290, 1.0
        %v5307 = vadd.f32 %v5291, 1.0
        %v5308 = vadd.f32 %v5292, 1.0
        %v5309 = vadd.f32 %v5293, 1.0
        %v5310 = vadd.f32 %v5294, 1.0
        %v5311 = vadd.f32 %v5295, 1.0
        %v5312 = vadd.f32 %v5296, 1.0
        %v5313 = vadd.f32 %v5297, 1.0
        %v5314 = vadd.f32 %v5298, 1.0
        %vm5315 = vcmask 7168
        %5316 = vst.msk [vmem:[%s412] sm:$0xff] %vm5315, %v5299
        %5317 = vst.msk [vmem:[%s412 + $0x8] sm:$0xff] %vm5315, %v5300
        %5318 = vst.msk [vmem:[%s412 + $0x10] sm:$0xff] %vm5315, %v5301
        %5319 = vst.msk [vmem:[%s412 + $0x18] sm:$0xff] %vm5315, %v5302
        %5320 = vst.msk [vmem:[%s412 + $0x20] sm:$0xff] %vm5315, %v5303
        %5321 = vst.msk [vmem:[%s412 + $0x28] sm:$0xff] %vm5315, %v5304
        %5322 = vst.msk [vmem:[%s412 + $0x30] sm:$0xff] %vm5315, %v5305
        %5323 = vst.msk [vmem:[%s412 + $0x38] sm:$0xff] %vm5315, %v5306
        %5324 = vst.msk [vmem:[%s412 + $0x40] sm:$0xff] %vm5315, %v5307
        %5325 = vst.msk [vmem:[%s412 + $0x48] sm:$0xff] %vm5315, %v5308
        %5326 = vst.msk [vmem:[%s412 + $0x50] sm:$0xff] %vm5315, %v5309
        %5327 = vst.msk [vmem:[%s412 + $0x58] sm:$0xff] %vm5315, %v5310
        %5328 = vst.msk [vmem:[%s412 + $0x60] sm:$0xff] %vm5315, %v5311
        %5329 = vst.msk [vmem:[%s412 + $0x68] sm:$0xff] %vm5315, %v5312
        %5330 = vst.msk [vmem:[%s412 + $0x70] sm:$0xff] %vm5315, %v5313
        %5331 = vst.msk [vmem:[%s412 + $0x78] sm:$0xff] %vm5315, %v5314
        %s5332 = smul.u32 16, %s25
        %p5333 = scmp.lt.s32.totalorder %s5332, 31
        %s5334 = scalar_select %p5333, %s5332, 31
        %s5335 = smul.addr %s5334, 8
        %s5336 = scalar_lea.vmem %s9, %s5335
        // Predicated region
        $region77: #{tpu_custom_call.1} parent=55 // pred_check
          %p5337 = pneg %p237
        $region78: #{tpu_custom_call.1} parent=55 // pred_check_branch
          %5339 = sbr.rel (%p5337) target = $region80
        $region79: #{tpu_custom_call.1} parent=55 // pred_region
          %s5340 = smul.u32 16, %s25
        $region80: #{tpu_custom_call.1} parent=55 // pred_fallthru
          _
      $region56: #{tpu_custom_call.1} parent=5 // pred_fallthru
        _
      %p5341 = scmp.le.s32.totalorder 2, %s20
      // Predicated region
      $region81: #{tpu_custom_call.1} parent=5 // pred_check
        %p5342 = pneg %p5341
      $region82: #{tpu_custom_call.1} parent=5 // pred_check_branch
        %5344 = sbr.rel (%p5342) target = $region84
      $region83: #{tpu_custom_call.1} parent=5 // pred_region
        %s5345 = ssub.s32 %s20, 2
        // Predicated region
        $region85: #{tpu_custom_call.1} parent=83 // pred_check
          %p5346 = pneg %p243
        $region86: #{tpu_custom_call.1} parent=83 // pred_check_branch
          %5348 = sbr.rel (%p5346) target = $region88
        $region87: #{tpu_custom_call.1} parent=83 // pred_region
          %s5349 = smul.u32 16, %s26
          %p5350 = scmp.lt.s32.totalorder %s5349, 31
          %s5351 = scalar_select %p5350, %s5349, 31
          %s5352 = smul.addr %s5351, 8
          %s5353 = scalar_lea.vmem %s9, %s5352
        $region88: #{tpu_custom_call.1} parent=83 // pred_fallthru
          _
      $region84: #{tpu_custom_call.1} parent=5 // pred_fallthru
        _
    $region6: #{tpu_custom_call.1} parent=1 // loop_footer
      %s24 = sadd.s32 1, %s20
    $region7: #{tpu_custom_call.1} parent=1 // loop_footer_branch
      %19 = sbr.rel target = $region3
    $region8: #{tpu_custom_call.1} parent=1 // loop_exit
      _
    %5354 = vsyncpa [#allocation3], 1
    %s5355 = scalar_lea.sflag [#allocation3], 1
    %5356 = vsyncpa %s5355, 1
    %5357 = vsyncpa [#allocation5], 1
    %5358 = vsyncpa [#allocation8], 1

</llo_original>
